<compile_context>
chip_gen: v7x
topology: tpu7x:2x2x1
jax: 0.10.0
libtpu: 0.0.40
codegen_flags: <defaults>
</compile_context>

<pallas_src>
import functools

import jax
import jax.numpy as jnp
from jax import lax
from jax.experimental import pallas as pl
from jax.experimental.pallas import tpu as pltpu


# ----------------------------------------------------------------------------
# Fully fused multi-stage Pallas kernel
# ----------------------------------------------------------------------------
def _mstcn_kernel(*refs, num_stages, dilations, T):
    """All stages of the MS-TCN on one (Cin, Bb*T) batch block (channel-first).

    refs layout (in order):
      x_ref                              : (Cin, N)       N = Bb*T
      stage-1 weights (8 refs)           : win (C,Cin) bf16, bin (C,1) f32,
                                           wd (L,C,3C) bf16, bd (L,C,1) f32,
                                           w1 (L,C,C)  bf16, b1 (L,C,1) f32,
                                           wout (nc,C) bf16, bout (nc,1) f32
      [stages 2..S weights (8 refs)]     : same, with a leading (S-1) axis
      o_ref                              : (S, nc, N)    per-stage logits
      stk                                : (3C, N) bf16  persistent tap scratch
    """
    if num_stages > 1:
        (x_ref,
         win1, bin1, wd1, bd1, w11, b11, wout1, bout1,
         winr, binr, wdr, bdr, w1r, b1r, woutr, boutr,
         o_ref, stk) = refs
    else:
        (x_ref,
         win1, bin1, wd1, bd1, w11, b11, wout1, bout1,
         o_ref, stk) = refs

    C = win1.shape[0]
    N = x_ref.shape[-1]

    # Per-batch time index of every lane column (hoisted; shared by all layers
    # and stages).  Rolls on the flattened (C, Bb*T) slab wrap across batch
    # boundaries; masking with lane_t restores Conv1d zero-padding semantics.
    lane_t = lax.broadcasted_iota(jnp.int32, (C, N), 1) % T

    def run_stage(x, win, b_in, wd, bd, w1, b1, wout, bout, softmax_in):
        if softmax_in:                                     # softmax over channels
            m = jnp.max(x, axis=0, keepdims=True)
            e = jnp.exp(x - m)
            x = e * pl.reciprocal(jnp.sum(e, axis=0, keepdims=True), approx=True)

        # Input 1x1 conv: (C, Cin) @ (Cin, N) -> (C, N), f32 accumulation.
        cur = jnp.dot(win, x.astype(jnp.bfloat16),
                      preferred_element_type=jnp.float32) + b_in

        for i, d in enumerate(dilations):                  # unrolled, static d
            if d < T:
                # x[t-d] / x[t+d] with zeros outside [0, T): roll along the lane
                # axis and mask columns whose per-batch time index is OOB.
                x_m = jnp.where(lane_t >= d, pltpu.roll(cur, d, axis=1), 0.0)
                x_p = jnp.where(lane_t < T - d,
                                pltpu.roll(cur, N - d, axis=1), 0.0)
            else:                                          # dilation >= T: taps OOB
                x_m = jnp.zeros_like(cur)
                x_p = jnp.zeros_like(cur)

            # Taps staged in one persistent bf16 scratch -> single K=3C matmul.
            # TODO(synk): on v7x (MRB) three K=C dots without the staging slab
            # would be marginally cheaper; merged form kept for v5e/v6e (MRF).
            stk[0:C, :] = x_m.astype(jnp.bfloat16)
            stk[C:2 * C, :] = cur.astype(jnp.bfloat16)
            stk[2 * C:3 * C, :] = x_p.astype(jnp.bfloat16)

            h = jnp.dot(wd[i], stk[...], preferred_element_type=jnp.float32) + bd[i]
            h = jnp.maximum(h, 0.0)                        # ReLU
            out = jnp.dot(w1[i], h.astype(jnp.bfloat16),
                          preferred_element_type=jnp.float32) + b1[i]
            # TODO(synk): nn.Dropout is identity in eval mode; training-mode
            # dropout (pltpu.prng_* based) is not implemented.
            cur = cur + out                                # residual

        # Output 1x1 conv: (nc, C) @ (C, N) -> (nc, N); lane-dense.
        return jnp.dot(wout, cur.astype(jnp.bfloat16),
                       preferred_element_type=jnp.float32) + bout

    logits = run_stage(x_ref[...].astype(jnp.float32),
                       win1[...], bin1[...], wd1[...], bd1[...],
                       w11[...], b11[...], wout1[...], bout1[...],
                       softmax_in=False)
    o_ref[0] = logits.astype(o_ref.dtype)
    for s in range(1, num_stages):
        logits = run_stage(logits,
                           winr[s - 1], binr[s - 1], wdr[s - 1], bdr[s - 1],
                           w1r[s - 1], b1r[s - 1], woutr[s - 1], boutr[s - 1],
                           softmax_in=True)
        o_ref[s] = logits.astype(o_ref.dtype)


def _const_index(ndim):
    zeros = (0,) * ndim
    return lambda b: zeros


def _choose_block_batch(B, T):
    """Fold batch into the lane axis to fill the MXU N dimension (>=256)."""
    bb = min(B, max(1, -(-256 // T)))
    while B % bb:
        bb -= 1
    # BlockSpec lane dim must be a multiple of 128 unless it spans the array.
    if (bb * T) % 128 != 0:
        bb = B
    return bb


def multi_stage_forward(x_nct, packed):
    """x_nct: (B, dim, T) like PyTorch NCT. Returns (num_stages, B, nc, T)."""
    B, dim, T = x_nct.shape
    s1 = packed["stage1"]
    S = packed["num_stages"]
    L, C = s1["wd"].shape[0], s1["wd"].shape[1]
    nc = s1["wout"].shape[0]
    dilations = tuple(2 ** i for i in range(L))

    bb = _choose_block_batch(B, T)
    nblk = B // bb
    Nb = bb * T

    # Layout plumbing (cheap XLA ops on the small input): channel-first with
    # batch folded into the lane axis -> (Cin, B*T).
    x2d = jnp.transpose(x_nct, (1, 0, 2)).reshape(dim, B * T)

    stage1_w = [s1["win"], s1["bin"], s1["wd"], s1["bd"],
                s1["w1"], s1["b1"], s1["wout"], s1["bout"]]
    args = [x2d] + stage1_w
    in_specs = [pl.BlockSpec((dim, Nb), lambda b: (0, b))]
    in_specs += [pl.BlockSpec(w.shape, _const_index(w.ndim)) for w in stage1_w]
    if S > 1:
        r = packed["rest"]
        rest_w = [r["win"], r["bin"], r["wd"], r["bd"],
                  r["w1"], r["b1"], r["wout"], r["bout"]]
        args += rest_w
        in_specs += [pl.BlockSpec(w.shape, _const_index(w.ndim)) for w in rest_w]

    weight_bytes = sum(int(w.size) * w.dtype.itemsize for w in args[1:])
    flops = 2 * B * T * (dim * C + L * (3 * C * C + C * C) + C * nc)
    flops += (S - 1) * 2 * B * T * (nc * C + L * (3 * C * C + C * C) + C * nc)
    cost = pl.CostEstimate(
        flops=flops,
        transcendentals=(S - 1) * B * T * nc,
        bytes_accessed=int(x2d.size) * x2d.dtype.itemsize
                       + S * nc * B * T * x_nct.dtype.itemsize + weight_bytes,
    )

    kernel = functools.partial(_mstcn_kernel, num_stages=S,
                               dilations=dilations, T=T)
    out2d = pl.pallas_call(
        kernel,
        out_shape=jax.ShapeDtypeStruct((S, nc, B * T), x_nct.dtype),
        grid=(nblk,),
        in_specs=in_specs,
        out_specs=pl.BlockSpec((S, nc, Nb), lambda b: (0, 0, b)),
        scratch_shapes=[pltpu.VMEM((3 * C, Nb), jnp.bfloat16)],
        compiler_params=pltpu.CompilerParams(
            dimension_semantics=("parallel",),
            # 48 MiB is safe on every generation (v7x has 64 MiB VMEM per TC).
            vmem_limit_bytes=48 * 1024 * 1024,
        ),
        cost_estimate=cost,
    )(*args)

    # (S, nc, B*T) -> (S, B, nc, T)  (wrapper-side layout plumbing).
    return out2d.reshape(S, nc, B, T).transpose(0, 2, 1, 3)


# ----------------------------------------------------------------------------
# Parameter init (PyTorch-style uniform), kernel-layout packing, JAX reference
# ----------------------------------------------------------------------------
def _uniform(key, shape, fan_in):
    bound = 1.0 / jnp.sqrt(jnp.float32(fan_in))
    return jax.random.uniform(key, shape, jnp.float32, -bound, bound)


def init_single_stage(key, num_layers, num_f_maps, dim, num_classes):
    keys = jax.random.split(key, 4 + 4 * num_layers)
    params = {
        "w_in": _uniform(keys[0], (num_f_maps, dim), dim),          # (C, Cin)
        "b_in": _uniform(keys[1], (num_f_maps,), dim),
        "w_out": _uniform(keys[2], (num_classes, num_f_maps), num_f_maps),
        "b_out": _uniform(keys[3], (num_classes,), num_f_maps),
        "layers": [],
    }
    for i in range(num_layers):
        k0, k1, k2, k3 = keys[4 + 4 * i: 8 + 4 * i]
        fan_dil = num_f_maps * 3
        params["layers"].append({
            "w_dil": _uniform(k0, (num_f_maps, num_f_maps, 3), fan_dil),  # (Cout,Cin,K)
            "b_dil": _uniform(k1, (num_f_maps,), fan_dil),
            "w_1x1": _uniform(k2, (num_f_maps, num_f_maps), num_f_maps),
            "b_1x1": _uniform(k3, (num_f_maps,), num_f_maps),
        })
    return params


def init_multi_stage(key, num_stages, num_layers, num_f_maps, dim, num_classes):
    keys = jax.random.split(key, num_stages)
    return {
        "stage1": init_single_stage(keys[0], num_layers, num_f_maps, dim,
                                    num_classes),
        "stages": [
            init_single_stage(keys[s], num_layers, num_f_maps, num_classes,
                              num_classes)
            for s in range(1, num_stages)
        ],
    }


def pack_stage(p):
    """Pack natural (PyTorch-shaped) params into the fused-kernel layout."""
    C = p["w_in"].shape[0]
    L = len(p["layers"])
    nc = p["w_out"].shape[0]
    # (Cout, Cin, K) -> (Cout, K, Cin) -> (C, 3C); column blocks = taps [-d, 0, +d]
    wd = jnp.stack(
        [jnp.transpose(lp["w_dil"], (0, 2, 1)).reshape(C, 3 * C)
         for lp in p["layers"]], axis=0)
    return {
        "win": p["w_in"].astype(jnp.bfloat16),
        "bin": p["b_in"].reshape(C, 1),
        "wd": wd.astype(jnp.bfloat16),
        "bd": jnp.stack([lp["b_dil"] for lp in p["layers"]], 0).reshape(L, C, 1),
        "w1": jnp.stack([lp["w_1x1"] for lp in p["layers"]], 0).astype(jnp.bfloat16),
        "b1": jnp.stack([lp["b_1x1"] for lp in p["layers"]], 0).reshape(L, C, 1),
        "wout": p["w_out"].astype(jnp.bfloat16),
        "bout": p["b_out"].reshape(nc, 1),
    }


def pack_multi_stage(params):
    packed = {"stage1": pack_stage(params["stage1"]),
              "num_stages": 1 + len(params["stages"])}
    if params["stages"]:
        rest = [pack_stage(sp) for sp in params["stages"]]
        packed["rest"] = {k: jnp.stack([r[k] for r in rest], 0) for k in rest[0]}
    return packed


def _ref_single_stage(x, p, softmax_input):
    """Pure-JAX f32 reference (lax.conv) mirroring the PyTorch SingleStageModel."""
    if softmax_input:
        x = jax.nn.softmax(x, axis=1)
    out = jnp.einsum("oc,bct->bot", p["w_in"], x) + p["b_in"][None, :, None]
    for i, lp in enumerate(p["layers"]):
        d = 2 ** i
        h = lax.conv_general_dilated(
            out, lp["w_dil"], window_strides=(1,), padding=[(d, d)],
            rhs_dilation=(d,), dimension_numbers=("NCH", "OIH", "NCH"))
        h = jax.nn.relu(h + lp["b_dil"][None, :, None])
        o2 = jnp.einsum("oc,bct->bot", lp["w_1x1"], h) + lp["b_1x1"][None, :, None]
        out = out + o2
    return jnp.einsum("oc,bct->bot", p["w_out"], out) + p["b_out"][None, :, None]


def ref_multi_stage(x, params):
    out = _ref_single_stage(x, params["stage1"], False)
    outs = [out]
    for sp in params["stages"]:
        out = _ref_single_stage(out, sp, True)
        outs.append(out)
    return jnp.stack(outs, axis=0)


# ----------------------------------------------------------------------------
if __name__ == "__main__":
    num_stages, num_layers, num_f_maps, dim, num_classes = 2, 4, 32, 16, 8
    batch, seq_len = 2, 128

    root = jax.random.PRNGKey(0)
    k_params, k_x = jax.random.split(root)
    params = init_multi_stage(k_params, num_stages, num_layers, num_f_maps,
                              dim, num_classes)
    packed = pack_multi_stage(params)
    x = jax.random.normal(k_x, (batch, dim, seq_len), jnp.float32)   # NCT

    fwd = jax.jit(lambda xx: multi_stage_forward(xx, packed))
    out = fwd(x)
    jax.block_until_ready(out)

    assert out.shape == (num_stages, batch, num_classes, seq_len), out.shape
    assert bool(jnp.all(jnp.isfinite(out)))

    # Cross-check against an independent pure-JAX f32 (lax.conv) reference.
    # Tolerance is set deliberately for bf16 MXU operands (f32 accumulation)
    # plus the approx-reciprocal softmax denominator.
    ref = ref_multi_stage(x, params)
    max_err = float(jnp.max(jnp.abs(out - ref)))
    assert bool(jnp.allclose(out, ref, rtol=1e-1, atol=1e-1)), max_err

    print("KERNEL_OK")
</pallas_src>

<mosaic_0001>
module attributes {stable_mosaic.version = 11 : i64} {
  func.func @_mstcn_kernel(%arg0: i32, %arg1: memref<16x256xf32, #tpu.memory_space<vmem>>, %arg2: memref<32x16xbf16, #tpu.memory_space<vmem>>, %arg3: memref<32x1xf32, #tpu.memory_space<vmem>>, %arg4: memref<4x32x96xbf16, #tpu.memory_space<vmem>>, %arg5: memref<4x32x1xf32, #tpu.memory_space<vmem>>, %arg6: memref<4x32x32xbf16, #tpu.memory_space<vmem>>, %arg7: memref<4x32x1xf32, #tpu.memory_space<vmem>>, %arg8: memref<8x32xbf16, #tpu.memory_space<vmem>>, %arg9: memref<8x1xf32, #tpu.memory_space<vmem>>, %arg10: memref<1x32x8xbf16, #tpu.memory_space<vmem>>, %arg11: memref<1x32x1xf32, #tpu.memory_space<vmem>>, %arg12: memref<1x4x32x96xbf16, #tpu.memory_space<vmem>>, %arg13: memref<1x4x32x1xf32, #tpu.memory_space<vmem>>, %arg14: memref<1x4x32x32xbf16, #tpu.memory_space<vmem>>, %arg15: memref<1x4x32x1xf32, #tpu.memory_space<vmem>>, %arg16: memref<1x8x32xbf16, #tpu.memory_space<vmem>>, %arg17: memref<1x8x1xf32, #tpu.memory_space<vmem>>, %arg18: memref<2x8x256xf32, #tpu.memory_space<vmem>>, %arg19: memref<96x256xbf16, #tpu.memory_space<vmem>>) attributes {dimension_semantics = [#tpu.dimension_semantics<parallel>], iteration_bounds = array<i64: 1>, scalar_prefetch = 0 : i64, scratch_operands = 1 : i64, tpu.core_type = #tpu.core_type<tc>, window_params = [{transform_indices = @transform_0, window_bounds = array<i64: 16, 256>}, {pipeline_mode = #tpu.pipeline_mode<synchronous>, transform_indices = @transform_1, window_bounds = array<i64: 32, 16>}, {pipeline_mode = #tpu.pipeline_mode<synchronous>, transform_indices = @transform_2, window_bounds = array<i64: 32, 1>}, {pipeline_mode = #tpu.pipeline_mode<synchronous>, transform_indices = @transform_3, window_bounds = array<i64: 4, 32, 96>}, {pipeline_mode = #tpu.pipeline_mode<synchronous>, transform_indices = @transform_4, window_bounds = array<i64: 4, 32, 1>}, {pipeline_mode = #tpu.pipeline_mode<synchronous>, transform_indices = @transform_5, window_bounds = array<i64: 4, 32, 32>}, {pipeline_mode = #tpu.pipeline_mode<synchronous>, transform_indices = @transform_6, window_bounds = array<i64: 4, 32, 1>}, {pipeline_mode = #tpu.pipeline_mode<synchronous>, transform_indices = @transform_7, window_bounds = array<i64: 8, 32>}, {pipeline_mode = #tpu.pipeline_mode<synchronous>, transform_indices = @transform_8, window_bounds = array<i64: 8, 1>}, {pipeline_mode = #tpu.pipeline_mode<synchronous>, transform_indices = @transform_9, window_bounds = array<i64: 1, 32, 8>}, {pipeline_mode = #tpu.pipeline_mode<synchronous>, transform_indices = @transform_10, window_bounds = array<i64: 1, 32, 1>}, {pipeline_mode = #tpu.pipeline_mode<synchronous>, transform_indices = @transform_11, window_bounds = array<i64: 1, 4, 32, 96>}, {pipeline_mode = #tpu.pipeline_mode<synchronous>, transform_indices = @transform_12, window_bounds = array<i64: 1, 4, 32, 1>}, {pipeline_mode = #tpu.pipeline_mode<synchronous>, transform_indices = @transform_13, window_bounds = array<i64: 1, 4, 32, 32>}, {pipeline_mode = #tpu.pipeline_mode<synchronous>, transform_indices = @transform_14, window_bounds = array<i64: 1, 4, 32, 1>}, {pipeline_mode = #tpu.pipeline_mode<synchronous>, transform_indices = @transform_15, window_bounds = array<i64: 1, 8, 32>}, {pipeline_mode = #tpu.pipeline_mode<synchronous>, transform_indices = @transform_16, window_bounds = array<i64: 1, 8, 1>}, {transform_indices = @transform_17, window_bounds = array<i64: 2, 8, 256>}]} {
    %0 = tpu.iota {dimensions = array<i32: 1>} : vector<32x256xi32>
    %c128_i32 = arith.constant 128 : i32
    %c0_i32 = arith.constant 0 : i32
    %1 = arith.cmpi eq, %c128_i32, %c0_i32 : i32
    %c1_i32 = arith.constant 1 : i32
    %2 = arith.select %1, %c1_i32, %c128_i32 : i32
    %3 = vector.broadcast %2 : i32 to vector<32x256xi32>
    %4 = arith.remsi %0, %3 : vector<32x256xi32>
    %c0_i32_0 = arith.constant 0 : i32
    %5 = vector.broadcast %c0_i32_0 : i32 to vector<32x256xi32>
    %6 = arith.cmpi ne, %4, %5 : vector<32x256xi32>
    %c0_i32_1 = arith.constant 0 : i32
    %7 = vector.broadcast %c0_i32_1 : i32 to vector<32x256xi32>
    %8 = arith.cmpi slt, %4, %7 : vector<32x256xi32>
    %c0_i32_2 = arith.constant 0 : i32
    %9 = arith.cmpi slt, %2, %c0_i32_2 : i32
    %10 = vector.broadcast %9 : i1 to vector<32x256xi1>
    %11 = vector.broadcast %10 : vector<32x256xi1> to vector<32x256xi1>
    %12 = arith.xori %8, %11 : vector<32x256xi1>
    %13 = arith.andi %12, %6 : vector<32x256xi1>
    %14 = vector.broadcast %2 : i32 to vector<32x256xi32>
    %15 = arith.addi %4, %14 : vector<32x256xi32>
    %16 = arith.select %13, %15, %4 : vector<32x256xi1>, vector<32x256xi32>
    %c0 = arith.constant 0 : index
    %c0_3 = arith.constant 0 : index
    %17 = vector.load %arg1[%c0, %c0_3] : memref<16x256xf32, #tpu.memory_space<vmem>>, vector<16x256xf32>
    %c0_4 = arith.constant 0 : index
    %c0_5 = arith.constant 0 : index
    %18 = vector.load %arg2[%c0_4, %c0_5] : memref<32x16xbf16, #tpu.memory_space<vmem>>, vector<32x16xbf16>
    %c0_6 = arith.constant 0 : index
    %c0_7 = arith.constant 0 : index
    %19 = vector.load %arg3[%c0_6, %c0_7] : memref<32x1xf32, #tpu.memory_space<vmem>>, vector<32x1xf32>
    %c0_8 = arith.constant 0 : index
    %c0_9 = arith.constant 0 : index
    %c0_10 = arith.constant 0 : index
    %20 = vector.load %arg4[%c0_8, %c0_9, %c0_10] : memref<4x32x96xbf16, #tpu.memory_space<vmem>>, vector<4x32x96xbf16>
    %c0_11 = arith.constant 0 : index
    %c0_12 = arith.constant 0 : index
    %c0_13 = arith.constant 0 : index
    %21 = vector.load %arg5[%c0_11, %c0_12, %c0_13] : memref<4x32x1xf32, #tpu.memory_space<vmem>>, vector<4x32x1xf32>
    %c0_14 = arith.constant 0 : index
    %c0_15 = arith.constant 0 : index
    %c0_16 = arith.constant 0 : index
    %22 = vector.load %arg6[%c0_14, %c0_15, %c0_16] : memref<4x32x32xbf16, #tpu.memory_space<vmem>>, vector<4x32x32xbf16>
    %c0_17 = arith.constant 0 : index
    %c0_18 = arith.constant 0 : index
    %c0_19 = arith.constant 0 : index
    %23 = vector.load %arg7[%c0_17, %c0_18, %c0_19] : memref<4x32x1xf32, #tpu.memory_space<vmem>>, vector<4x32x1xf32>
    %c0_20 = arith.constant 0 : index
    %c0_21 = arith.constant 0 : index
    %24 = vector.load %arg8[%c0_20, %c0_21] : memref<8x32xbf16, #tpu.memory_space<vmem>>, vector<8x32xbf16>
    %c0_22 = arith.constant 0 : index
    %c0_23 = arith.constant 0 : index
    %25 = vector.load %arg9[%c0_22, %c0_23] : memref<8x1xf32, #tpu.memory_space<vmem>>, vector<8x1xf32>
    %26 = arith.truncf %17 : vector<16x256xf32> to vector<16x256xbf16>
    %cst = arith.constant dense<0.000000e+00> : vector<32x256xf32>
    %27 = tpu.matmul %18, %26, %cst {dimension_numbers = #tpu.dot_dimension_numbers<[1], [0], [0], [1], [0, 0, 1, 1], [], []>} : vector<32x16xbf16>, vector<16x256xbf16>, vector<32x256xf32> -> vector<32x256xf32>
    %28 = vector.broadcast %19 : vector<32x1xf32> to vector<32x256xf32>
    %29 = arith.addf %27, %28 : vector<32x256xf32>
    %c1_i32_24 = arith.constant 1 : i32
    %30 = vector.broadcast %c1_i32_24 : i32 to vector<32x256xi32>
    %31 = arith.cmpi sge, %16, %30 : vector<32x256xi32>
    %c1_i32_25 = arith.constant 1 : i32
    %32 = tpu.dynamic_rotate %29 by %c1_i32_25 dim 1 : vector<32x256xf32>, i32 -> vector<32x256xf32>
    %cst_26 = arith.constant 0.000000e+00 : f32
    %33 = vector.broadcast %cst_26 : f32 to vector<32x256xf32>
    %34 = arith.select %31, %32, %33 : vector<32x256xi1>, vector<32x256xf32>
    %c127_i32 = arith.constant 127 : i32
    %35 = vector.broadcast %c127_i32 : i32 to vector<32x256xi32>
    %36 = arith.cmpi slt, %16, %35 : vector<32x256xi32>
    %c255_i32 = arith.constant 255 : i32
    %37 = tpu.dynamic_rotate %29 by %c255_i32 dim 1 : vector<32x256xf32>, i32 -> vector<32x256xf32>
    %cst_27 = arith.constant 0.000000e+00 : f32
    %38 = vector.broadcast %cst_27 : f32 to vector<32x256xf32>
    %39 = arith.select %36, %37, %38 : vector<32x256xi1>, vector<32x256xf32>
    %40 = arith.truncf %34 : vector<32x256xf32> to vector<32x256xbf16>
    %c0_28 = arith.constant 0 : index
    %c0_29 = arith.constant 0 : index
    %41 = vector.load %arg19[%c0_28, %c0_29] : memref<96x256xbf16, #tpu.memory_space<vmem>>, vector<32x256xbf16>
    tpu.vector_store %arg19[%c0_28, %c0_29], %40 {strides = array<i32>} : memref<96x256xbf16, #tpu.memory_space<vmem>>, vector<32x256xbf16>,
    %42 = arith.truncf %29 : vector<32x256xf32> to vector<32x256xbf16>
    %c32 = arith.constant 32 : index
    %c0_30 = arith.constant 0 : index
    %43 = vector.load %arg19[%c32, %c0_30] : memref<96x256xbf16, #tpu.memory_space<vmem>>, vector<32x256xbf16>
    tpu.vector_store %arg19[%c32, %c0_30], %42 {strides = array<i32>} : memref<96x256xbf16, #tpu.memory_space<vmem>>, vector<32x256xbf16>,
    %44 = arith.truncf %39 : vector<32x256xf32> to vector<32x256xbf16>
    %c64 = arith.constant 64 : index
    %c0_31 = arith.constant 0 : index
    %45 = vector.load %arg19[%c64, %c0_31] : memref<96x256xbf16, #tpu.memory_space<vmem>>, vector<32x256xbf16>
    tpu.vector_store %arg19[%c64, %c0_31], %44 {strides = array<i32>} : memref<96x256xbf16, #tpu.memory_space<vmem>>, vector<32x256xbf16>,
    %46 = vector.extract_strided_slice %20 {offsets = [0, 0, 0], sizes = [1, 32, 96], strides = [1, 1, 1]} : vector<4x32x96xbf16> to vector<1x32x96xbf16>
    %47 = vector.shape_cast %46 : vector<1x32x96xbf16> to vector<32x96xbf16>
    %c0_32 = arith.constant 0 : index
    %c0_33 = arith.constant 0 : index
    %48 = vector.load %arg19[%c0_32, %c0_33] : memref<96x256xbf16, #tpu.memory_space<vmem>>, vector<96x256xbf16>
    %cst_34 = arith.constant dense<0.000000e+00> : vector<32x256xf32>
    %49 = tpu.matmul %47, %48, %cst_34 {dimension_numbers = #tpu.dot_dimension_numbers<[1], [0], [0], [1], [0, 0, 1, 1], [], []>} : vector<32x96xbf16>, vector<96x256xbf16>, vector<32x256xf32> -> vector<32x256xf32>
    %50 = vector.extract_strided_slice %21 {offsets = [0, 0, 0], sizes = [1, 32, 1], strides = [1, 1, 1]} : vector<4x32x1xf32> to vector<1x32x1xf32>
    %51 = vector.shape_cast %50 : vector<1x32x1xf32> to vector<32x1xf32>
    %52 = vector.broadcast %51 : vector<32x1xf32> to vector<32x256xf32>
    %53 = arith.addf %49, %52 : vector<32x256xf32>
    %cst_35 = arith.constant 0.000000e+00 : f32
    %54 = vector.broadcast %cst_35 : f32 to vector<32x256xf32>
    %55 = arith.maximumf %53, %54 : vector<32x256xf32>
    %56 = vector.extract_strided_slice %22 {offsets = [0, 0, 0], sizes = [1, 32, 32], strides = [1, 1, 1]} : vector<4x32x32xbf16> to vector<1x32x32xbf16>
    %57 = vector.shape_cast %56 : vector<1x32x32xbf16> to vector<32x32xbf16>
    %58 = arith.truncf %55 : vector<32x256xf32> to vector<32x256xbf16>
    %cst_36 = arith.constant dense<0.000000e+00> : vector<32x256xf32>
    %59 = tpu.matmul %57, %58, %cst_36 {dimension_numbers = #tpu.dot_dimension_numbers<[1], [0], [0], [1], [0, 0, 1, 1], [], []>} : vector<32x32xbf16>, vector<32x256xbf16>, vector<32x256xf32> -> vector<32x256xf32>
    %60 = vector.extract_strided_slice %23 {offsets = [0, 0, 0], sizes = [1, 32, 1], strides = [1, 1, 1]} : vector<4x32x1xf32> to vector<1x32x1xf32>
    %61 = vector.shape_cast %60 : vector<1x32x1xf32> to vector<32x1xf32>
    %62 = vector.broadcast %61 : vector<32x1xf32> to vector<32x256xf32>
    %63 = arith.addf %59, %62 : vector<32x256xf32>
    %64 = arith.addf %29, %63 : vector<32x256xf32>
    %c2_i32 = arith.constant 2 : i32
    %65 = vector.broadcast %c2_i32 : i32 to vector<32x256xi32>
    %66 = arith.cmpi sge, %16, %65 : vector<32x256xi32>
    %c2_i32_37 = arith.constant 2 : i32
    %67 = tpu.dynamic_rotate %64 by %c2_i32_37 dim 1 : vector<32x256xf32>, i32 -> vector<32x256xf32>
    %cst_38 = arith.constant 0.000000e+00 : f32
    %68 = vector.broadcast %cst_38 : f32 to vector<32x256xf32>
    %69 = arith.select %66, %67, %68 : vector<32x256xi1>, vector<32x256xf32>
    %c126_i32 = arith.constant 126 : i32
    %70 = vector.broadcast %c126_i32 : i32 to vector<32x256xi32>
    %71 = arith.cmpi slt, %16, %70 : vector<32x256xi32>
    %c254_i32 = arith.constant 254 : i32
    %72 = tpu.dynamic_rotate %64 by %c254_i32 dim 1 : vector<32x256xf32>, i32 -> vector<32x256xf32>
    %cst_39 = arith.constant 0.000000e+00 : f32
    %73 = vector.broadcast %cst_39 : f32 to vector<32x256xf32>
    %74 = arith.select %71, %72, %73 : vector<32x256xi1>, vector<32x256xf32>
    %75 = arith.truncf %69 : vector<32x256xf32> to vector<32x256xbf16>
    %c0_40 = arith.constant 0 : index
    %c0_41 = arith.constant 0 : index
    %76 = vector.load %arg19[%c0_40, %c0_41] : memref<96x256xbf16, #tpu.memory_space<vmem>>, vector<32x256xbf16>
    tpu.vector_store %arg19[%c0_40, %c0_41], %75 {strides = array<i32>} : memref<96x256xbf16, #tpu.memory_space<vmem>>, vector<32x256xbf16>,
    %77 = arith.truncf %64 : vector<32x256xf32> to vector<32x256xbf16>
    %c32_42 = arith.constant 32 : index
    %c0_43 = arith.constant 0 : index
    %78 = vector.load %arg19[%c32_42, %c0_43] : memref<96x256xbf16, #tpu.memory_space<vmem>>, vector<32x256xbf16>
    tpu.vector_store %arg19[%c32_42, %c0_43], %77 {strides = array<i32>} : memref<96x256xbf16, #tpu.memory_space<vmem>>, vector<32x256xbf16>,
    %79 = arith.truncf %74 : vector<32x256xf32> to vector<32x256xbf16>
    %c64_44 = arith.constant 64 : index
    %c0_45 = arith.constant 0 : index
    %80 = vector.load %arg19[%c64_44, %c0_45] : memref<96x256xbf16, #tpu.memory_space<vmem>>, vector<32x256xbf16>
    tpu.vector_store %arg19[%c64_44, %c0_45], %79 {strides = array<i32>} : memref<96x256xbf16, #tpu.memory_space<vmem>>, vector<32x256xbf16>,
    %81 = vector.extract_strided_slice %20 {offsets = [1, 0, 0], sizes = [1, 32, 96], strides = [1, 1, 1]} : vector<4x32x96xbf16> to vector<1x32x96xbf16>
    %82 = vector.shape_cast %81 : vector<1x32x96xbf16> to vector<32x96xbf16>
    %c0_46 = arith.constant 0 : index
    %c0_47 = arith.constant 0 : index
    %83 = vector.load %arg19[%c0_46, %c0_47] : memref<96x256xbf16, #tpu.memory_space<vmem>>, vector<96x256xbf16>
    %cst_48 = arith.constant dense<0.000000e+00> : vector<32x256xf32>
    %84 = tpu.matmul %82, %83, %cst_48 {dimension_numbers = #tpu.dot_dimension_numbers<[1], [0], [0], [1], [0, 0, 1, 1], [], []>} : vector<32x96xbf16>, vector<96x256xbf16>, vector<32x256xf32> -> vector<32x256xf32>
    %85 = vector.extract_strided_slice %21 {offsets = [1, 0, 0], sizes = [1, 32, 1], strides = [1, 1, 1]} : vector<4x32x1xf32> to vector<1x32x1xf32>
    %86 = vector.shape_cast %85 : vector<1x32x1xf32> to vector<32x1xf32>
    %87 = vector.broadcast %86 : vector<32x1xf32> to vector<32x256xf32>
    %88 = arith.addf %84, %87 : vector<32x256xf32>
    %cst_49 = arith.constant 0.000000e+00 : f32
    %89 = vector.broadcast %cst_49 : f32 to vector<32x256xf32>
    %90 = arith.maximumf %88, %89 : vector<32x256xf32>
    %91 = vector.extract_strided_slice %22 {offsets = [1, 0, 0], sizes = [1, 32, 32], strides = [1, 1, 1]} : vector<4x32x32xbf16> to vector<1x32x32xbf16>
    %92 = vector.shape_cast %91 : vector<1x32x32xbf16> to vector<32x32xbf16>
    %93 = arith.truncf %90 : vector<32x256xf32> to vector<32x256xbf16>
    %cst_50 = arith.constant dense<0.000000e+00> : vector<32x256xf32>
    %94 = tpu.matmul %92, %93, %cst_50 {dimension_numbers = #tpu.dot_dimension_numbers<[1], [0], [0], [1], [0, 0, 1, 1], [], []>} : vector<32x32xbf16>, vector<32x256xbf16>, vector<32x256xf32> -> vector<32x256xf32>
    %95 = vector.extract_strided_slice %23 {offsets = [1, 0, 0], sizes = [1, 32, 1], strides = [1, 1, 1]} : vector<4x32x1xf32> to vector<1x32x1xf32>
    %96 = vector.shape_cast %95 : vector<1x32x1xf32> to vector<32x1xf32>
    %97 = vector.broadcast %96 : vector<32x1xf32> to vector<32x256xf32>
    %98 = arith.addf %94, %97 : vector<32x256xf32>
    %99 = arith.addf %64, %98 : vector<32x256xf32>
    %c4_i32 = arith.constant 4 : i32
    %100 = vector.broadcast %c4_i32 : i32 to vector<32x256xi32>
    %101 = arith.cmpi sge, %16, %100 : vector<32x256xi32>
    %c4_i32_51 = arith.constant 4 : i32
    %102 = tpu.dynamic_rotate %99 by %c4_i32_51 dim 1 : vector<32x256xf32>, i32 -> vector<32x256xf32>
    %cst_52 = arith.constant 0.000000e+00 : f32
    %103 = vector.broadcast %cst_52 : f32 to vector<32x256xf32>
    %104 = arith.select %101, %102, %103 : vector<32x256xi1>, vector<32x256xf32>
    %c124_i32 = arith.constant 124 : i32
    %105 = vector.broadcast %c124_i32 : i32 to vector<32x256xi32>
    %106 = arith.cmpi slt, %16, %105 : vector<32x256xi32>
    %c252_i32 = arith.constant 252 : i32
    %107 = tpu.dynamic_rotate %99 by %c252_i32 dim 1 : vector<32x256xf32>, i32 -> vector<32x256xf32>
    %cst_53 = arith.constant 0.000000e+00 : f32
    %108 = vector.broadcast %cst_53 : f32 to vector<32x256xf32>
    %109 = arith.select %106, %107, %108 : vector<32x256xi1>, vector<32x256xf32>
    %110 = arith.truncf %104 : vector<32x256xf32> to vector<32x256xbf16>
    %c0_54 = arith.constant 0 : index
    %c0_55 = arith.constant 0 : index
    %111 = vector.load %arg19[%c0_54, %c0_55] : memref<96x256xbf16, #tpu.memory_space<vmem>>, vector<32x256xbf16>
    tpu.vector_store %arg19[%c0_54, %c0_55], %110 {strides = array<i32>} : memref<96x256xbf16, #tpu.memory_space<vmem>>, vector<32x256xbf16>,
    %112 = arith.truncf %99 : vector<32x256xf32> to vector<32x256xbf16>
    %c32_56 = arith.constant 32 : index
    %c0_57 = arith.constant 0 : index
    %113 = vector.load %arg19[%c32_56, %c0_57] : memref<96x256xbf16, #tpu.memory_space<vmem>>, vector<32x256xbf16>
    tpu.vector_store %arg19[%c32_56, %c0_57], %112 {strides = array<i32>} : memref<96x256xbf16, #tpu.memory_space<vmem>>, vector<32x256xbf16>,
    %114 = arith.truncf %109 : vector<32x256xf32> to vector<32x256xbf16>
    %c64_58 = arith.constant 64 : index
    %c0_59 = arith.constant 0 : index
    %115 = vector.load %arg19[%c64_58, %c0_59] : memref<96x256xbf16, #tpu.memory_space<vmem>>, vector<32x256xbf16>
    tpu.vector_store %arg19[%c64_58, %c0_59], %114 {strides = array<i32>} : memref<96x256xbf16, #tpu.memory_space<vmem>>, vector<32x256xbf16>,
    %116 = vector.extract_strided_slice %20 {offsets = [2, 0, 0], sizes = [1, 32, 96], strides = [1, 1, 1]} : vector<4x32x96xbf16> to vector<1x32x96xbf16>
    %117 = vector.shape_cast %116 : vector<1x32x96xbf16> to vector<32x96xbf16>
    %c0_60 = arith.constant 0 : index
    %c0_61 = arith.constant 0 : index
    %118 = vector.load %arg19[%c0_60, %c0_61] : memref<96x256xbf16, #tpu.memory_space<vmem>>, vector<96x256xbf16>
    %cst_62 = arith.constant dense<0.000000e+00> : vector<32x256xf32>
    %119 = tpu.matmul %117, %118, %cst_62 {dimension_numbers = #tpu.dot_dimension_numbers<[1], [0], [0], [1], [0, 0, 1, 1], [], []>} : vector<32x96xbf16>, vector<96x256xbf16>, vector<32x256xf32> -> vector<32x256xf32>
    %120 = vector.extract_strided_slice %21 {offsets = [2, 0, 0], sizes = [1, 32, 1], strides = [1, 1, 1]} : vector<4x32x1xf32> to vector<1x32x1xf32>
    %121 = vector.shape_cast %120 : vector<1x32x1xf32> to vector<32x1xf32>
    %122 = vector.broadcast %121 : vector<32x1xf32> to vector<32x256xf32>
    %123 = arith.addf %119, %122 : vector<32x256xf32>
    %cst_63 = arith.constant 0.000000e+00 : f32
    %124 = vector.broadcast %cst_63 : f32 to vector<32x256xf32>
    %125 = arith.maximumf %123, %124 : vector<32x256xf32>
    %126 = vector.extract_strided_slice %22 {offsets = [2, 0, 0], sizes = [1, 32, 32], strides = [1, 1, 1]} : vector<4x32x32xbf16> to vector<1x32x32xbf16>
    %127 = vector.shape_cast %126 : vector<1x32x32xbf16> to vector<32x32xbf16>
    %128 = arith.truncf %125 : vector<32x256xf32> to vector<32x256xbf16>
    %cst_64 = arith.constant dense<0.000000e+00> : vector<32x256xf32>
    %129 = tpu.matmul %127, %128, %cst_64 {dimension_numbers = #tpu.dot_dimension_numbers<[1], [0], [0], [1], [0, 0, 1, 1], [], []>} : vector<32x32xbf16>, vector<32x256xbf16>, vector<32x256xf32> -> vector<32x256xf32>
    %130 = vector.extract_strided_slice %23 {offsets = [2, 0, 0], sizes = [1, 32, 1], strides = [1, 1, 1]} : vector<4x32x1xf32> to vector<1x32x1xf32>
    %131 = vector.shape_cast %130 : vector<1x32x1xf32> to vector<32x1xf32>
    %132 = vector.broadcast %131 : vector<32x1xf32> to vector<32x256xf32>
    %133 = arith.addf %129, %132 : vector<32x256xf32>
    %134 = arith.addf %99, %133 : vector<32x256xf32>
    %c8_i32 = arith.constant 8 : i32
    %135 = vector.broadcast %c8_i32 : i32 to vector<32x256xi32>
    %136 = arith.cmpi sge, %16, %135 : vector<32x256xi32>
    %c8_i32_65 = arith.constant 8 : i32
    %137 = tpu.dynamic_rotate %134 by %c8_i32_65 dim 1 : vector<32x256xf32>, i32 -> vector<32x256xf32>
    %cst_66 = arith.constant 0.000000e+00 : f32
    %138 = vector.broadcast %cst_66 : f32 to vector<32x256xf32>
    %139 = arith.select %136, %137, %138 : vector<32x256xi1>, vector<32x256xf32>
    %c120_i32 = arith.constant 120 : i32
    %140 = vector.broadcast %c120_i32 : i32 to vector<32x256xi32>
    %141 = arith.cmpi slt, %16, %140 : vector<32x256xi32>
    %c248_i32 = arith.constant 248 : i32
    %142 = tpu.dynamic_rotate %134 by %c248_i32 dim 1 : vector<32x256xf32>, i32 -> vector<32x256xf32>
    %cst_67 = arith.constant 0.000000e+00 : f32
    %143 = vector.broadcast %cst_67 : f32 to vector<32x256xf32>
    %144 = arith.select %141, %142, %143 : vector<32x256xi1>, vector<32x256xf32>
    %145 = arith.truncf %139 : vector<32x256xf32> to vector<32x256xbf16>
    %c0_68 = arith.constant 0 : index
    %c0_69 = arith.constant 0 : index
    %146 = vector.load %arg19[%c0_68, %c0_69] : memref<96x256xbf16, #tpu.memory_space<vmem>>, vector<32x256xbf16>
    tpu.vector_store %arg19[%c0_68, %c0_69], %145 {strides = array<i32>} : memref<96x256xbf16, #tpu.memory_space<vmem>>, vector<32x256xbf16>,
    %147 = arith.truncf %134 : vector<32x256xf32> to vector<32x256xbf16>
    %c32_70 = arith.constant 32 : index
    %c0_71 = arith.constant 0 : index
    %148 = vector.load %arg19[%c32_70, %c0_71] : memref<96x256xbf16, #tpu.memory_space<vmem>>, vector<32x256xbf16>
    tpu.vector_store %arg19[%c32_70, %c0_71], %147 {strides = array<i32>} : memref<96x256xbf16, #tpu.memory_space<vmem>>, vector<32x256xbf16>,
    %149 = arith.truncf %144 : vector<32x256xf32> to vector<32x256xbf16>
    %c64_72 = arith.constant 64 : index
    %c0_73 = arith.constant 0 : index
    %150 = vector.load %arg19[%c64_72, %c0_73] : memref<96x256xbf16, #tpu.memory_space<vmem>>, vector<32x256xbf16>
    tpu.vector_store %arg19[%c64_72, %c0_73], %149 {strides = array<i32>} : memref<96x256xbf16, #tpu.memory_space<vmem>>, vector<32x256xbf16>,
    %151 = vector.extract_strided_slice %20 {offsets = [3, 0, 0], sizes = [1, 32, 96], strides = [1, 1, 1]} : vector<4x32x96xbf16> to vector<1x32x96xbf16>
    %152 = vector.shape_cast %151 : vector<1x32x96xbf16> to vector<32x96xbf16>
    %c0_74 = arith.constant 0 : index
    %c0_75 = arith.constant 0 : index
    %153 = vector.load %arg19[%c0_74, %c0_75] : memref<96x256xbf16, #tpu.memory_space<vmem>>, vector<96x256xbf16>
    %cst_76 = arith.constant dense<0.000000e+00> : vector<32x256xf32>
    %154 = tpu.matmul %152, %153, %cst_76 {dimension_numbers = #tpu.dot_dimension_numbers<[1], [0], [0], [1], [0, 0, 1, 1], [], []>} : vector<32x96xbf16>, vector<96x256xbf16>, vector<32x256xf32> -> vector<32x256xf32>
    %155 = vector.extract_strided_slice %21 {offsets = [3, 0, 0], sizes = [1, 32, 1], strides = [1, 1, 1]} : vector<4x32x1xf32> to vector<1x32x1xf32>
    %156 = vector.shape_cast %155 : vector<1x32x1xf32> to vector<32x1xf32>
    %157 = vector.broadcast %156 : vector<32x1xf32> to vector<32x256xf32>
    %158 = arith.addf %154, %157 : vector<32x256xf32>
    %cst_77 = arith.constant 0.000000e+00 : f32
    %159 = vector.broadcast %cst_77 : f32 to vector<32x256xf32>
    %160 = arith.maximumf %158, %159 : vector<32x256xf32>
    %161 = vector.extract_strided_slice %22 {offsets = [3, 0, 0], sizes = [1, 32, 32], strides = [1, 1, 1]} : vector<4x32x32xbf16> to vector<1x32x32xbf16>
    %162 = vector.shape_cast %161 : vector<1x32x32xbf16> to vector<32x32xbf16>
    %163 = arith.truncf %160 : vector<32x256xf32> to vector<32x256xbf16>
    %cst_78 = arith.constant dense<0.000000e+00> : vector<32x256xf32>
    %164 = tpu.matmul %162, %163, %cst_78 {dimension_numbers = #tpu.dot_dimension_numbers<[1], [0], [0], [1], [0, 0, 1, 1], [], []>} : vector<32x32xbf16>, vector<32x256xbf16>, vector<32x256xf32> -> vector<32x256xf32>
    %165 = vector.extract_strided_slice %23 {offsets = [3, 0, 0], sizes = [1, 32, 1], strides = [1, 1, 1]} : vector<4x32x1xf32> to vector<1x32x1xf32>
    %166 = vector.shape_cast %165 : vector<1x32x1xf32> to vector<32x1xf32>
    %167 = vector.broadcast %166 : vector<32x1xf32> to vector<32x256xf32>
    %168 = arith.addf %164, %167 : vector<32x256xf32>
    %169 = arith.addf %134, %168 : vector<32x256xf32>
    %170 = arith.truncf %169 : vector<32x256xf32> to vector<32x256xbf16>
    %cst_79 = arith.constant dense<0.000000e+00> : vector<8x256xf32>
    %171 = tpu.matmul %24, %170, %cst_79 {dimension_numbers = #tpu.dot_dimension_numbers<[1], [0], [0], [1], [0, 0, 1, 1], [], []>} : vector<8x32xbf16>, vector<32x256xbf16>, vector<8x256xf32> -> vector<8x256xf32>
    %172 = vector.broadcast %25 : vector<8x1xf32> to vector<8x256xf32>
    %173 = arith.addf %171, %172 : vector<8x256xf32>
    %c0_80 = arith.constant 0 : index
    %c0_81 = arith.constant 0 : index
    %c0_82 = arith.constant 0 : index
    %174 = vector.load %arg18[%c0_80, %c0_81, %c0_82] : memref<2x8x256xf32, #tpu.memory_space<vmem>>, vector<1x8x256xf32>
    %175 = vector.shape_cast %174 : vector<1x8x256xf32> to vector<8x256xf32>
    %176 = vector.shape_cast %173 : vector<8x256xf32> to vector<1x8x256xf32>
    tpu.vector_store %arg18[%c0_80, %c0_81, %c0_82], %176 {strides = array<i32>} : memref<2x8x256xf32, #tpu.memory_space<vmem>>, vector<1x8x256xf32>,
    %c0_83 = arith.constant 0 : index
    %c0_84 = arith.constant 0 : index
    %c0_85 = arith.constant 0 : index
    %177 = vector.load %arg10[%c0_83, %c0_84, %c0_85] : memref<1x32x8xbf16, #tpu.memory_space<vmem>>, vector<1x32x8xbf16>
    %178 = vector.shape_cast %177 : vector<1x32x8xbf16> to vector<32x8xbf16>
    %c0_86 = arith.constant 0 : index
    %c0_87 = arith.constant 0 : index
    %c0_88 = arith.constant 0 : index
    %179 = vector.load %arg11[%c0_86, %c0_87, %c0_88] : memref<1x32x1xf32, #tpu.memory_space<vmem>>, vector<1x32x1xf32>
    %180 = vector.shape_cast %179 : vector<1x32x1xf32> to vector<32x1xf32>
    %c0_89 = arith.constant 0 : index
    %c0_90 = arith.constant 0 : index
    %c0_91 = arith.constant 0 : index
    %c0_92 = arith.constant 0 : index
    %181 = vector.load %arg12[%c0_89, %c0_90, %c0_91, %c0_92] : memref<1x4x32x96xbf16, #tpu.memory_space<vmem>>, vector<1x4x32x96xbf16>
    %182 = vector.shape_cast %181 : vector<1x4x32x96xbf16> to vector<4x32x96xbf16>
    %c0_93 = arith.constant 0 : index
    %c0_94 = arith.constant 0 : index
    %c0_95 = arith.constant 0 : index
    %c0_96 = arith.constant 0 : index
    %183 = vector.load %arg13[%c0_93, %c0_94, %c0_95, %c0_96] : memref<1x4x32x1xf32, #tpu.memory_space<vmem>>, vector<1x4x32x1xf32>
    %184 = vector.shape_cast %183 : vector<1x4x32x1xf32> to vector<4x32x1xf32>
    %c0_97 = arith.constant 0 : index
    %c0_98 = arith.constant 0 : index
    %c0_99 = arith.constant 0 : index
    %c0_100 = arith.constant 0 : index
    %185 = vector.load %arg14[%c0_97, %c0_98, %c0_99, %c0_100] : memref<1x4x32x32xbf16, #tpu.memory_space<vmem>>, vector<1x4x32x32xbf16>
    %186 = vector.shape_cast %185 : vector<1x4x32x32xbf16> to vector<4x32x32xbf16>
    %c0_101 = arith.constant 0 : index
    %c0_102 = arith.constant 0 : index
    %c0_103 = arith.constant 0 : index
    %c0_104 = arith.constant 0 : index
    %187 = vector.load %arg15[%c0_101, %c0_102, %c0_103, %c0_104] : memref<1x4x32x1xf32, #tpu.memory_space<vmem>>, vector<1x4x32x1xf32>
    %188 = vector.shape_cast %187 : vector<1x4x32x1xf32> to vector<4x32x1xf32>
    %c0_105 = arith.constant 0 : index
    %c0_106 = arith.constant 0 : index
    %c0_107 = arith.constant 0 : index
    %189 = vector.load %arg16[%c0_105, %c0_106, %c0_107] : memref<1x8x32xbf16, #tpu.memory_space<vmem>>, vector<1x8x32xbf16>
    %190 = vector.shape_cast %189 : vector<1x8x32xbf16> to vector<8x32xbf16>
    %c0_108 = arith.constant 0 : index
    %c0_109 = arith.constant 0 : index
    %c0_110 = arith.constant 0 : index
    %191 = vector.load %arg17[%c0_108, %c0_109, %c0_110] : memref<1x8x1xf32, #tpu.memory_space<vmem>>, vector<1x8x1xf32>
    %192 = vector.shape_cast %191 : vector<1x8x1xf32> to vector<8x1xf32>
    %cst_111 = arith.constant dense<0xFF800000> : vector<256xf32>
    %193 = vector.multi_reduction <maximumf>, %173, %cst_111 [0] : vector<8x256xf32> to vector<256xf32>
    %194 = vector.shape_cast %193 : vector<256xf32> to vector<1x256xf32>
    %195 = vector.broadcast %194 : vector<1x256xf32> to vector<8x256xf32>
    %196 = arith.subf %173, %195 : vector<8x256xf32>
    %197 = math.exp %196 : vector<8x256xf32>
    %cst_112 = arith.constant dense<0.000000e+00> : vector<256xf32>
    %198 = vector.multi_reduction <add>, %197, %cst_112 [0] : vector<8x256xf32> to vector<256xf32>
    %199 = vector.shape_cast %198 : vector<256xf32> to vector<1x256xf32>
    %200 = tpu.reciprocal %199 {approx = true} : vector<1x256xf32> -> vector<1x256xf32>
    %201 = vector.broadcast %200 : vector<1x256xf32> to vector<8x256xf32>
    %202 = arith.mulf %197, %201 : vector<8x256xf32>
    %203 = arith.truncf %202 : vector<8x256xf32> to vector<8x256xbf16>
    %cst_113 = arith.constant dense<0.000000e+00> : vector<32x256xf32>
    %204 = tpu.matmul %178, %203, %cst_113 {dimension_numbers = #tpu.dot_dimension_numbers<[1], [0], [0], [1], [0, 0, 1, 1], [], []>} : vector<32x8xbf16>, vector<8x256xbf16>, vector<32x256xf32> -> vector<32x256xf32>
    %205 = vector.broadcast %180 : vector<32x1xf32> to vector<32x256xf32>
    %206 = arith.addf %204, %205 : vector<32x256xf32>
    %c1_i32_114 = arith.constant 1 : i32
    %207 = vector.broadcast %c1_i32_114 : i32 to vector<32x256xi32>
    %208 = arith.cmpi sge, %16, %207 : vector<32x256xi32>
    %c1_i32_115 = arith.constant 1 : i32
    %209 = tpu.dynamic_rotate %206 by %c1_i32_115 dim 1 : vector<32x256xf32>, i32 -> vector<32x256xf32>
    %cst_116 = arith.constant 0.000000e+00 : f32
    %210 = vector.broadcast %cst_116 : f32 to vector<32x256xf32>
    %211 = arith.select %208, %209, %210 : vector<32x256xi1>, vector<32x256xf32>
    %c127_i32_117 = arith.constant 127 : i32
    %212 = vector.broadcast %c127_i32_117 : i32 to vector<32x256xi32>
    %213 = arith.cmpi slt, %16, %212 : vector<32x256xi32>
    %c255_i32_118 = arith.constant 255 : i32
    %214 = tpu.dynamic_rotate %206 by %c255_i32_118 dim 1 : vector<32x256xf32>, i32 -> vector<32x256xf32>
    %cst_119 = arith.constant 0.000000e+00 : f32
    %215 = vector.broadcast %cst_119 : f32 to vector<32x256xf32>
    %216 = arith.select %213, %214, %215 : vector<32x256xi1>, vector<32x256xf32>
    %217 = arith.truncf %211 : vector<32x256xf32> to vector<32x256xbf16>
    %c0_120 = arith.constant 0 : index
    %c0_121 = arith.constant 0 : index
    %218 = vector.load %arg19[%c0_120, %c0_121] : memref<96x256xbf16, #tpu.memory_space<vmem>>, vector<32x256xbf16>
    tpu.vector_store %arg19[%c0_120, %c0_121], %217 {strides = array<i32>} : memref<96x256xbf16, #tpu.memory_space<vmem>>, vector<32x256xbf16>,
    %219 = arith.truncf %206 : vector<32x256xf32> to vector<32x256xbf16>
    %c32_122 = arith.constant 32 : index
    %c0_123 = arith.constant 0 : index
    %220 = vector.load %arg19[%c32_122, %c0_123] : memref<96x256xbf16, #tpu.memory_space<vmem>>, vector<32x256xbf16>
    tpu.vector_store %arg19[%c32_122, %c0_123], %219 {strides = array<i32>} : memref<96x256xbf16, #tpu.memory_space<vmem>>, vector<32x256xbf16>,
    %221 = arith.truncf %216 : vector<32x256xf32> to vector<32x256xbf16>
    %c64_124 = arith.constant 64 : index
    %c0_125 = arith.constant 0 : index
    %222 = vector.load %arg19[%c64_124, %c0_125] : memref<96x256xbf16, #tpu.memory_space<vmem>>, vector<32x256xbf16>
    tpu.vector_store %arg19[%c64_124, %c0_125], %221 {strides = array<i32>} : memref<96x256xbf16, #tpu.memory_space<vmem>>, vector<32x256xbf16>,
    %223 = vector.extract_strided_slice %182 {offsets = [0, 0, 0], sizes = [1, 32, 96], strides = [1, 1, 1]} : vector<4x32x96xbf16> to vector<1x32x96xbf16>
    %224 = vector.shape_cast %223 : vector<1x32x96xbf16> to vector<32x96xbf16>
    %c0_126 = arith.constant 0 : index
    %c0_127 = arith.constant 0 : index
    %225 = vector.load %arg19[%c0_126, %c0_127] : memref<96x256xbf16, #tpu.memory_space<vmem>>, vector<96x256xbf16>
    %cst_128 = arith.constant dense<0.000000e+00> : vector<32x256xf32>
    %226 = tpu.matmul %224, %225, %cst_128 {dimension_numbers = #tpu.dot_dimension_numbers<[1], [0], [0], [1], [0, 0, 1, 1], [], []>} : vector<32x96xbf16>, vector<96x256xbf16>, vector<32x256xf32> -> vector<32x256xf32>
    %227 = vector.extract_strided_slice %184 {offsets = [0, 0, 0], sizes = [1, 32, 1], strides = [1, 1, 1]} : vector<4x32x1xf32> to vector<1x32x1xf32>
    %228 = vector.shape_cast %227 : vector<1x32x1xf32> to vector<32x1xf32>
    %229 = vector.broadcast %228 : vector<32x1xf32> to vector<32x256xf32>
    %230 = arith.addf %226, %229 : vector<32x256xf32>
    %cst_129 = arith.constant 0.000000e+00 : f32
    %231 = vector.broadcast %cst_129 : f32 to vector<32x256xf32>
    %232 = arith.maximumf %230, %231 : vector<32x256xf32>
    %233 = vector.extract_strided_slice %186 {offsets = [0, 0, 0], sizes = [1, 32, 32], strides = [1, 1, 1]} : vector<4x32x32xbf16> to vector<1x32x32xbf16>
    %234 = vector.shape_cast %233 : vector<1x32x32xbf16> to vector<32x32xbf16>
    %235 = arith.truncf %232 : vector<32x256xf32> to vector<32x256xbf16>
    %cst_130 = arith.constant dense<0.000000e+00> : vector<32x256xf32>
    %236 = tpu.matmul %234, %235, %cst_130 {dimension_numbers = #tpu.dot_dimension_numbers<[1], [0], [0], [1], [0, 0, 1, 1], [], []>} : vector<32x32xbf16>, vector<32x256xbf16>, vector<32x256xf32> -> vector<32x256xf32>
    %237 = vector.extract_strided_slice %188 {offsets = [0, 0, 0], sizes = [1, 32, 1], strides = [1, 1, 1]} : vector<4x32x1xf32> to vector<1x32x1xf32>
    %238 = vector.shape_cast %237 : vector<1x32x1xf32> to vector<32x1xf32>
    %239 = vector.broadcast %238 : vector<32x1xf32> to vector<32x256xf32>
    %240 = arith.addf %236, %239 : vector<32x256xf32>
    %241 = arith.addf %206, %240 : vector<32x256xf32>
    %c2_i32_131 = arith.constant 2 : i32
    %242 = vector.broadcast %c2_i32_131 : i32 to vector<32x256xi32>
    %243 = arith.cmpi sge, %16, %242 : vector<32x256xi32>
    %c2_i32_132 = arith.constant 2 : i32
    %244 = tpu.dynamic_rotate %241 by %c2_i32_132 dim 1 : vector<32x256xf32>, i32 -> vector<32x256xf32>
    %cst_133 = arith.constant 0.000000e+00 : f32
    %245 = vector.broadcast %cst_133 : f32 to vector<32x256xf32>
    %246 = arith.select %243, %244, %245 : vector<32x256xi1>, vector<32x256xf32>
    %c126_i32_134 = arith.constant 126 : i32
    %247 = vector.broadcast %c126_i32_134 : i32 to vector<32x256xi32>
    %248 = arith.cmpi slt, %16, %247 : vector<32x256xi32>
    %c254_i32_135 = arith.constant 254 : i32
    %249 = tpu.dynamic_rotate %241 by %c254_i32_135 dim 1 : vector<32x256xf32>, i32 -> vector<32x256xf32>
    %cst_136 = arith.constant 0.000000e+00 : f32
    %250 = vector.broadcast %cst_136 : f32 to vector<32x256xf32>
    %251 = arith.select %248, %249, %250 : vector<32x256xi1>, vector<32x256xf32>
    %252 = arith.truncf %246 : vector<32x256xf32> to vector<32x256xbf16>
    %c0_137 = arith.constant 0 : index
    %c0_138 = arith.constant 0 : index
    %253 = vector.load %arg19[%c0_137, %c0_138] : memref<96x256xbf16, #tpu.memory_space<vmem>>, vector<32x256xbf16>
    tpu.vector_store %arg19[%c0_137, %c0_138], %252 {strides = array<i32>} : memref<96x256xbf16, #tpu.memory_space<vmem>>, vector<32x256xbf16>,
    %254 = arith.truncf %241 : vector<32x256xf32> to vector<32x256xbf16>
    %c32_139 = arith.constant 32 : index
    %c0_140 = arith.constant 0 : index
    %255 = vector.load %arg19[%c32_139, %c0_140] : memref<96x256xbf16, #tpu.memory_space<vmem>>, vector<32x256xbf16>
    tpu.vector_store %arg19[%c32_139, %c0_140], %254 {strides = array<i32>} : memref<96x256xbf16, #tpu.memory_space<vmem>>, vector<32x256xbf16>,
    %256 = arith.truncf %251 : vector<32x256xf32> to vector<32x256xbf16>
    %c64_141 = arith.constant 64 : index
    %c0_142 = arith.constant 0 : index
    %257 = vector.load %arg19[%c64_141, %c0_142] : memref<96x256xbf16, #tpu.memory_space<vmem>>, vector<32x256xbf16>
    tpu.vector_store %arg19[%c64_141, %c0_142], %256 {strides = array<i32>} : memref<96x256xbf16, #tpu.memory_space<vmem>>, vector<32x256xbf16>,
    %258 = vector.extract_strided_slice %182 {offsets = [1, 0, 0], sizes = [1, 32, 96], strides = [1, 1, 1]} : vector<4x32x96xbf16> to vector<1x32x96xbf16>
    %259 = vector.shape_cast %258 : vector<1x32x96xbf16> to vector<32x96xbf16>
    %c0_143 = arith.constant 0 : index
    %c0_144 = arith.constant 0 : index
    %260 = vector.load %arg19[%c0_143, %c0_144] : memref<96x256xbf16, #tpu.memory_space<vmem>>, vector<96x256xbf16>
    %cst_145 = arith.constant dense<0.000000e+00> : vector<32x256xf32>
    %261 = tpu.matmul %259, %260, %cst_145 {dimension_numbers = #tpu.dot_dimension_numbers<[1], [0], [0], [1], [0, 0, 1, 1], [], []>} : vector<32x96xbf16>, vector<96x256xbf16>, vector<32x256xf32> -> vector<32x256xf32>
    %262 = vector.extract_strided_slice %184 {offsets = [1, 0, 0], sizes = [1, 32, 1], strides = [1, 1, 1]} : vector<4x32x1xf32> to vector<1x32x1xf32>
    %263 = vector.shape_cast %262 : vector<1x32x1xf32> to vector<32x1xf32>
    %264 = vector.broadcast %263 : vector<32x1xf32> to vector<32x256xf32>
    %265 = arith.addf %261, %264 : vector<32x256xf32>
    %cst_146 = arith.constant 0.000000e+00 : f32
    %266 = vector.broadcast %cst_146 : f32 to vector<32x256xf32>
    %267 = arith.maximumf %265, %266 : vector<32x256xf32>
    %268 = vector.extract_strided_slice %186 {offsets = [1, 0, 0], sizes = [1, 32, 32], strides = [1, 1, 1]} : vector<4x32x32xbf16> to vector<1x32x32xbf16>
    %269 = vector.shape_cast %268 : vector<1x32x32xbf16> to vector<32x32xbf16>
    %270 = arith.truncf %267 : vector<32x256xf32> to vector<32x256xbf16>
    %cst_147 = arith.constant dense<0.000000e+00> : vector<32x256xf32>
    %271 = tpu.matmul %269, %270, %cst_147 {dimension_numbers = #tpu.dot_dimension_numbers<[1], [0], [0], [1], [0, 0, 1, 1], [], []>} : vector<32x32xbf16>, vector<32x256xbf16>, vector<32x256xf32> -> vector<32x256xf32>
    %272 = vector.extract_strided_slice %188 {offsets = [1, 0, 0], sizes = [1, 32, 1], strides = [1, 1, 1]} : vector<4x32x1xf32> to vector<1x32x1xf32>
    %273 = vector.shape_cast %272 : vector<1x32x1xf32> to vector<32x1xf32>
    %274 = vector.broadcast %273 : vector<32x1xf32> to vector<32x256xf32>
    %275 = arith.addf %271, %274 : vector<32x256xf32>
    %276 = arith.addf %241, %275 : vector<32x256xf32>
    %c4_i32_148 = arith.constant 4 : i32
    %277 = vector.broadcast %c4_i32_148 : i32 to vector<32x256xi32>
    %278 = arith.cmpi sge, %16, %277 : vector<32x256xi32>
    %c4_i32_149 = arith.constant 4 : i32
    %279 = tpu.dynamic_rotate %276 by %c4_i32_149 dim 1 : vector<32x256xf32>, i32 -> vector<32x256xf32>
    %cst_150 = arith.constant 0.000000e+00 : f32
    %280 = vector.broadcast %cst_150 : f32 to vector<32x256xf32>
    %281 = arith.select %278, %279, %280 : vector<32x256xi1>, vector<32x256xf32>
    %c124_i32_151 = arith.constant 124 : i32
    %282 = vector.broadcast %c124_i32_151 : i32 to vector<32x256xi32>
    %283 = arith.cmpi slt, %16, %282 : vector<32x256xi32>
    %c252_i32_152 = arith.constant 252 : i32
    %284 = tpu.dynamic_rotate %276 by %c252_i32_152 dim 1 : vector<32x256xf32>, i32 -> vector<32x256xf32>
    %cst_153 = arith.constant 0.000000e+00 : f32
    %285 = vector.broadcast %cst_153 : f32 to vector<32x256xf32>
    %286 = arith.select %283, %284, %285 : vector<32x256xi1>, vector<32x256xf32>
    %287 = arith.truncf %281 : vector<32x256xf32> to vector<32x256xbf16>
    %c0_154 = arith.constant 0 : index
    %c0_155 = arith.constant 0 : index
    %288 = vector.load %arg19[%c0_154, %c0_155] : memref<96x256xbf16, #tpu.memory_space<vmem>>, vector<32x256xbf16>
    tpu.vector_store %arg19[%c0_154, %c0_155], %287 {strides = array<i32>} : memref<96x256xbf16, #tpu.memory_space<vmem>>, vector<32x256xbf16>,
    %289 = arith.truncf %276 : vector<32x256xf32> to vector<32x256xbf16>
    %c32_156 = arith.constant 32 : index
    %c0_157 = arith.constant 0 : index
    %290 = vector.load %arg19[%c32_156, %c0_157] : memref<96x256xbf16, #tpu.memory_space<vmem>>, vector<32x256xbf16>
    tpu.vector_store %arg19[%c32_156, %c0_157], %289 {strides = array<i32>} : memref<96x256xbf16, #tpu.memory_space<vmem>>, vector<32x256xbf16>,
    %291 = arith.truncf %286 : vector<32x256xf32> to vector<32x256xbf16>
    %c64_158 = arith.constant 64 : index
    %c0_159 = arith.constant 0 : index
    %292 = vector.load %arg19[%c64_158, %c0_159] : memref<96x256xbf16, #tpu.memory_space<vmem>>, vector<32x256xbf16>
    tpu.vector_store %arg19[%c64_158, %c0_159], %291 {strides = array<i32>} : memref<96x256xbf16, #tpu.memory_space<vmem>>, vector<32x256xbf16>,
    %293 = vector.extract_strided_slice %182 {offsets = [2, 0, 0], sizes = [1, 32, 96], strides = [1, 1, 1]} : vector<4x32x96xbf16> to vector<1x32x96xbf16>
    %294 = vector.shape_cast %293 : vector<1x32x96xbf16> to vector<32x96xbf16>
    %c0_160 = arith.constant 0 : index
    %c0_161 = arith.constant 0 : index
    %295 = vector.load %arg19[%c0_160, %c0_161] : memref<96x256xbf16, #tpu.memory_space<vmem>>, vector<96x256xbf16>
    %cst_162 = arith.constant dense<0.000000e+00> : vector<32x256xf32>
    %296 = tpu.matmul %294, %295, %cst_162 {dimension_numbers = #tpu.dot_dimension_numbers<[1], [0], [0], [1], [0, 0, 1, 1], [], []>} : vector<32x96xbf16>, vector<96x256xbf16>, vector<32x256xf32> -> vector<32x256xf32>
    %297 = vector.extract_strided_slice %184 {offsets = [2, 0, 0], sizes = [1, 32, 1], strides = [1, 1, 1]} : vector<4x32x1xf32> to vector<1x32x1xf32>
    %298 = vector.shape_cast %297 : vector<1x32x1xf32> to vector<32x1xf32>
    %299 = vector.broadcast %298 : vector<32x1xf32> to vector<32x256xf32>
    %300 = arith.addf %296, %299 : vector<32x256xf32>
    %cst_163 = arith.constant 0.000000e+00 : f32
    %301 = vector.broadcast %cst_163 : f32 to vector<32x256xf32>
    %302 = arith.maximumf %300, %301 : vector<32x256xf32>
    %303 = vector.extract_strided_slice %186 {offsets = [2, 0, 0], sizes = [1, 32, 32], strides = [1, 1, 1]} : vector<4x32x32xbf16> to vector<1x32x32xbf16>
    %304 = vector.shape_cast %303 : vector<1x32x32xbf16> to vector<32x32xbf16>
    %305 = arith.truncf %302 : vector<32x256xf32> to vector<32x256xbf16>
    %cst_164 = arith.constant dense<0.000000e+00> : vector<32x256xf32>
    %306 = tpu.matmul %304, %305, %cst_164 {dimension_numbers = #tpu.dot_dimension_numbers<[1], [0], [0], [1], [0, 0, 1, 1], [], []>} : vector<32x32xbf16>, vector<32x256xbf16>, vector<32x256xf32> -> vector<32x256xf32>
    %307 = vector.extract_strided_slice %188 {offsets = [2, 0, 0], sizes = [1, 32, 1], strides = [1, 1, 1]} : vector<4x32x1xf32> to vector<1x32x1xf32>
    %308 = vector.shape_cast %307 : vector<1x32x1xf32> to vector<32x1xf32>
    %309 = vector.broadcast %308 : vector<32x1xf32> to vector<32x256xf32>
    %310 = arith.addf %306, %309 : vector<32x256xf32>
    %311 = arith.addf %276, %310 : vector<32x256xf32>
    %c8_i32_165 = arith.constant 8 : i32
    %312 = vector.broadcast %c8_i32_165 : i32 to vector<32x256xi32>
    %313 = arith.cmpi sge, %16, %312 : vector<32x256xi32>
    %c8_i32_166 = arith.constant 8 : i32
    %314 = tpu.dynamic_rotate %311 by %c8_i32_166 dim 1 : vector<32x256xf32>, i32 -> vector<32x256xf32>
    %cst_167 = arith.constant 0.000000e+00 : f32
    %315 = vector.broadcast %cst_167 : f32 to vector<32x256xf32>
    %316 = arith.select %313, %314, %315 : vector<32x256xi1>, vector<32x256xf32>
    %c120_i32_168 = arith.constant 120 : i32
    %317 = vector.broadcast %c120_i32_168 : i32 to vector<32x256xi32>
    %318 = arith.cmpi slt, %16, %317 : vector<32x256xi32>
    %c248_i32_169 = arith.constant 248 : i32
    %319 = tpu.dynamic_rotate %311 by %c248_i32_169 dim 1 : vector<32x256xf32>, i32 -> vector<32x256xf32>
    %cst_170 = arith.constant 0.000000e+00 : f32
    %320 = vector.broadcast %cst_170 : f32 to vector<32x256xf32>
    %321 = arith.select %318, %319, %320 : vector<32x256xi1>, vector<32x256xf32>
    %322 = arith.truncf %316 : vector<32x256xf32> to vector<32x256xbf16>
    %c0_171 = arith.constant 0 : index
    %c0_172 = arith.constant 0 : index
    %323 = vector.load %arg19[%c0_171, %c0_172] : memref<96x256xbf16, #tpu.memory_space<vmem>>, vector<32x256xbf16>
    tpu.vector_store %arg19[%c0_171, %c0_172], %322 {strides = array<i32>} : memref<96x256xbf16, #tpu.memory_space<vmem>>, vector<32x256xbf16>,
    %324 = arith.truncf %311 : vector<32x256xf32> to vector<32x256xbf16>
    %c32_173 = arith.constant 32 : index
    %c0_174 = arith.constant 0 : index
    %325 = vector.load %arg19[%c32_173, %c0_174] : memref<96x256xbf16, #tpu.memory_space<vmem>>, vector<32x256xbf16>
    tpu.vector_store %arg19[%c32_173, %c0_174], %324 {strides = array<i32>} : memref<96x256xbf16, #tpu.memory_space<vmem>>, vector<32x256xbf16>,
    %326 = arith.truncf %321 : vector<32x256xf32> to vector<32x256xbf16>
    %c64_175 = arith.constant 64 : index
    %c0_176 = arith.constant 0 : index
    %327 = vector.load %arg19[%c64_175, %c0_176] : memref<96x256xbf16, #tpu.memory_space<vmem>>, vector<32x256xbf16>
    tpu.vector_store %arg19[%c64_175, %c0_176], %326 {strides = array<i32>} : memref<96x256xbf16, #tpu.memory_space<vmem>>, vector<32x256xbf16>,
    %328 = vector.extract_strided_slice %182 {offsets = [3, 0, 0], sizes = [1, 32, 96], strides = [1, 1, 1]} : vector<4x32x96xbf16> to vector<1x32x96xbf16>
    %329 = vector.shape_cast %328 : vector<1x32x96xbf16> to vector<32x96xbf16>
    %c0_177 = arith.constant 0 : index
    %c0_178 = arith.constant 0 : index
    %330 = vector.load %arg19[%c0_177, %c0_178] : memref<96x256xbf16, #tpu.memory_space<vmem>>, vector<96x256xbf16>
    %cst_179 = arith.constant dense<0.000000e+00> : vector<32x256xf32>
    %331 = tpu.matmul %329, %330, %cst_179 {dimension_numbers = #tpu.dot_dimension_numbers<[1], [0], [0], [1], [0, 0, 1, 1], [], []>} : vector<32x96xbf16>, vector<96x256xbf16>, vector<32x256xf32> -> vector<32x256xf32>
    %332 = vector.extract_strided_slice %184 {offsets = [3, 0, 0], sizes = [1, 32, 1], strides = [1, 1, 1]} : vector<4x32x1xf32> to vector<1x32x1xf32>
    %333 = vector.shape_cast %332 : vector<1x32x1xf32> to vector<32x1xf32>
    %334 = vector.broadcast %333 : vector<32x1xf32> to vector<32x256xf32>
    %335 = arith.addf %331, %334 : vector<32x256xf32>
    %cst_180 = arith.constant 0.000000e+00 : f32
    %336 = vector.broadcast %cst_180 : f32 to vector<32x256xf32>
    %337 = arith.maximumf %335, %336 : vector<32x256xf32>
    %338 = vector.extract_strided_slice %186 {offsets = [3, 0, 0], sizes = [1, 32, 32], strides = [1, 1, 1]} : vector<4x32x32xbf16> to vector<1x32x32xbf16>
    %339 = vector.shape_cast %338 : vector<1x32x32xbf16> to vector<32x32xbf16>
    %340 = arith.truncf %337 : vector<32x256xf32> to vector<32x256xbf16>
    %cst_181 = arith.constant dense<0.000000e+00> : vector<32x256xf32>
    %341 = tpu.matmul %339, %340, %cst_181 {dimension_numbers = #tpu.dot_dimension_numbers<[1], [0], [0], [1], [0, 0, 1, 1], [], []>} : vector<32x32xbf16>, vector<32x256xbf16>, vector<32x256xf32> -> vector<32x256xf32>
    %342 = vector.extract_strided_slice %188 {offsets = [3, 0, 0], sizes = [1, 32, 1], strides = [1, 1, 1]} : vector<4x32x1xf32> to vector<1x32x1xf32>
    %343 = vector.shape_cast %342 : vector<1x32x1xf32> to vector<32x1xf32>
    %344 = vector.broadcast %343 : vector<32x1xf32> to vector<32x256xf32>
    %345 = arith.addf %341, %344 : vector<32x256xf32>
    %346 = arith.addf %311, %345 : vector<32x256xf32>
    %347 = arith.truncf %346 : vector<32x256xf32> to vector<32x256xbf16>
    %cst_182 = arith.constant dense<0.000000e+00> : vector<8x256xf32>
    %348 = tpu.matmul %190, %347, %cst_182 {dimension_numbers = #tpu.dot_dimension_numbers<[1], [0], [0], [1], [0, 0, 1, 1], [], []>} : vector<8x32xbf16>, vector<32x256xbf16>, vector<8x256xf32> -> vector<8x256xf32>
    %349 = vector.broadcast %192 : vector<8x1xf32> to vector<8x256xf32>
    %350 = arith.addf %348, %349 : vector<8x256xf32>
    %c1 = arith.constant 1 : index
    %c0_183 = arith.constant 0 : index
    %c0_184 = arith.constant 0 : index
    %351 = vector.load %arg18[%c1, %c0_183, %c0_184] : memref<2x8x256xf32, #tpu.memory_space<vmem>>, vector<1x8x256xf32>
    %352 = vector.shape_cast %351 : vector<1x8x256xf32> to vector<8x256xf32>
    %353 = vector.shape_cast %350 : vector<8x256xf32> to vector<1x8x256xf32>
    tpu.vector_store %arg18[%c1, %c0_183, %c0_184], %353 {strides = array<i32>} : memref<2x8x256xf32, #tpu.memory_space<vmem>>, vector<1x8x256xf32>,
    return
  }
  func.func @transform_0(%arg0: i32) -> (i32, i32) {
    %c0_i32 = arith.constant 0 : i32
    %c0_i32_0 = arith.constant 0 : i32
    return %c0_i32, %arg0 : i32, i32
  }
  func.func @transform_1(%arg0: i32) -> (i32, i32) {
    %c0_i32 = arith.constant 0 : i32
    %c0_i32_0 = arith.constant 0 : i32
    %c0_i32_1 = arith.constant 0 : i32
    return %c0_i32, %c0_i32_0 : i32, i32
  }
  func.func @transform_2(%arg0: i32) -> (i32, i32) {
    %c0_i32 = arith.constant 0 : i32
    %c0_i32_0 = arith.constant 0 : i32
    %c0_i32_1 = arith.constant 0 : i32
    return %c0_i32, %c0_i32_0 : i32, i32
  }
  func.func @transform_3(%arg0: i32) -> (i32, i32, i32) {
    %c0_i32 = arith.constant 0 : i32
    %c0_i32_0 = arith.constant 0 : i32
    %c0_i32_1 = arith.constant 0 : i32
    %c0_i32_2 = arith.constant 0 : i32
    return %c0_i32, %c0_i32_0, %c0_i32_1 : i32, i32, i32
  }
  func.func @transform_4(%arg0: i32) -> (i32, i32, i32) {
    %c0_i32 = arith.constant 0 : i32
    %c0_i32_0 = arith.constant 0 : i32
    %c0_i32_1 = arith.constant 0 : i32
    %c0_i32_2 = arith.constant 0 : i32
    return %c0_i32, %c0_i32_0, %c0_i32_1 : i32, i32, i32
  }
  func.func @transform_5(%arg0: i32) -> (i32, i32, i32) {
    %c0_i32 = arith.constant 0 : i32
    %c0_i32_0 = arith.constant 0 : i32
    %c0_i32_1 = arith.constant 0 : i32
    %c0_i32_2 = arith.constant 0 : i32
    return %c0_i32, %c0_i32_0, %c0_i32_1 : i32, i32, i32
  }
  func.func @transform_6(%arg0: i32) -> (i32, i32, i32) {
    %c0_i32 = arith.constant 0 : i32
    %c0_i32_0 = arith.constant 0 : i32
    %c0_i32_1 = arith.constant 0 : i32
    %c0_i32_2 = arith.constant 0 : i32
    return %c0_i32, %c0_i32_0, %c0_i32_1 : i32, i32, i32
  }
  func.func @transform_7(%arg0: i32) -> (i32, i32) {
    %c0_i32 = arith.constant 0 : i32
    %c0_i32_0 = arith.constant 0 : i32
    %c0_i32_1 = arith.constant 0 : i32
    return %c0_i32, %c0_i32_0 : i32, i32
  }
  func.func @transform_8(%arg0: i32) -> (i32, i32) {
    %c0_i32 = arith.constant 0 : i32
    %c0_i32_0 = arith.constant 0 : i32
    %c0_i32_1 = arith.constant 0 : i32
    return %c0_i32, %c0_i32_0 : i32, i32
  }
  func.func @transform_9(%arg0: i32) -> (i32, i32, i32) {
    %c0_i32 = arith.constant 0 : i32
    %c0_i32_0 = arith.constant 0 : i32
    %c0_i32_1 = arith.constant 0 : i32
    %c0_i32_2 = arith.constant 0 : i32
    return %c0_i32, %c0_i32_0, %c0_i32_1 : i32, i32, i32
  }
  func.func @transform_10(%arg0: i32) -> (i32, i32, i32) {
    %c0_i32 = arith.constant 0 : i32
    %c0_i32_0 = arith.constant 0 : i32
    %c0_i32_1 = arith.constant 0 : i32
    %c0_i32_2 = arith.constant 0 : i32
    return %c0_i32, %c0_i32_0, %c0_i32_1 : i32, i32, i32
  }
  func.func @transform_11(%arg0: i32) -> (i32, i32, i32, i32) {
    %c0_i32 = arith.constant 0 : i32
    %c0_i32_0 = arith.constant 0 : i32
    %c0_i32_1 = arith.constant 0 : i32
    %c0_i32_2 = arith.constant 0 : i32
    %c0_i32_3 = arith.constant 0 : i32
    return %c0_i32, %c0_i32_0, %c0_i32_1, %c0_i32_2 : i32, i32, i32, i32
  }
  func.func @transform_12(%arg0: i32) -> (i32, i32, i32, i32) {
    %c0_i32 = arith.constant 0 : i32
    %c0_i32_0 = arith.constant 0 : i32
    %c0_i32_1 = arith.constant 0 : i32
    %c0_i32_2 = arith.constant 0 : i32
    %c0_i32_3 = arith.constant 0 : i32
    return %c0_i32, %c0_i32_0, %c0_i32_1, %c0_i32_2 : i32, i32, i32, i32
  }
  func.func @transform_13(%arg0: i32) -> (i32, i32, i32, i32) {
    %c0_i32 = arith.constant 0 : i32
    %c0_i32_0 = arith.constant 0 : i32
    %c0_i32_1 = arith.constant 0 : i32
    %c0_i32_2 = arith.constant 0 : i32
    %c0_i32_3 = arith.constant 0 : i32
    return %c0_i32, %c0_i32_0, %c0_i32_1, %c0_i32_2 : i32, i32, i32, i32
  }
  func.func @transform_14(%arg0: i32) -> (i32, i32, i32, i32) {
    %c0_i32 = arith.constant 0 : i32
    %c0_i32_0 = arith.constant 0 : i32
    %c0_i32_1 = arith.constant 0 : i32
    %c0_i32_2 = arith.constant 0 : i32
    %c0_i32_3 = arith.constant 0 : i32
    return %c0_i32, %c0_i32_0, %c0_i32_1, %c0_i32_2 : i32, i32, i32, i32
  }
  func.func @transform_15(%arg0: i32) -> (i32, i32, i32) {
    %c0_i32 = arith.constant 0 : i32
    %c0_i32_0 = arith.constant 0 : i32
    %c0_i32_1 = arith.constant 0 : i32
    %c0_i32_2 = arith.constant 0 : i32
    return %c0_i32, %c0_i32_0, %c0_i32_1 : i32, i32, i32
  }
  func.func @transform_16(%arg0: i32) -> (i32, i32, i32) {
    %c0_i32 = arith.constant 0 : i32
    %c0_i32_0 = arith.constant 0 : i32
    %c0_i32_1 = arith.constant 0 : i32
    %c0_i32_2 = arith.constant 0 : i32
    return %c0_i32, %c0_i32_0, %c0_i32_1 : i32, i32, i32
  }
  func.func @transform_17(%arg0: i32) -> (i32, i32, i32) {
    %c0_i32 = arith.constant 0 : i32
    %c0_i32_0 = arith.constant 0 : i32
    %c0_i32_1 = arith.constant 0 : i32
    return %c0_i32, %c0_i32_0, %arg0 : i32, i32, i32
  }
}

</mosaic_0001>

<llo_original>
// kernel: _lambda_.1
$region0: #{_lambda_.1}
  #allocation0 [shape = 'u32[]', space=smem, size = 0x4, offset = 0x4, fixed_abs, tag = 'smem constant byte address 0x4 - core index']
  #allocation1 [shape = 'u32[144,128]{1,0:T(1,128)}', space=vmem, size = 0x12000, scoped, tag = 'internal scratch']
  #allocation2 [shape = 'bf16[96,256]{1,0:T(16,128)(2,1)}', space=vmem, size = 0xc000, scoped, tag = 'scratch operand']
  %s0 = inlined_call_operand.vmem [shape: f32[16,256], index: 0, kind: input, shape index: {}]
  %s1 = inlined_call_operand.hbm [shape: bf16[32,16], index: 1, kind: input, shape index: {}]
  %s2 = inlined_call_operand.hbm [shape: f32[32,1], index: 2, kind: input, shape index: {}]
  %s3 = inlined_call_operand.hbm [shape: bf16[4,32,96], index: 3, kind: input, shape index: {}]
  %s4 = inlined_call_operand.hbm [shape: f32[4,32,1], index: 4, kind: input, shape index: {}]
  %s5 = inlined_call_operand.hbm [shape: bf16[4,32,32], index: 5, kind: input, shape index: {}]
  %s6 = inlined_call_operand.hbm [shape: f32[4,32,1], index: 6, kind: input, shape index: {}]
  %s7 = inlined_call_operand.hbm [shape: bf16[8,32], index: 7, kind: input, shape index: {}]
  %s8 = inlined_call_operand.hbm [shape: f32[8,1], index: 8, kind: input, shape index: {}]
  %s9 = inlined_call_operand.hbm [shape: bf16[1,32,8], index: 9, kind: input, shape index: {}]
  %s10 = inlined_call_operand.hbm [shape: f32[1,32,1], index: 10, kind: input, shape index: {}]
  %s11 = inlined_call_operand.vmem [shape: bf16[1,4,32,96], index: 11, kind: input, shape index: {}]
  %s12 = inlined_call_operand.hbm [shape: f32[1,4,32,1], index: 12, kind: input, shape index: {}]
  %s13 = inlined_call_operand.vmem [shape: bf16[1,4,32,32], index: 13, kind: input, shape index: {}]
  %s14 = inlined_call_operand.hbm [shape: f32[1,4,32,1], index: 14, kind: input, shape index: {}]
  %s15 = inlined_call_operand.hbm [shape: bf16[1,8,32], index: 15, kind: input, shape index: {}]
  %s16 = inlined_call_operand.hbm [shape: f32[1,8,1], index: 16, kind: input, shape index: {}]
  %s17 = inlined_call_operand.hbm [shape: f32[2,8,256], index: 17, kind: output, shape index: {}]
  %s18 = sld [smem:[#allocation0]]
  $region134: #{_lambda_.1} parent=0
    _
  %s20 = ssub.s32 1, %s18
  %s21 = scalar_select 0, %s20, %s18
  $region1: #{_lambda_.1} parent=0
    #allocation3 [shape = 'u8[8192]{0}', space=vmem, size = 0x2000, scoped, tag = 'input window, operand 1, single buffered']
    #allocation4 [shape = 's32[1]{0}', space=sflag, size = 0x4, scoped, tag = 'scoped memory for _lambda_.1']
    #allocation5 [shape = 's32[1]{0}', space=sflag, size = 0x4, scoped, tag = 'scoped memory for _lambda_.1']
    #allocation6 [shape = 'u8[16384]{0}', space=vmem, size = 0x4000, scoped, tag = 'input window, operand 2, single buffered']
    #allocation7 [shape = 's32[1]{0}', space=sflag, size = 0x4, scoped, tag = 'scoped memory for _lambda_.1']
    #allocation8 [shape = 'u8[32768]{0}', space=vmem, size = 0x8000, scoped, tag = 'input window, operand 3, single buffered']
    #allocation9 [shape = 'u8[65536]{0}', space=vmem, size = 0x10000, scoped, tag = 'input window, operand 4, single buffered']
    #allocation10 [shape = 's32[1]{0}', space=sflag, size = 0x4, scoped, tag = 'scoped memory for _lambda_.1']
    #allocation11 [shape = 'u8[32768]{0}', space=vmem, size = 0x8000, scoped, tag = 'input window, operand 5, single buffered']
    #allocation12 [shape = 'u8[65536]{0}', space=vmem, size = 0x10000, scoped, tag = 'input window, operand 6, single buffered']
    #allocation13 [shape = 's32[1]{0}', space=sflag, size = 0x4, scoped, tag = 'scoped memory for _lambda_.1']
    #allocation14 [shape = 'u8[2048]{0}', space=vmem, size = 0x800, scoped, tag = 'input window, operand 7, single buffered']
    #allocation15 [shape = 'u8[4096]{0}', space=vmem, size = 0x1000, scoped, tag = 'input window, operand 8, single buffered']
    #allocation16 [shape = 's32[1]{0}', space=sflag, size = 0x4, scoped, tag = 'scoped memory for _lambda_.1']
    #allocation17 [shape = 'u8[8192]{0}', space=vmem, size = 0x2000, scoped, tag = 'input window, operand 9, single buffered']
    #allocation18 [shape = 'u8[16384]{0}', space=vmem, size = 0x4000, scoped, tag = 'input window, operand 10, single buffered']
    #allocation19 [shape = 's32[1]{0}', space=sflag, size = 0x4, scoped, tag = 'scoped memory for _lambda_.1']
    #allocation20 [shape = 'u8[65536]{0}', space=vmem, size = 0x10000, scoped, tag = 'input window, operand 12, single buffered']
    #allocation21 [shape = 'u8[65536]{0}', space=vmem, size = 0x10000, scoped, tag = 'input window, operand 14, single buffered']
    #allocation22 [shape = 's32[1]{0}', space=sflag, size = 0x4, scoped, tag = 'scoped memory for _lambda_.1']
    #allocation23 [shape = 'u8[2048]{0}', space=vmem, size = 0x800, scoped, tag = 'input window, operand 15, single buffered']
    #allocation24 [shape = 'u8[4096]{0}', space=vmem, size = 0x1000, scoped, tag = 'input window, operand 16, single buffered']
    #allocation25 [shape = 's32[1]{0}', space=sflag, size = 0x4, scoped, tag = 'scoped memory for _lambda_.1']
    #allocation26 [shape = 'u8[16384]{0}', space=vmem, size = 0x4000, scoped, tag = 'output window, operand 0, single buffered']
    %22 = vsyncpa [#allocation4], 0
    %23 = vsyncpa [#allocation7], 0
    %24 = vsyncpa [#allocation10], 0
    %25 = vsyncpa [#allocation13], 0
    %26 = vsyncpa [#allocation16], 0
    %27 = vsyncpa [#allocation19], 0
    %28 = vsyncpa [#allocation22], 0
    %29 = vsyncpa [#allocation25], 0
    %30 = vsyncpa [#allocation5], 0
    // Predicated region
    $region2: #{_lambda_.1} parent=1 // pred_check
      _
    $region3: #{_lambda_.1} parent=1 // pred_check_branch
      %32 = sbr.rel (0) target = $region5
    $region4: #{_lambda_.1} parent=1 // pred_region
      _
    $region5: #{_lambda_.1} parent=1 // pred_fallthru
      _
    // Predicated region
    $region6: #{_lambda_.1} parent=1 // pred_check
      _
    $region7: #{_lambda_.1} parent=1 // pred_check_branch
      %34 = sbr.rel (0) target = $region9
    $region8: #{_lambda_.1} parent=1 // pred_region
      %s36 = ssub.s32 256, 256
      %37 = vsyncadd [#allocation4], %s36
      %s38 = sshll.u32 [#allocation3], 4
      %s39 = int_to_ptr.vmem [resolvable:$true] %s38
      %44 = dma.hbm_to_vmem [thread:$0]  %s1, 256, %s39, [#allocation4], 64, 64, 4
    $region9: #{_lambda_.1} parent=1 // pred_fallthru
      _
    // Predicated region
    $region10: #{_lambda_.1} parent=1 // pred_check
      _
    $region11: #{_lambda_.1} parent=1 // pred_check_branch
      %46 = sbr.rel (0) target = $region13
    $region12: #{_lambda_.1} parent=1 // pred_region
      %s48 = ssub.s32 512, 512
      %49 = vsyncadd [#allocation7], %s48
      %s50 = sshll.u32 [#allocation6], 4
      %s51 = int_to_ptr.vmem [resolvable:$true] %s50
      %56 = dma.hbm_to_vmem [thread:$0]  %s2, 512, %s51, [#allocation7], 128, 128, 8
    $region13: #{_lambda_.1} parent=1 // pred_fallthru
      _
    // Predicated region
    $region14: #{_lambda_.1} parent=1 // pred_check
      _
    $region15: #{_lambda_.1} parent=1 // pred_check_branch
      %58 = sbr.rel (0) target = $region17
    $region16: #{_lambda_.1} parent=1 // pred_region
      %s60 = ssub.s32 1024, 1024
      %61 = vsyncadd [#allocation7], %s60
      %s62 = sshll.u32 [#allocation8], 4
      %s63 = int_to_ptr.vmem [resolvable:$true] %s62
      %68 = dma.hbm_to_vmem [thread:$0]  %s3, 1024, %s63, [#allocation7], 64, 64, 4
    $region17: #{_lambda_.1} parent=1 // pred_fallthru
      _
    // Predicated region
    $region18: #{_lambda_.1} parent=1 // pred_check
      _
    $region19: #{_lambda_.1} parent=1 // pred_check_branch
      %70 = sbr.rel (0) target = $region21
    $region20: #{_lambda_.1} parent=1 // pred_region
      %s72 = ssub.s32 2048, 2048
      %73 = vsyncadd [#allocation10], %s72
      %s74 = sshll.u32 [#allocation9], 4
      %s75 = int_to_ptr.vmem [resolvable:$true] %s74
      %80 = dma.hbm_to_vmem [thread:$0]  %s4, 2048, %s75, [#allocation10], 128, 128, 8
    $region21: #{_lambda_.1} parent=1 // pred_fallthru
      _
    // Predicated region
    $region22: #{_lambda_.1} parent=1 // pred_check
      _
    $region23: #{_lambda_.1} parent=1 // pred_check_branch
      %82 = sbr.rel (0) target = $region25
    $region24: #{_lambda_.1} parent=1 // pred_region
      %s84 = ssub.s32 1024, 1024
      %85 = vsyncadd [#allocation10], %s84
      %s86 = sshll.u32 [#allocation11], 4
      %s87 = int_to_ptr.vmem [resolvable:$true] %s86
      %92 = dma.hbm_to_vmem [thread:$0]  %s5, 1024, %s87, [#allocation10], 64, 64, 4
    $region25: #{_lambda_.1} parent=1 // pred_fallthru
      _
    // Predicated region
    $region26: #{_lambda_.1} parent=1 // pred_check
      _
    $region27: #{_lambda_.1} parent=1 // pred_check_branch
      %94 = sbr.rel (0) target = $region29
    $region28: #{_lambda_.1} parent=1 // pred_region
      %s96 = ssub.s32 2048, 2048
      %97 = vsyncadd [#allocation13], %s96
      %s98 = sshll.u32 [#allocation12], 4
      %s99 = int_to_ptr.vmem [resolvable:$true] %s98
      %104 = dma.hbm_to_vmem [thread:$0]  %s6, 2048, %s99, [#allocation13], 128, 128, 8
    $region29: #{_lambda_.1} parent=1 // pred_fallthru
      _
    // Predicated region
    $region30: #{_lambda_.1} parent=1 // pred_check
      _
    $region31: #{_lambda_.1} parent=1 // pred_check_branch
      %106 = sbr.rel (0) target = $region33
    $region32: #{_lambda_.1} parent=1 // pred_region
      %s108 = ssub.s32 64, 64
      %109 = vsyncadd [#allocation13], %s108
      %s111 = sshll.u32 [#allocation14], 4
      %s112 = int_to_ptr.vmem [resolvable:$true] %s111
      %114 = dma.hbm_to_vmem [thread:$0]  %s7, 64, %s112, [#allocation13]
    $region33: #{_lambda_.1} parent=1 // pred_fallthru
      _
    // Predicated region
    $region34: #{_lambda_.1} parent=1 // pred_check
      _
    $region35: #{_lambda_.1} parent=1 // pred_check_branch
      %116 = sbr.rel (0) target = $region37
    $region36: #{_lambda_.1} parent=1 // pred_region
      %s118 = ssub.s32 128, 128
      %119 = vsyncadd [#allocation16], %s118
      %s121 = sshll.u32 [#allocation15], 4
      %s122 = int_to_ptr.vmem [resolvable:$true] %s121
      %124 = dma.hbm_to_vmem [thread:$0]  %s8, 128, %s122, [#allocation16]
    $region37: #{_lambda_.1} parent=1 // pred_fallthru
      _
    // Predicated region
    $region38: #{_lambda_.1} parent=1 // pred_check
      _
    $region39: #{_lambda_.1} parent=1 // pred_check_branch
      %126 = sbr.rel (0) target = $region41
    $region40: #{_lambda_.1} parent=1 // pred_region
      %s128 = ssub.s32 256, 256
      %129 = vsyncadd [#allocation16], %s128
      %s130 = sshll.u32 [#allocation17], 4
      %s131 = int_to_ptr.vmem [resolvable:$true] %s130
      %136 = dma.hbm_to_vmem [thread:$0]  %s9, 256, %s131, [#allocation16], 64, 64, 4
    $region41: #{_lambda_.1} parent=1 // pred_fallthru
      _
    // Predicated region
    $region42: #{_lambda_.1} parent=1 // pred_check
      _
    $region43: #{_lambda_.1} parent=1 // pred_check_branch
      %138 = sbr.rel (0) target = $region45
    $region44: #{_lambda_.1} parent=1 // pred_region
      %s140 = ssub.s32 512, 512
      %141 = vsyncadd [#allocation19], %s140
      %s142 = sshll.u32 [#allocation18], 4
      %s143 = int_to_ptr.vmem [resolvable:$true] %s142
      %148 = dma.hbm_to_vmem [thread:$0]  %s10, 512, %s143, [#allocation19], 128, 128, 8
    $region45: #{_lambda_.1} parent=1 // pred_fallthru
      _
    // Predicated region
    $region46: #{_lambda_.1} parent=1 // pred_check
      _
    $region47: #{_lambda_.1} parent=1 // pred_check_branch
      %150 = sbr.rel (0) target = $region49
    $region48: #{_lambda_.1} parent=1 // pred_region
      _
    $region49: #{_lambda_.1} parent=1 // pred_fallthru
      _
    // Predicated region
    $region50: #{_lambda_.1} parent=1 // pred_check
      _
    $region51: #{_lambda_.1} parent=1 // pred_check_branch
      %152 = sbr.rel (0) target = $region53
    $region52: #{_lambda_.1} parent=1 // pred_region
      %s154 = ssub.s32 2048, 2048
      %155 = vsyncadd [#allocation19], %s154
      %s156 = sshll.u32 [#allocation20], 4
      %s157 = int_to_ptr.vmem [resolvable:$true] %s156
      %162 = dma.hbm_to_vmem [thread:$0]  %s12, 2048, %s157, [#allocation19], 128, 128, 8
    $region53: #{_lambda_.1} parent=1 // pred_fallthru
      _
    // Predicated region
    $region54: #{_lambda_.1} parent=1 // pred_check
      _
    $region55: #{_lambda_.1} parent=1 // pred_check_branch
      %164 = sbr.rel (0) target = $region57
    $region56: #{_lambda_.1} parent=1 // pred_region
      _
    $region57: #{_lambda_.1} parent=1 // pred_fallthru
      _
    // Predicated region
    $region58: #{_lambda_.1} parent=1 // pred_check
      _
    $region59: #{_lambda_.1} parent=1 // pred_check_branch
      %166 = sbr.rel (0) target = $region61
    $region60: #{_lambda_.1} parent=1 // pred_region
      %s168 = ssub.s32 2048, 2048
      %169 = vsyncadd [#allocation22], %s168
      %s170 = sshll.u32 [#allocation21], 4
      %s171 = int_to_ptr.vmem [resolvable:$true] %s170
      %176 = dma.hbm_to_vmem [thread:$0]  %s14, 2048, %s171, [#allocation22], 128, 128, 8
    $region61: #{_lambda_.1} parent=1 // pred_fallthru
      _
    // Predicated region
    $region62: #{_lambda_.1} parent=1 // pred_check
      _
    $region63: #{_lambda_.1} parent=1 // pred_check_branch
      %178 = sbr.rel (0) target = $region65
    $region64: #{_lambda_.1} parent=1 // pred_region
      %s180 = ssub.s32 64, 64
      %181 = vsyncadd [#allocation22], %s180
      %s183 = sshll.u32 [#allocation23], 4
      %s184 = int_to_ptr.vmem [resolvable:$true] %s183
      %186 = dma.hbm_to_vmem [thread:$0]  %s15, 64, %s184, [#allocation22]
    $region65: #{_lambda_.1} parent=1 // pred_fallthru
      _
    // Predicated region
    $region66: #{_lambda_.1} parent=1 // pred_check
      _
    $region67: #{_lambda_.1} parent=1 // pred_check_branch
      %188 = sbr.rel (0) target = $region69
    $region68: #{_lambda_.1} parent=1 // pred_region
      %s190 = ssub.s32 128, 128
      %191 = vsyncadd [#allocation25], %s190
      %s193 = sshll.u32 [#allocation24], 4
      %s194 = int_to_ptr.vmem [resolvable:$true] %s193
      %196 = dma.hbm_to_vmem [thread:$0]  %s16, 128, %s194, [#allocation25]
    $region69: #{_lambda_.1} parent=1 // pred_fallthru
      _
    // Predicated region
    $region70: #{_lambda_.1} parent=1 // pred_check
      _
    $region71: #{_lambda_.1} parent=1 // pred_check_branch
      %198 = sbr.rel (0) target = $region73
    $region72: #{_lambda_.1} parent=1 // pred_region
      %199 = dma.done [#allocation4], 256
    $region73: #{_lambda_.1} parent=1 // pred_fallthru
      _
    // Predicated region
    $region74: #{_lambda_.1} parent=1 // pred_check
      _
    $region75: #{_lambda_.1} parent=1 // pred_check_branch
      %201 = sbr.rel (0) target = $region77
    $region76: #{_lambda_.1} parent=1 // pred_region
      %202 = dma.done [#allocation7], 512
    $region77: #{_lambda_.1} parent=1 // pred_fallthru
      _
    // Predicated region
    $region78: #{_lambda_.1} parent=1 // pred_check
      _
    $region79: #{_lambda_.1} parent=1 // pred_check_branch
      %204 = sbr.rel (0) target = $region81
    $region80: #{_lambda_.1} parent=1 // pred_region
      %205 = dma.done [#allocation7], 1024
    $region81: #{_lambda_.1} parent=1 // pred_fallthru
      _
    // Predicated region
    $region82: #{_lambda_.1} parent=1 // pred_check
      _
    $region83: #{_lambda_.1} parent=1 // pred_check_branch
      %207 = sbr.rel (0) target = $region85
    $region84: #{_lambda_.1} parent=1 // pred_region
      %208 = dma.done [#allocation10], 2048
    $region85: #{_lambda_.1} parent=1 // pred_fallthru
      _
    // Predicated region
    $region86: #{_lambda_.1} parent=1 // pred_check
      _
    $region87: #{_lambda_.1} parent=1 // pred_check_branch
      %210 = sbr.rel (0) target = $region89
    $region88: #{_lambda_.1} parent=1 // pred_region
      %211 = dma.done [#allocation10], 1024
    $region89: #{_lambda_.1} parent=1 // pred_fallthru
      _
    // Predicated region
    $region90: #{_lambda_.1} parent=1 // pred_check
      _
    $region91: #{_lambda_.1} parent=1 // pred_check_branch
      %213 = sbr.rel (0) target = $region93
    $region92: #{_lambda_.1} parent=1 // pred_region
      %214 = dma.done [#allocation13], 2048
    $region93: #{_lambda_.1} parent=1 // pred_fallthru
      _
    // Predicated region
    $region94: #{_lambda_.1} parent=1 // pred_check
      _
    $region95: #{_lambda_.1} parent=1 // pred_check_branch
      %216 = sbr.rel (0) target = $region97
    $region96: #{_lambda_.1} parent=1 // pred_region
      %217 = dma.done [#allocation13], 64
    $region97: #{_lambda_.1} parent=1 // pred_fallthru
      _
    // Predicated region
    $region98: #{_lambda_.1} parent=1 // pred_check
      _
    $region99: #{_lambda_.1} parent=1 // pred_check_branch
      %219 = sbr.rel (0) target = $region101
    $region100: #{_lambda_.1} parent=1 // pred_region
      %220 = dma.done [#allocation16], 128
    $region101: #{_lambda_.1} parent=1 // pred_fallthru
      _
    // Predicated region
    $region102: #{_lambda_.1} parent=1 // pred_check
      _
    $region103: #{_lambda_.1} parent=1 // pred_check_branch
      %222 = sbr.rel (0) target = $region105
    $region104: #{_lambda_.1} parent=1 // pred_region
      %223 = dma.done [#allocation16], 256
    $region105: #{_lambda_.1} parent=1 // pred_fallthru
      _
    // Predicated region
    $region106: #{_lambda_.1} parent=1 // pred_check
      _
    $region107: #{_lambda_.1} parent=1 // pred_check_branch
      %225 = sbr.rel (0) target = $region109
    $region108: #{_lambda_.1} parent=1 // pred_region
      %226 = dma.done [#allocation19], 512
    $region109: #{_lambda_.1} parent=1 // pred_fallthru
      _
    // Predicated region
    $region110: #{_lambda_.1} parent=1 // pred_check
      _
    $region111: #{_lambda_.1} parent=1 // pred_check_branch
      %228 = sbr.rel (0) target = $region113
    $region112: #{_lambda_.1} parent=1 // pred_region
      %229 = dma.done [#allocation19], 2048
    $region113: #{_lambda_.1} parent=1 // pred_fallthru
      _
    // Predicated region
    $region114: #{_lambda_.1} parent=1 // pred_check
      _
    $region115: #{_lambda_.1} parent=1 // pred_check_branch
      %231 = sbr.rel (0) target = $region117
    $region116: #{_lambda_.1} parent=1 // pred_region
      %232 = dma.done [#allocation22], 2048
    $region117: #{_lambda_.1} parent=1 // pred_fallthru
      _
    // Predicated region
    $region118: #{_lambda_.1} parent=1 // pred_check
      _
    $region119: #{_lambda_.1} parent=1 // pred_check_branch
      %234 = sbr.rel (0) target = $region121
    $region120: #{_lambda_.1} parent=1 // pred_region
      %235 = dma.done [#allocation22], 64
    $region121: #{_lambda_.1} parent=1 // pred_fallthru
      _
    // Predicated region
    $region122: #{_lambda_.1} parent=1 // pred_check
      _
    $region123: #{_lambda_.1} parent=1 // pred_check_branch
      %237 = sbr.rel (0) target = $region125
    $region124: #{_lambda_.1} parent=1 // pred_region
      %238 = dma.done [#allocation25], 128
    $region125: #{_lambda_.1} parent=1 // pred_fallthru
      _
    %v240 = vlaneseq
    %v241 = vand.u32 %v240, 127
    %v242 = vadd.s32 %v241, 128
    %vm243 = vcmp.lt.s32.totalorder %v241, 0
    %v244 = vsub.s32 0, %v241
    %v245 = vsel %vm243, %v244, %v241
    %v246 = vshrl.u32 %v245, 7
    %v247 = vand.u32 %v245, 127
    %v248 = vsub.s32 0, %v247
    %v249 = vsel %vm243, %v248, %v247
    %vm250 = vcmp.lt.s32.totalorder %v242, 0
    %v251 = vsub.s32 0, %v242
    %v252 = vsel %vm250, %v251, %v242
    %v253 = vshrl.u32 %v252, 7
    %v254 = vand.u32 %v252, 127
    %v255 = vsub.s32 0, %v254
    %v256 = vsel %vm250, %v255, %v254
    %vm257 = vcmp.ne.s32.totalorder %v249, 0
    %vm258 = vcmp.ne.s32.totalorder %v256, 0
    %vm259 = vcmp.lt.s32.totalorder %v249, 0
    %vm260 = vcmp.lt.s32.totalorder %v256, 0
    %vm261 = vmand %vm259, %vm257
    %vm262 = vmand %vm260, %vm258
    %v263 = vadd.s32 %v249, 128
    %v264 = vadd.s32 %v256, 128
    %v265 = vsel %vm261, %v263, %v249
    %v266 = vsel %vm262, %v264, %v256
    %v267 = vld [vmem:[%s0] sm:$0xff]
    %v268 = vld [vmem:[%s0 + $0x8] sm:$0xff]
    %v269 = vld [vmem:[%s0 + $0x10] sm:$0xff]
    %v270 = vld [vmem:[%s0 + $0x18] sm:$0xff]
    %v271 = vld [vmem:[#allocation3] sm:$0xf]
    %v272 = vld [vmem:[#allocation3 + $0x4] sm:$0xf]
    %v273 = vld [vmem:[#allocation3 + $0x8] sm:$0xf]
    %v274 = vld [vmem:[#allocation3 + $0xc] sm:$0xf]
    %v275 = vld [vmem:[#allocation6] sm:$0xff]
    %v276 = vld [vmem:[#allocation6 + $0x8] sm:$0xff]
    %v277 = vld [vmem:[#allocation6 + $0x10] sm:$0xff]
    %v278 = vld [vmem:[#allocation6 + $0x18] sm:$0xff]
    %v279 = vld [vmem:[#allocation8] sm:$0xf]
    %v280 = vld [vmem:[#allocation8 + $0x4] sm:$0xf]
    %v281 = vld [vmem:[#allocation8 + $0x8] sm:$0xf]
    %v282 = vld [vmem:[#allocation8 + $0xc] sm:$0xf]
    %v283 = vld [vmem:[#allocation8 + $0x10] sm:$0xf]
    %v284 = vld [vmem:[#allocation8 + $0x14] sm:$0xf]
    %v285 = vld [vmem:[#allocation8 + $0x18] sm:$0xf]
    %v286 = vld [vmem:[#allocation8 + $0x1c] sm:$0xf]
    %v287 = vld [vmem:[#allocation8 + $0x20] sm:$0xf]
    %v288 = vld [vmem:[#allocation8 + $0x24] sm:$0xf]
    %v289 = vld [vmem:[#allocation8 + $0x28] sm:$0xf]
    %v290 = vld [vmem:[#allocation8 + $0x2c] sm:$0xf]
    %v291 = vld [vmem:[#allocation8 + $0x30] sm:$0xf]
    %v292 = vld [vmem:[#allocation8 + $0x34] sm:$0xf]
    %v293 = vld [vmem:[#allocation8 + $0x38] sm:$0xf]
    %v294 = vld [vmem:[#allocation8 + $0x3c] sm:$0xf]
    %v295 = vld [vmem:[#allocation9] sm:$0xff]
    %v296 = vld [vmem:[#allocation9 + $0x8] sm:$0xff]
    %v297 = vld [vmem:[#allocation9 + $0x10] sm:$0xff]
    %v298 = vld [vmem:[#allocation9 + $0x18] sm:$0xff]
    %v299 = vld [vmem:[#allocation9 + $0x20] sm:$0xff]
    %v300 = vld [vmem:[#allocation9 + $0x28] sm:$0xff]
    %v301 = vld [vmem:[#allocation9 + $0x30] sm:$0xff]
    %v302 = vld [vmem:[#allocation9 + $0x38] sm:$0xff]
    %v303 = vld [vmem:[#allocation9 + $0x40] sm:$0xff]
    %v304 = vld [vmem:[#allocation9 + $0x48] sm:$0xff]
    %v305 = vld [vmem:[#allocation9 + $0x50] sm:$0xff]
    %v306 = vld [vmem:[#allocation9 + $0x58] sm:$0xff]
    %v307 = vld [vmem:[#allocation9 + $0x60] sm:$0xff]
    %v308 = vld [vmem:[#allocation9 + $0x68] sm:$0xff]
    %v309 = vld [vmem:[#allocation9 + $0x70] sm:$0xff]
    %v310 = vld [vmem:[#allocation9 + $0x78] sm:$0xff]
    %v311 = vld [vmem:[#allocation11] sm:$0xf]
    %v312 = vld [vmem:[#allocation11 + $0x4] sm:$0xf]
    %v313 = vld [vmem:[#allocation11 + $0x8] sm:$0xf]
    %v314 = vld [vmem:[#allocation11 + $0xc] sm:$0xf]
    %v315 = vld [vmem:[#allocation11 + $0x10] sm:$0xf]
    %v316 = vld [vmem:[#allocation11 + $0x14] sm:$0xf]
    %v317 = vld [vmem:[#allocation11 + $0x18] sm:$0xf]
    %v318 = vld [vmem:[#allocation11 + $0x1c] sm:$0xf]
    %v319 = vld [vmem:[#allocation11 + $0x20] sm:$0xf]
    %v320 = vld [vmem:[#allocation11 + $0x24] sm:$0xf]
    %v321 = vld [vmem:[#allocation11 + $0x28] sm:$0xf]
    %v322 = vld [vmem:[#allocation11 + $0x2c] sm:$0xf]
    %v323 = vld [vmem:[#allocation11 + $0x30] sm:$0xf]
    %v324 = vld [vmem:[#allocation11 + $0x34] sm:$0xf]
    %v325 = vld [vmem:[#allocation11 + $0x38] sm:$0xf]
    %v326 = vld [vmem:[#allocation11 + $0x3c] sm:$0xf]
    %v327 = vld [vmem:[#allocation12] sm:$0xff]
    %v328 = vld [vmem:[#allocation12 + $0x8] sm:$0xff]
    %v329 = vld [vmem:[#allocation12 + $0x10] sm:$0xff]
    %v330 = vld [vmem:[#allocation12 + $0x18] sm:$0xff]
    %v331 = vld [vmem:[#allocation12 + $0x20] sm:$0xff]
    %v332 = vld [vmem:[#allocation12 + $0x28] sm:$0xff]
    %v333 = vld [vmem:[#allocation12 + $0x30] sm:$0xff]
    %v334 = vld [vmem:[#allocation12 + $0x38] sm:$0xff]
    %v335 = vld [vmem:[#allocation12 + $0x40] sm:$0xff]
    %v336 = vld [vmem:[#allocation12 + $0x48] sm:$0xff]
    %v337 = vld [vmem:[#allocation12 + $0x50] sm:$0xff]
    %v338 = vld [vmem:[#allocation12 + $0x58] sm:$0xff]
    %v339 = vld [vmem:[#allocation12 + $0x60] sm:$0xff]
    %v340 = vld [vmem:[#allocation12 + $0x68] sm:$0xff]
    %v341 = vld [vmem:[#allocation12 + $0x70] sm:$0xff]
    %v342 = vld [vmem:[#allocation12 + $0x78] sm:$0xff]
    %v343 = vld [vmem:[#allocation14] sm:$0xf]
    %v344 = vld [vmem:[#allocation15] sm:$0xff]
    %v345 = vpack.c.bf16 %v269, %v267
    %v346 = vpack.c.bf16 %v270, %v268
    %348 = vset.pattern.permute.xlu0 0
    %349 = vperm.xlu0 %348, %v275
    %v350 = vpop.permute.xlu0 %349
    %353 = vset.pattern.permute.xlu0 0
    %354 = vperm.xlu0 %353, %v276
    %v355 = vpop.permute.xlu0 %354
    %358 = vset.pattern.permute.xlu0 0
    %359 = vperm.xlu0 %358, %v277
    %v360 = vpop.permute.xlu0 %359
    %363 = vset.pattern.permute.xlu0 0
    %364 = vperm.xlu0 %363, %v278
    %v365 = vpop.permute.xlu0 %364
    %v371 = vunpack.c.l.b16 %v271
    %v372 = vunpack.c.l.b16 %v272
    %v373 = vunpack.c.l.b16 %v273
    %v374 = vunpack.c.l.b16 %v274
    %v375 = vpack.c.b16 %v372, %v371
    %v376 = vpack.c.b16 %v374, %v373
    %vm377 = vcmask 130048
    %v379 = vsel %vm377, %v375, 0
    %v382 = vsel %vm377, %v376, 0
    %384 = vmatprep.subr.bf16.mxu0 %v346
    %385 = vmatpush1.bf16.msra.mxu0 %v345
    %386 = vmatprep.subr.bf16.mxu0 0
    %387 = vmatpush1.bf16.msra.mxu0 0
    %388 = vmatprep.subr.bf16.mxu0 0
    %389 = vmatpush1.bf16.msra.mxu0 0
    %390 = vmatprep.subr.bf16.mxu0 0
    %391 = vmatpush1.bf16.msra.mxu0 0
    %392 = vmatprep.subr.bf16.mxu0 0
    %393 = vmatpush1.bf16.msra.mxu0 0
    %394 = vmatprep.subr.bf16.mxu0 0
    %395 = vmatpush1.bf16.msra.mxu0 0
    %396 = vmatprep.subr.bf16.mxu0 0
    %397 = vmatpush1.bf16.msra.mxu0 0
    %398 = vmatprep.subr.bf16.mxu0 0
    %399 = vmatpush1.bf16.msra.mxu0 0
    %400 = vmatprep.subr.bf16.mxu0 0
    %401 = vmatpush1.bf16.msra.mxu0 0
    %402 = vmatprep.subr.bf16.mxu0 0
    %403 = vmatpush1.bf16.msra.mxu0 0
    %404 = vmatprep.subr.bf16.mxu0 0
    %405 = vmatpush1.bf16.msra.mxu0 0
    %406 = vmatprep.subr.bf16.mxu0 0
    %407 = vmatpush1.bf16.msra.mxu0 0
    %408 = vmatprep.subr.bf16.mxu0 0
    %409 = vmatpush1.bf16.msra.mxu0 0
    %410 = vmatprep.subr.bf16.mxu0 0
    %411 = vmatpush1.bf16.msra.mxu0 0
    %412 = vmatprep.subr.bf16.mxu0 0
    %413 = vmatpush1.bf16.msra.mxu0 0
    %414 = vmatprep.subr.bf16.mxu0 0
    %415 = vmatpush1.bf16.msra.mxu0 0
    %416 = vmatprep.mubr.bf16.mxu0 0
    %417 = vmatmul.mubr.bf16.gmra.mrb[0].mxu0 %v379
    %v418 = vpop.f32.mrb[0].mxu0
    %v419 = vadd.f32 %v350, %v418
    %v420 = vpop.f32.mrb[0].mxu0
    %v421 = vadd.f32 %v350, %v420
    %v422 = vpop.f32.mrb[0].mxu0
    %v423 = vadd.f32 %v355, %v422
    %v424 = vpop.f32.mrb[0].mxu0
    %v425 = vadd.f32 %v355, %v424
    %426 = vmatprep.mubr.bf16.mxu0 0
    %427 = vmatmul.mubr.bf16.gmra.mrb[0].mxu0 %v382
    %v428 = vpop.f32.mrb[0].mxu0
    %v429 = vadd.f32 %v360, %v428
    %v430 = vpop.f32.mrb[0].mxu0
    %v431 = vadd.f32 %v360, %v430
    %v432 = vpop.f32.mrb[0].mxu0
    %v433 = vadd.f32 %v365, %v432
    %v434 = vpop.f32.mrb[0].mxu0
    %v435 = vadd.f32 %v365, %v434
    %436 = vdwg.mxu0
    %vm437 = vcmp.ge.s32.totalorder %v265, 1
    %vm438 = vcmp.ge.s32.totalorder %v266, 1
    %439 = vrot.lane.b32.xlu0 %v419, 1
    %v440 = vpop.permute.xlu0 %439
    %441 = vrot.lane.b32.xlu0 %v423, 1
    %v442 = vpop.permute.xlu0 %441
    %443 = vrot.lane.b32.xlu0 %v429, 1
    %v444 = vpop.permute.xlu0 %443
    %445 = vrot.lane.b32.xlu0 %v433, 1
    %v446 = vpop.permute.xlu0 %445
    %447 = vrot.lane.b32.xlu0 %v421, 1
    %v448 = vpop.permute.xlu0 %447
    %449 = vrot.lane.b32.xlu0 %v425, 1
    %v450 = vpop.permute.xlu0 %449
    %451 = vrot.lane.b32.xlu0 %v431, 1
    %v452 = vpop.permute.xlu0 %451
    %453 = vrot.lane.b32.xlu0 %v435, 1
    %v454 = vpop.permute.xlu0 %453
    %vm455 = vcmp.lt.s32.totalorder %v241, 1
    %v456 = vsel %vm455, %v440, %v448
    %v457 = vsel %vm455, %v442, %v450
    %v458 = vsel %vm455, %v444, %v452
    %v459 = vsel %vm455, %v446, %v454
    %v460 = vsel %vm455, %v448, %v440
    %v461 = vsel %vm455, %v450, %v442
    %v462 = vsel %vm455, %v452, %v444
    %v463 = vsel %vm455, %v454, %v446
    %v464 = vsel %vm437, %v460, 0.0
    %v465 = vsel %vm438, %v456, 0.0
    %v466 = vsel %vm437, %v461, 0.0
    %v467 = vsel %vm438, %v457, 0.0
    %v468 = vsel %vm437, %v462, 0.0
    %v469 = vsel %vm438, %v458, 0.0
    %v470 = vsel %vm437, %v463, 0.0
    %v471 = vsel %vm438, %v459, 0.0
    %vm472 = vcmp.lt.s32.totalorder %v265, 127
    %vm473 = vcmp.lt.s32.totalorder %v266, 127
    %474 = vrot.lane.b32.xlu0 %v419, 127
    %v475 = vpop.permute.xlu0 %474
    %476 = vrot.lane.b32.xlu0 %v423, 127
    %v477 = vpop.permute.xlu0 %476
    %478 = vrot.lane.b32.xlu0 %v429, 127
    %v479 = vpop.permute.xlu0 %478
    %480 = vrot.lane.b32.xlu0 %v433, 127
    %v481 = vpop.permute.xlu0 %480
    %482 = vrot.lane.b32.xlu0 %v421, 127
    %v483 = vpop.permute.xlu0 %482
    %484 = vrot.lane.b32.xlu0 %v425, 127
    %v485 = vpop.permute.xlu0 %484
    %486 = vrot.lane.b32.xlu0 %v431, 127
    %v487 = vpop.permute.xlu0 %486
    %488 = vrot.lane.b32.xlu0 %v435, 127
    %v489 = vpop.permute.xlu0 %488
    %vm490 = vcmp.lt.s32.totalorder %v241, 127
    %v491 = vsel %vm490, %v475, %v483
    %v492 = vsel %vm490, %v477, %v485
    %v493 = vsel %vm490, %v479, %v487
    %v494 = vsel %vm490, %v481, %v489
    %v495 = vsel %vm490, %v483, %v475
    %v496 = vsel %vm490, %v485, %v477
    %v497 = vsel %vm490, %v487, %v479
    %v498 = vsel %vm490, %v489, %v481
    %v499 = vsel %vm472, %v491, 0.0
    %v500 = vsel %vm473, %v495, 0.0
    %v501 = vsel %vm472, %v492, 0.0
    %v502 = vsel %vm473, %v496, 0.0
    %v503 = vsel %vm472, %v493, 0.0
    %v504 = vsel %vm473, %v497, 0.0
    %v505 = vsel %vm472, %v494, 0.0
    %v506 = vsel %vm473, %v498, 0.0
    %v507 = vpack.c.bf16 %v466, %v464
    %v508 = vpack.c.bf16 %v467, %v465
    %v509 = vpack.c.bf16 %v470, %v468
    %v510 = vpack.c.bf16 %v471, %v469
    %511 = vst [vmem:[#allocation2] sm:$0xff] %v507
    %512 = vst [vmem:[#allocation2 + $0x8] sm:$0xff] %v508
    %513 = vst [vmem:[#allocation2 + $0x10] sm:$0xff] %v509
    %514 = vst [vmem:[#allocation2 + $0x18] sm:$0xff] %v510
    %v515 = vpack.c.bf16 %v423, %v419
    %v516 = vpack.c.bf16 %v425, %v421
    %v517 = vpack.c.bf16 %v433, %v429
    %v518 = vpack.c.bf16 %v435, %v431
    %519 = vst [vmem:[#allocation2 + $0x20] sm:$0xff] %v515
    %520 = vst [vmem:[#allocation2 + $0x28] sm:$0xff] %v516
    %521 = vst [vmem:[#allocation2 + $0x30] sm:$0xff] %v517
    %522 = vst [vmem:[#allocation2 + $0x38] sm:$0xff] %v518
    %v523 = vpack.c.bf16 %v501, %v499
    %v524 = vpack.c.bf16 %v502, %v500
    %v525 = vpack.c.bf16 %v505, %v503
    %v526 = vpack.c.bf16 %v506, %v504
    %527 = vst [vmem:[#allocation2 + $0x40] sm:$0xff] %v523
    %528 = vst [vmem:[#allocation2 + $0x48] sm:$0xff] %v524
    %529 = vst [vmem:[#allocation2 + $0x50] sm:$0xff] %v525
    %530 = vst [vmem:[#allocation2 + $0x58] sm:$0xff] %v526
    %v531 = vld [vmem:[#allocation2] sm:$0xff]
    %v532 = vld [vmem:[#allocation2 + $0x8] sm:$0xff]
    %v533 = vld [vmem:[#allocation2 + $0x10] sm:$0xff]
    %v534 = vld [vmem:[#allocation2 + $0x18] sm:$0xff]
    %v535 = vld [vmem:[#allocation2 + $0x20] sm:$0xff]
    %v536 = vld [vmem:[#allocation2 + $0x28] sm:$0xff]
    %v537 = vld [vmem:[#allocation2 + $0x30] sm:$0xff]
    %v538 = vld [vmem:[#allocation2 + $0x38] sm:$0xff]
    %v539 = vld [vmem:[#allocation2 + $0x40] sm:$0xff]
    %v540 = vld [vmem:[#allocation2 + $0x48] sm:$0xff]
    %v541 = vld [vmem:[#allocation2 + $0x50] sm:$0xff]
    %v542 = vld [vmem:[#allocation2 + $0x58] sm:$0xff]
    %544 = vset.pattern.permute.xlu0 0
    %545 = vperm.xlu0 %544, %v295
    %v546 = vpop.permute.xlu0 %545
    %549 = vset.pattern.permute.xlu0 0
    %550 = vperm.xlu0 %549, %v296
    %v551 = vpop.permute.xlu0 %550
    %554 = vset.pattern.permute.xlu0 0
    %555 = vperm.xlu0 %554, %v297
    %v556 = vpop.permute.xlu0 %555
    %559 = vset.pattern.permute.xlu0 0
    %560 = vperm.xlu0 %559, %v298
    %v561 = vpop.permute.xlu0 %560
    %v567 = vunpack.c.l.b16 %v279
    %v568 = vunpack.c.l.b16 %v280
    %v569 = vunpack.c.l.b16 %v281
    %v570 = vunpack.c.l.b16 %v282
    %v571 = vpack.c.b16 %v568, %v567
    %v572 = vpack.c.b16 %v570, %v569
    %vm573 = vcmask 785408
    %v575 = vsel %vm573, %v571, 0
    %v578 = vsel %vm573, %v572, 0
    %580 = vmatprep.subr.bf16.mxu0 %v532
    %581 = vmatpush1.bf16.msra.mxu0 %v531
    %582 = vmatprep.subr.bf16.mxu0 %v534
    %583 = vmatpush1.bf16.msra.mxu0 %v533
    %584 = vmatprep.subr.bf16.mxu0 %v536
    %585 = vmatpush1.bf16.msra.mxu0 %v535
    %586 = vmatprep.subr.bf16.mxu0 %v538
    %587 = vmatpush1.bf16.msra.mxu0 %v537
    %588 = vmatprep.subr.bf16.mxu0 %v540
    %589 = vmatpush1.bf16.msra.mxu0 %v539
    %590 = vmatprep.subr.bf16.mxu0 %v542
    %591 = vmatpush1.bf16.msra.mxu0 %v541
    %592 = vmatprep.subr.bf16.mxu0 0
    %593 = vmatpush1.bf16.msra.mxu0 0
    %594 = vmatprep.subr.bf16.mxu0 0
    %595 = vmatpush1.bf16.msra.mxu0 0
    %596 = vmatprep.subr.bf16.mxu0 0
    %597 = vmatpush1.bf16.msra.mxu0 0
    %598 = vmatprep.subr.bf16.mxu0 0
    %599 = vmatpush1.bf16.msra.mxu0 0
    %600 = vmatprep.subr.bf16.mxu0 0
    %601 = vmatpush1.bf16.msra.mxu0 0
    %602 = vmatprep.subr.bf16.mxu0 0
    %603 = vmatpush1.bf16.msra.mxu0 0
    %604 = vmatprep.subr.bf16.mxu0 0
    %605 = vmatpush1.bf16.msra.mxu0 0
    %606 = vmatprep.subr.bf16.mxu0 0
    %607 = vmatpush1.bf16.msra.mxu0 0
    %608 = vmatprep.subr.bf16.mxu0 0
    %609 = vmatpush1.bf16.msra.mxu0 0
    %610 = vmatprep.subr.bf16.mxu0 0
    %611 = vmatpush1.bf16.msra.mxu0 0
    %612 = vmatprep.mubr.bf16.mxu0 0
    %613 = vmatmul.mubr.bf16.gmra.mrb[0].mxu0 %v575
    %v614 = vpop.f32.mrb[0].mxu0
    %v615 = vadd.f32 %v546, %v614
    %v616 = vpop.f32.mrb[0].mxu0
    %v617 = vadd.f32 %v546, %v616
    %v618 = vpop.f32.mrb[0].mxu0
    %v619 = vadd.f32 %v551, %v618
    %v620 = vpop.f32.mrb[0].mxu0
    %v621 = vadd.f32 %v551, %v620
    %622 = vmatprep.mubr.bf16.mxu0 0
    %623 = vmatmul.mubr.bf16.gmra.mrb[0].mxu0 %v578
    %v624 = vpop.f32.mrb[0].mxu0
    %v625 = vadd.f32 %v556, %v624
    %v626 = vpop.f32.mrb[0].mxu0
    %v627 = vadd.f32 %v556, %v626
    %v628 = vpop.f32.mrb[0].mxu0
    %v629 = vadd.f32 %v561, %v628
    %v630 = vpop.f32.mrb[0].mxu0
    %v631 = vadd.f32 %v561, %v630
    %632 = vdwg.mxu0
    %v633 = vmax.f32 %v615, 0.0
    %v634 = vmax.f32 %v617, 0.0
    %v635 = vmax.f32 %v619, 0.0
    %v636 = vmax.f32 %v621, 0.0
    %v637 = vmax.f32 %v625, 0.0
    %v638 = vmax.f32 %v627, 0.0
    %v639 = vmax.f32 %v629, 0.0
    %v640 = vmax.f32 %v631, 0.0
    %v641 = vpack.c.bf16 %v635, %v633
    %v642 = vpack.c.bf16 %v636, %v634
    %v643 = vpack.c.bf16 %v639, %v637
    %v644 = vpack.c.bf16 %v640, %v638
    %646 = vset.pattern.permute.xlu0 0
    %647 = vperm.xlu0 %646, %v327
    %v648 = vpop.permute.xlu0 %647
    %651 = vset.pattern.permute.xlu0 0
    %652 = vperm.xlu0 %651, %v328
    %v653 = vpop.permute.xlu0 %652
    %656 = vset.pattern.permute.xlu0 0
    %657 = vperm.xlu0 %656, %v329
    %v658 = vpop.permute.xlu0 %657
    %661 = vset.pattern.permute.xlu0 0
    %662 = vperm.xlu0 %661, %v330
    %v663 = vpop.permute.xlu0 %662
    %v669 = vunpack.c.l.b16 %v311
    %v670 = vunpack.c.l.b16 %v312
    %v671 = vunpack.c.l.b16 %v313
    %v672 = vunpack.c.l.b16 %v314
    %v673 = vpack.c.b16 %v670, %v669
    %v674 = vpack.c.b16 %v672, %v671
    %vm675 = vcmask 261120
    %v677 = vsel %vm675, %v673, 0
    %v680 = vsel %vm675, %v674, 0
    %682 = vmatprep.subr.bf16.mxu0 %v642
    %683 = vmatpush1.bf16.msra.mxu0 %v641
    %684 = vmatprep.subr.bf16.mxu0 %v644
    %685 = vmatpush1.bf16.msra.mxu0 %v643
    %686 = vmatprep.subr.bf16.mxu0 0
    %687 = vmatpush1.bf16.msra.mxu0 0
    %688 = vmatprep.subr.bf16.mxu0 0
    %689 = vmatpush1.bf16.msra.mxu0 0
    %690 = vmatprep.subr.bf16.mxu0 0
    %691 = vmatpush1.bf16.msra.mxu0 0
    %692 = vmatprep.subr.bf16.mxu0 0
    %693 = vmatpush1.bf16.msra.mxu0 0
    %694 = vmatprep.subr.bf16.mxu0 0
    %695 = vmatpush1.bf16.msra.mxu0 0
    %696 = vmatprep.subr.bf16.mxu0 0
    %697 = vmatpush1.bf16.msra.mxu0 0
    %698 = vmatprep.subr.bf16.mxu0 0
    %699 = vmatpush1.bf16.msra.mxu0 0
    %700 = vmatprep.subr.bf16.mxu0 0
    %701 = vmatpush1.bf16.msra.mxu0 0
    %702 = vmatprep.subr.bf16.mxu0 0
    %703 = vmatpush1.bf16.msra.mxu0 0
    %704 = vmatprep.subr.bf16.mxu0 0
    %705 = vmatpush1.bf16.msra.mxu0 0
    %706 = vmatprep.subr.bf16.mxu0 0
    %707 = vmatpush1.bf16.msra.mxu0 0
    %708 = vmatprep.subr.bf16.mxu0 0
    %709 = vmatpush1.bf16.msra.mxu0 0
    %710 = vmatprep.subr.bf16.mxu0 0
    %711 = vmatpush1.bf16.msra.mxu0 0
    %712 = vmatprep.subr.bf16.mxu0 0
    %713 = vmatpush1.bf16.msra.mxu0 0
    %714 = vmatprep.mubr.bf16.mxu0 0
    %715 = vmatmul.mubr.bf16.gmra.mrb[0].mxu0 %v677
    %v716 = vpop.f32.mrb[0].mxu0
    %v717 = vadd.f32 %v648, %v716
    %v718 = vpop.f32.mrb[0].mxu0
    %v719 = vadd.f32 %v648, %v718
    %v720 = vpop.f32.mrb[0].mxu0
    %v721 = vadd.f32 %v653, %v720
    %v722 = vpop.f32.mrb[0].mxu0
    %v723 = vadd.f32 %v653, %v722
    %724 = vmatprep.mubr.bf16.mxu0 0
    %725 = vmatmul.mubr.bf16.gmra.mrb[0].mxu0 %v680
    %v726 = vpop.f32.mrb[0].mxu0
    %v727 = vadd.f32 %v658, %v726
    %v728 = vpop.f32.mrb[0].mxu0
    %v729 = vadd.f32 %v658, %v728
    %v730 = vpop.f32.mrb[0].mxu0
    %v731 = vadd.f32 %v663, %v730
    %v732 = vpop.f32.mrb[0].mxu0
    %v733 = vadd.f32 %v663, %v732
    %734 = vdwg.mxu0
    %v735 = vadd.f32 %v419, %v717
    %v736 = vadd.f32 %v421, %v719
    %v737 = vadd.f32 %v423, %v721
    %v738 = vadd.f32 %v425, %v723
    %v739 = vadd.f32 %v429, %v727
    %v740 = vadd.f32 %v431, %v729
    %v741 = vadd.f32 %v433, %v731
    %v742 = vadd.f32 %v435, %v733
    %vm743 = vcmp.ge.s32.totalorder %v265, 2
    %vm744 = vcmp.ge.s32.totalorder %v266, 2
    %745 = vrot.lane.b32.xlu0 %v735, 2
    %v746 = vpop.permute.xlu0 %745
    %747 = vrot.lane.b32.xlu0 %v737, 2
    %v748 = vpop.permute.xlu0 %747
    %749 = vrot.lane.b32.xlu0 %v739, 2
    %v750 = vpop.permute.xlu0 %749
    %751 = vrot.lane.b32.xlu0 %v741, 2
    %v752 = vpop.permute.xlu0 %751
    %753 = vrot.lane.b32.xlu0 %v736, 2
    %v754 = vpop.permute.xlu0 %753
    %755 = vrot.lane.b32.xlu0 %v738, 2
    %v756 = vpop.permute.xlu0 %755
    %757 = vrot.lane.b32.xlu0 %v740, 2
    %v758 = vpop.permute.xlu0 %757
    %759 = vrot.lane.b32.xlu0 %v742, 2
    %v760 = vpop.permute.xlu0 %759
    %vm761 = vcmp.lt.s32.totalorder %v241, 2
    %v762 = vsel %vm761, %v746, %v754
    %v763 = vsel %vm761, %v748, %v756
    %v764 = vsel %vm761, %v750, %v758
    %v765 = vsel %vm761, %v752, %v760
    %v766 = vsel %vm761, %v754, %v746
    %v767 = vsel %vm761, %v756, %v748
    %v768 = vsel %vm761, %v758, %v750
    %v769 = vsel %vm761, %v760, %v752
    %v770 = vsel %vm743, %v766, 0.0
    %v771 = vsel %vm744, %v762, 0.0
    %v772 = vsel %vm743, %v767, 0.0
    %v773 = vsel %vm744, %v763, 0.0
    %v774 = vsel %vm743, %v768, 0.0
    %v775 = vsel %vm744, %v764, 0.0
    %v776 = vsel %vm743, %v769, 0.0
    %v777 = vsel %vm744, %v765, 0.0
    %vm778 = vcmp.lt.s32.totalorder %v265, 126
    %vm779 = vcmp.lt.s32.totalorder %v266, 126
    %780 = vrot.lane.b32.xlu0 %v735, 126
    %v781 = vpop.permute.xlu0 %780
    %782 = vrot.lane.b32.xlu0 %v737, 126
    %v783 = vpop.permute.xlu0 %782
    %784 = vrot.lane.b32.xlu0 %v739, 126
    %v785 = vpop.permute.xlu0 %784
    %786 = vrot.lane.b32.xlu0 %v741, 126
    %v787 = vpop.permute.xlu0 %786
    %788 = vrot.lane.b32.xlu0 %v736, 126
    %v789 = vpop.permute.xlu0 %788
    %790 = vrot.lane.b32.xlu0 %v738, 126
    %v791 = vpop.permute.xlu0 %790
    %792 = vrot.lane.b32.xlu0 %v740, 126
    %v793 = vpop.permute.xlu0 %792
    %794 = vrot.lane.b32.xlu0 %v742, 126
    %v795 = vpop.permute.xlu0 %794
    %vm796 = vcmp.lt.s32.totalorder %v241, 126
    %v797 = vsel %vm796, %v781, %v789
    %v798 = vsel %vm796, %v783, %v791
    %v799 = vsel %vm796, %v785, %v793
    %v800 = vsel %vm796, %v787, %v795
    %v801 = vsel %vm796, %v789, %v781
    %v802 = vsel %vm796, %v791, %v783
    %v803 = vsel %vm796, %v793, %v785
    %v804 = vsel %vm796, %v795, %v787
    %v805 = vsel %vm778, %v797, 0.0
    %v806 = vsel %vm779, %v801, 0.0
    %v807 = vsel %vm778, %v798, 0.0
    %v808 = vsel %vm779, %v802, 0.0
    %v809 = vsel %vm778, %v799, 0.0
    %v810 = vsel %vm779, %v803, 0.0
    %v811 = vsel %vm778, %v800, 0.0
    %v812 = vsel %vm779, %v804, 0.0
    %v813 = vpack.c.bf16 %v772, %v770
    %v814 = vpack.c.bf16 %v773, %v771
    %v815 = vpack.c.bf16 %v776, %v774
    %v816 = vpack.c.bf16 %v777, %v775
    %817 = vst [vmem:[#allocation2] sm:$0xff] %v813
    %818 = vst [vmem:[#allocation2 + $0x8] sm:$0xff] %v814
    %819 = vst [vmem:[#allocation2 + $0x10] sm:$0xff] %v815
    %820 = vst [vmem:[#allocation2 + $0x18] sm:$0xff] %v816
    %v821 = vpack.c.bf16 %v737, %v735
    %v822 = vpack.c.bf16 %v738, %v736
    %v823 = vpack.c.bf16 %v741, %v739
    %v824 = vpack.c.bf16 %v742, %v740
    %825 = vst [vmem:[#allocation2 + $0x20] sm:$0xff] %v821
    %826 = vst [vmem:[#allocation2 + $0x28] sm:$0xff] %v822
    %827 = vst [vmem:[#allocation2 + $0x30] sm:$0xff] %v823
    %828 = vst [vmem:[#allocation2 + $0x38] sm:$0xff] %v824
    %v829 = vpack.c.bf16 %v807, %v805
    %v830 = vpack.c.bf16 %v808, %v806
    %v831 = vpack.c.bf16 %v811, %v809
    %v832 = vpack.c.bf16 %v812, %v810
    %833 = vst [vmem:[#allocation2 + $0x40] sm:$0xff] %v829
    %834 = vst [vmem:[#allocation2 + $0x48] sm:$0xff] %v830
    %835 = vst [vmem:[#allocation2 + $0x50] sm:$0xff] %v831
    %836 = vst [vmem:[#allocation2 + $0x58] sm:$0xff] %v832
    %v837 = vld [vmem:[#allocation2] sm:$0xff]
    %v838 = vld [vmem:[#allocation2 + $0x8] sm:$0xff]
    %v839 = vld [vmem:[#allocation2 + $0x10] sm:$0xff]
    %v840 = vld [vmem:[#allocation2 + $0x18] sm:$0xff]
    %v841 = vld [vmem:[#allocation2 + $0x20] sm:$0xff]
    %v842 = vld [vmem:[#allocation2 + $0x28] sm:$0xff]
    %v843 = vld [vmem:[#allocation2 + $0x30] sm:$0xff]
    %v844 = vld [vmem:[#allocation2 + $0x38] sm:$0xff]
    %v845 = vld [vmem:[#allocation2 + $0x40] sm:$0xff]
    %v846 = vld [vmem:[#allocation2 + $0x48] sm:$0xff]
    %v847 = vld [vmem:[#allocation2 + $0x50] sm:$0xff]
    %v848 = vld [vmem:[#allocation2 + $0x58] sm:$0xff]
    %850 = vset.pattern.permute.xlu0 0
    %851 = vperm.xlu0 %850, %v299
    %v852 = vpop.permute.xlu0 %851
    %855 = vset.pattern.permute.xlu0 0
    %856 = vperm.xlu0 %855, %v300
    %v857 = vpop.permute.xlu0 %856
    %860 = vset.pattern.permute.xlu0 0
    %861 = vperm.xlu0 %860, %v301
    %v862 = vpop.permute.xlu0 %861
    %865 = vset.pattern.permute.xlu0 0
    %866 = vperm.xlu0 %865, %v302
    %v867 = vpop.permute.xlu0 %866
    %v873 = vunpack.c.l.b16 %v283
    %v874 = vunpack.c.l.b16 %v284
    %v875 = vunpack.c.l.b16 %v285
    %v876 = vunpack.c.l.b16 %v286
    %v877 = vpack.c.b16 %v874, %v873
    %v878 = vpack.c.b16 %v876, %v875
    %v880 = vsel %vm573, %v877, 0
    %v883 = vsel %vm573, %v878, 0
    %885 = vmatprep.subr.bf16.mxu0 %v838
    %886 = vmatpush1.bf16.msra.mxu0 %v837
    %887 = vmatprep.subr.bf16.mxu0 %v840
    %888 = vmatpush1.bf16.msra.mxu0 %v839
    %889 = vmatprep.subr.bf16.mxu0 %v842
    %890 = vmatpush1.bf16.msra.mxu0 %v841
    %891 = vmatprep.subr.bf16.mxu0 %v844
    %892 = vmatpush1.bf16.msra.mxu0 %v843
    %893 = vmatprep.subr.bf16.mxu0 %v846
    %894 = vmatpush1.bf16.msra.mxu0 %v845
    %895 = vmatprep.subr.bf16.mxu0 %v848
    %896 = vmatpush1.bf16.msra.mxu0 %v847
    %897 = vmatprep.subr.bf16.mxu0 0
    %898 = vmatpush1.bf16.msra.mxu0 0
    %899 = vmatprep.subr.bf16.mxu0 0
    %900 = vmatpush1.bf16.msra.mxu0 0
    %901 = vmatprep.subr.bf16.mxu0 0
    %902 = vmatpush1.bf16.msra.mxu0 0
    %903 = vmatprep.subr.bf16.mxu0 0
    %904 = vmatpush1.bf16.msra.mxu0 0
    %905 = vmatprep.subr.bf16.mxu0 0
    %906 = vmatpush1.bf16.msra.mxu0 0
    %907 = vmatprep.subr.bf16.mxu0 0
    %908 = vmatpush1.bf16.msra.mxu0 0
    %909 = vmatprep.subr.bf16.mxu0 0
    %910 = vmatpush1.bf16.msra.mxu0 0
    %911 = vmatprep.subr.bf16.mxu0 0
    %912 = vmatpush1.bf16.msra.mxu0 0
    %913 = vmatprep.subr.bf16.mxu0 0
    %914 = vmatpush1.bf16.msra.mxu0 0
    %915 = vmatprep.subr.bf16.mxu0 0
    %916 = vmatpush1.bf16.msra.mxu0 0
    %917 = vmatprep.mubr.bf16.mxu0 0
    %918 = vmatmul.mubr.bf16.gmra.mrb[0].mxu0 %v880
    %v919 = vpop.f32.mrb[0].mxu0
    %v920 = vadd.f32 %v852, %v919
    %v921 = vpop.f32.mrb[0].mxu0
    %v922 = vadd.f32 %v852, %v921
    %v923 = vpop.f32.mrb[0].mxu0
    %v924 = vadd.f32 %v857, %v923
    %v925 = vpop.f32.mrb[0].mxu0
    %v926 = vadd.f32 %v857, %v925
    %927 = vmatprep.mubr.bf16.mxu0 0
    %928 = vmatmul.mubr.bf16.gmra.mrb[0].mxu0 %v883
    %v929 = vpop.f32.mrb[0].mxu0
    %v930 = vadd.f32 %v862, %v929
    %v931 = vpop.f32.mrb[0].mxu0
    %v932 = vadd.f32 %v862, %v931
    %v933 = vpop.f32.mrb[0].mxu0
    %v934 = vadd.f32 %v867, %v933
    %v935 = vpop.f32.mrb[0].mxu0
    %v936 = vadd.f32 %v867, %v935
    %937 = vdwg.mxu0
    %v938 = vmax.f32 %v920, 0.0
    %v939 = vmax.f32 %v922, 0.0
    %v940 = vmax.f32 %v924, 0.0
    %v941 = vmax.f32 %v926, 0.0
    %v942 = vmax.f32 %v930, 0.0
    %v943 = vmax.f32 %v932, 0.0
    %v944 = vmax.f32 %v934, 0.0
    %v945 = vmax.f32 %v936, 0.0
    %v946 = vpack.c.bf16 %v940, %v938
    %v947 = vpack.c.bf16 %v941, %v939
    %v948 = vpack.c.bf16 %v944, %v942
    %v949 = vpack.c.bf16 %v945, %v943
    %951 = vset.pattern.permute.xlu0 0
    %952 = vperm.xlu0 %951, %v331
    %v953 = vpop.permute.xlu0 %952
    %956 = vset.pattern.permute.xlu0 0
    %957 = vperm.xlu0 %956, %v332
    %v958 = vpop.permute.xlu0 %957
    %961 = vset.pattern.permute.xlu0 0
    %962 = vperm.xlu0 %961, %v333
    %v963 = vpop.permute.xlu0 %962
    %966 = vset.pattern.permute.xlu0 0
    %967 = vperm.xlu0 %966, %v334
    %v968 = vpop.permute.xlu0 %967
    %v974 = vunpack.c.l.b16 %v315
    %v975 = vunpack.c.l.b16 %v316
    %v976 = vunpack.c.l.b16 %v317
    %v977 = vunpack.c.l.b16 %v318
    %v978 = vpack.c.b16 %v975, %v974
    %v979 = vpack.c.b16 %v977, %v976
    %v981 = vsel %vm675, %v978, 0
    %v984 = vsel %vm675, %v979, 0
    %986 = vmatprep.subr.bf16.mxu0 %v947
    %987 = vmatpush1.bf16.msra.mxu0 %v946
    %988 = vmatprep.subr.bf16.mxu0 %v949
    %989 = vmatpush1.bf16.msra.mxu0 %v948
    %990 = vmatprep.subr.bf16.mxu0 0
    %991 = vmatpush1.bf16.msra.mxu0 0
    %992 = vmatprep.subr.bf16.mxu0 0
    %993 = vmatpush1.bf16.msra.mxu0 0
    %994 = vmatprep.subr.bf16.mxu0 0
    %995 = vmatpush1.bf16.msra.mxu0 0
    %996 = vmatprep.subr.bf16.mxu0 0
    %997 = vmatpush1.bf16.msra.mxu0 0
    %998 = vmatprep.subr.bf16.mxu0 0
    %999 = vmatpush1.bf16.msra.mxu0 0
    %1000 = vmatprep.subr.bf16.mxu0 0
    %1001 = vmatpush1.bf16.msra.mxu0 0
    %1002 = vmatprep.subr.bf16.mxu0 0
    %1003 = vmatpush1.bf16.msra.mxu0 0
    %1004 = vmatprep.subr.bf16.mxu0 0
    %1005 = vmatpush1.bf16.msra.mxu0 0
    %1006 = vmatprep.subr.bf16.mxu0 0
    %1007 = vmatpush1.bf16.msra.mxu0 0
    %1008 = vmatprep.subr.bf16.mxu0 0
    %1009 = vmatpush1.bf16.msra.mxu0 0
    %1010 = vmatprep.subr.bf16.mxu0 0
    %1011 = vmatpush1.bf16.msra.mxu0 0
    %1012 = vmatprep.subr.bf16.mxu0 0
    %1013 = vmatpush1.bf16.msra.mxu0 0
    %1014 = vmatprep.subr.bf16.mxu0 0
    %1015 = vmatpush1.bf16.msra.mxu0 0
    %1016 = vmatprep.subr.bf16.mxu0 0
    %1017 = vmatpush1.bf16.msra.mxu0 0
    %1018 = vmatprep.mubr.bf16.mxu0 0
    %1019 = vmatmul.mubr.bf16.gmra.mrb[0].mxu0 %v981
    %v1020 = vpop.f32.mrb[0].mxu0
    %v1021 = vadd.f32 %v953, %v1020
    %v1022 = vpop.f32.mrb[0].mxu0
    %v1023 = vadd.f32 %v953, %v1022
    %v1024 = vpop.f32.mrb[0].mxu0
    %v1025 = vadd.f32 %v958, %v1024
    %v1026 = vpop.f32.mrb[0].mxu0
    %v1027 = vadd.f32 %v958, %v1026
    %1028 = vmatprep.mubr.bf16.mxu0 0
    %1029 = vmatmul.mubr.bf16.gmra.mrb[0].mxu0 %v984
    %v1030 = vpop.f32.mrb[0].mxu0
    %v1031 = vadd.f32 %v963, %v1030
    %v1032 = vpop.f32.mrb[0].mxu0
    %v1033 = vadd.f32 %v963, %v1032
    %v1034 = vpop.f32.mrb[0].mxu0
    %v1035 = vadd.f32 %v968, %v1034
    %v1036 = vpop.f32.mrb[0].mxu0
    %v1037 = vadd.f32 %v968, %v1036
    %1038 = vdwg.mxu0
    %v1039 = vadd.f32 %v735, %v1021
    %v1040 = vadd.f32 %v736, %v1023
    %v1041 = vadd.f32 %v737, %v1025
    %v1042 = vadd.f32 %v738, %v1027
    %v1043 = vadd.f32 %v739, %v1031
    %v1044 = vadd.f32 %v740, %v1033
    %v1045 = vadd.f32 %v741, %v1035
    %v1046 = vadd.f32 %v742, %v1037
    %vm1047 = vcmp.ge.s32.totalorder %v265, 4
    %vm1048 = vcmp.ge.s32.totalorder %v266, 4
    %1049 = vrot.lane.b32.xlu0 %v1039, 4
    %v1050 = vpop.permute.xlu0 %1049
    %1051 = vrot.lane.b32.xlu0 %v1041, 4
    %v1052 = vpop.permute.xlu0 %1051
    %1053 = vrot.lane.b32.xlu0 %v1043, 4
    %v1054 = vpop.permute.xlu0 %1053
    %1055 = vrot.lane.b32.xlu0 %v1045, 4
    %v1056 = vpop.permute.xlu0 %1055
    %1057 = vrot.lane.b32.xlu0 %v1040, 4
    %v1058 = vpop.permute.xlu0 %1057
    %1059 = vrot.lane.b32.xlu0 %v1042, 4
    %v1060 = vpop.permute.xlu0 %1059
    %1061 = vrot.lane.b32.xlu0 %v1044, 4
    %v1062 = vpop.permute.xlu0 %1061
    %1063 = vrot.lane.b32.xlu0 %v1046, 4
    %v1064 = vpop.permute.xlu0 %1063
    %vm1065 = vcmp.lt.s32.totalorder %v241, 4
    %v1066 = vsel %vm1065, %v1050, %v1058
    %v1067 = vsel %vm1065, %v1052, %v1060
    %v1068 = vsel %vm1065, %v1054, %v1062
    %v1069 = vsel %vm1065, %v1056, %v1064
    %v1070 = vsel %vm1065, %v1058, %v1050
    %v1071 = vsel %vm1065, %v1060, %v1052
    %v1072 = vsel %vm1065, %v1062, %v1054
    %v1073 = vsel %vm1065, %v1064, %v1056
    %v1074 = vsel %vm1047, %v1070, 0.0
    %v1075 = vsel %vm1048, %v1066, 0.0
    %v1076 = vsel %vm1047, %v1071, 0.0
    %v1077 = vsel %vm1048, %v1067, 0.0
    %v1078 = vsel %vm1047, %v1072, 0.0
    %v1079 = vsel %vm1048, %v1068, 0.0
    %v1080 = vsel %vm1047, %v1073, 0.0
    %v1081 = vsel %vm1048, %v1069, 0.0
    %vm1082 = vcmp.lt.s32.totalorder %v265, 124
    %vm1083 = vcmp.lt.s32.totalorder %v266, 124
    %1084 = vrot.lane.b32.xlu0 %v1039, 124
    %v1085 = vpop.permute.xlu0 %1084
    %1086 = vrot.lane.b32.xlu0 %v1041, 124
    %v1087 = vpop.permute.xlu0 %1086
    %1088 = vrot.lane.b32.xlu0 %v1043, 124
    %v1089 = vpop.permute.xlu0 %1088
    %1090 = vrot.lane.b32.xlu0 %v1045, 124
    %v1091 = vpop.permute.xlu0 %1090
    %1092 = vrot.lane.b32.xlu0 %v1040, 124
    %v1093 = vpop.permute.xlu0 %1092
    %1094 = vrot.lane.b32.xlu0 %v1042, 124
    %v1095 = vpop.permute.xlu0 %1094
    %1096 = vrot.lane.b32.xlu0 %v1044, 124
    %v1097 = vpop.permute.xlu0 %1096
    %1098 = vrot.lane.b32.xlu0 %v1046, 124
    %v1099 = vpop.permute.xlu0 %1098
    %vm1100 = vcmp.lt.s32.totalorder %v241, 124
    %v1101 = vsel %vm1100, %v1085, %v1093
    %v1102 = vsel %vm1100, %v1087, %v1095
    %v1103 = vsel %vm1100, %v1089, %v1097
    %v1104 = vsel %vm1100, %v1091, %v1099
    %v1105 = vsel %vm1100, %v1093, %v1085
    %v1106 = vsel %vm1100, %v1095, %v1087
    %v1107 = vsel %vm1100, %v1097, %v1089
    %v1108 = vsel %vm1100, %v1099, %v1091
    %v1109 = vsel %vm1082, %v1101, 0.0
    %v1110 = vsel %vm1083, %v1105, 0.0
    %v1111 = vsel %vm1082, %v1102, 0.0
    %v1112 = vsel %vm1083, %v1106, 0.0
    %v1113 = vsel %vm1082, %v1103, 0.0
    %v1114 = vsel %vm1083, %v1107, 0.0
    %v1115 = vsel %vm1082, %v1104, 0.0
    %v1116 = vsel %vm1083, %v1108, 0.0
    %v1117 = vpack.c.bf16 %v1076, %v1074
    %v1118 = vpack.c.bf16 %v1077, %v1075
    %v1119 = vpack.c.bf16 %v1080, %v1078
    %v1120 = vpack.c.bf16 %v1081, %v1079
    %1121 = vst [vmem:[#allocation2] sm:$0xff] %v1117
    %1122 = vst [vmem:[#allocation2 + $0x8] sm:$0xff] %v1118
    %1123 = vst [vmem:[#allocation2 + $0x10] sm:$0xff] %v1119
    %1124 = vst [vmem:[#allocation2 + $0x18] sm:$0xff] %v1120
    %v1125 = vpack.c.bf16 %v1041, %v1039
    %v1126 = vpack.c.bf16 %v1042, %v1040
    %v1127 = vpack.c.bf16 %v1045, %v1043
    %v1128 = vpack.c.bf16 %v1046, %v1044
    %1129 = vst [vmem:[#allocation2 + $0x20] sm:$0xff] %v1125
    %1130 = vst [vmem:[#allocation2 + $0x28] sm:$0xff] %v1126
    %1131 = vst [vmem:[#allocation2 + $0x30] sm:$0xff] %v1127
    %1132 = vst [vmem:[#allocation2 + $0x38] sm:$0xff] %v1128
    %v1133 = vpack.c.bf16 %v1111, %v1109
    %v1134 = vpack.c.bf16 %v1112, %v1110
    %v1135 = vpack.c.bf16 %v1115, %v1113
    %v1136 = vpack.c.bf16 %v1116, %v1114
    %1137 = vst [vmem:[#allocation2 + $0x40] sm:$0xff] %v1133
    %1138 = vst [vmem:[#allocation2 + $0x48] sm:$0xff] %v1134
    %1139 = vst [vmem:[#allocation2 + $0x50] sm:$0xff] %v1135
    %1140 = vst [vmem:[#allocation2 + $0x58] sm:$0xff] %v1136
    %v1141 = vld [vmem:[#allocation2] sm:$0xff]
    %v1142 = vld [vmem:[#allocation2 + $0x8] sm:$0xff]
    %v1143 = vld [vmem:[#allocation2 + $0x10] sm:$0xff]
    %v1144 = vld [vmem:[#allocation2 + $0x18] sm:$0xff]
    %v1145 = vld [vmem:[#allocation2 + $0x20] sm:$0xff]
    %v1146 = vld [vmem:[#allocation2 + $0x28] sm:$0xff]
    %v1147 = vld [vmem:[#allocation2 + $0x30] sm:$0xff]
    %v1148 = vld [vmem:[#allocation2 + $0x38] sm:$0xff]
    %v1149 = vld [vmem:[#allocation2 + $0x40] sm:$0xff]
    %v1150 = vld [vmem:[#allocation2 + $0x48] sm:$0xff]
    %v1151 = vld [vmem:[#allocation2 + $0x50] sm:$0xff]
    %v1152 = vld [vmem:[#allocation2 + $0x58] sm:$0xff]
    %1154 = vset.pattern.permute.xlu0 0
    %1155 = vperm.xlu0 %1154, %v303
    %v1156 = vpop.permute.xlu0 %1155
    %1159 = vset.pattern.permute.xlu0 0
    %1160 = vperm.xlu0 %1159, %v304
    %v1161 = vpop.permute.xlu0 %1160
    %1164 = vset.pattern.permute.xlu0 0
    %1165 = vperm.xlu0 %1164, %v305
    %v1166 = vpop.permute.xlu0 %1165
    %1169 = vset.pattern.permute.xlu0 0
    %1170 = vperm.xlu0 %1169, %v306
    %v1171 = vpop.permute.xlu0 %1170
    %v1177 = vunpack.c.l.b16 %v287
    %v1178 = vunpack.c.l.b16 %v288
    %v1179 = vunpack.c.l.b16 %v289
    %v1180 = vunpack.c.l.b16 %v290
    %v1181 = vpack.c.b16 %v1178, %v1177
    %v1182 = vpack.c.b16 %v1180, %v1179
    %v1184 = vsel %vm573, %v1181, 0
    %v1187 = vsel %vm573, %v1182, 0
    %1189 = vmatprep.subr.bf16.mxu0 %v1142
    %1190 = vmatpush1.bf16.msra.mxu0 %v1141
    %1191 = vmatprep.subr.bf16.mxu0 %v1144
    %1192 = vmatpush1.bf16.msra.mxu0 %v1143
    %1193 = vmatprep.subr.bf16.mxu0 %v1146
    %1194 = vmatpush1.bf16.msra.mxu0 %v1145
    %1195 = vmatprep.subr.bf16.mxu0 %v1148
    %1196 = vmatpush1.bf16.msra.mxu0 %v1147
    %1197 = vmatprep.subr.bf16.mxu0 %v1150
    %1198 = vmatpush1.bf16.msra.mxu0 %v1149
    %1199 = vmatprep.subr.bf16.mxu0 %v1152
    %1200 = vmatpush1.bf16.msra.mxu0 %v1151
    %1201 = vmatprep.subr.bf16.mxu0 0
    %1202 = vmatpush1.bf16.msra.mxu0 0
    %1203 = vmatprep.subr.bf16.mxu0 0
    %1204 = vmatpush1.bf16.msra.mxu0 0
    %1205 = vmatprep.subr.bf16.mxu0 0
    %1206 = vmatpush1.bf16.msra.mxu0 0
    %1207 = vmatprep.subr.bf16.mxu0 0
    %1208 = vmatpush1.bf16.msra.mxu0 0
    %1209 = vmatprep.subr.bf16.mxu0 0
    %1210 = vmatpush1.bf16.msra.mxu0 0
    %1211 = vmatprep.subr.bf16.mxu0 0
    %1212 = vmatpush1.bf16.msra.mxu0 0
    %1213 = vmatprep.subr.bf16.mxu0 0
    %1214 = vmatpush1.bf16.msra.mxu0 0
    %1215 = vmatprep.subr.bf16.mxu0 0
    %1216 = vmatpush1.bf16.msra.mxu0 0
    %1217 = vmatprep.subr.bf16.mxu0 0
    %1218 = vmatpush1.bf16.msra.mxu0 0
    %1219 = vmatprep.subr.bf16.mxu0 0
    %1220 = vmatpush1.bf16.msra.mxu0 0
    %1221 = vmatprep.mubr.bf16.mxu0 0
    %1222 = vmatmul.mubr.bf16.gmra.mrb[0].mxu0 %v1184
    %v1223 = vpop.f32.mrb[0].mxu0
    %v1224 = vadd.f32 %v1156, %v1223
    %v1225 = vpop.f32.mrb[0].mxu0
    %v1226 = vadd.f32 %v1156, %v1225
    %v1227 = vpop.f32.mrb[0].mxu0
    %v1228 = vadd.f32 %v1161, %v1227
    %v1229 = vpop.f32.mrb[0].mxu0
    %v1230 = vadd.f32 %v1161, %v1229
    %1231 = vmatprep.mubr.bf16.mxu0 0
    %1232 = vmatmul.mubr.bf16.gmra.mrb[0].mxu0 %v1187
    %v1233 = vpop.f32.mrb[0].mxu0
    %v1234 = vadd.f32 %v1166, %v1233
    %v1235 = vpop.f32.mrb[0].mxu0
    %v1236 = vadd.f32 %v1166, %v1235
    %v1237 = vpop.f32.mrb[0].mxu0
    %v1238 = vadd.f32 %v1171, %v1237
    %v1239 = vpop.f32.mrb[0].mxu0
    %v1240 = vadd.f32 %v1171, %v1239
    %1241 = vdwg.mxu0
    %v1242 = vmax.f32 %v1224, 0.0
    %v1243 = vmax.f32 %v1226, 0.0
    %v1244 = vmax.f32 %v1228, 0.0
    %v1245 = vmax.f32 %v1230, 0.0
    %v1246 = vmax.f32 %v1234, 0.0
    %v1247 = vmax.f32 %v1236, 0.0
    %v1248 = vmax.f32 %v1238, 0.0
    %v1249 = vmax.f32 %v1240, 0.0
    %v1250 = vpack.c.bf16 %v1244, %v1242
    %v1251 = vpack.c.bf16 %v1245, %v1243
    %v1252 = vpack.c.bf16 %v1248, %v1246
    %v1253 = vpack.c.bf16 %v1249, %v1247
    %1255 = vset.pattern.permute.xlu0 0
    %1256 = vperm.xlu0 %1255, %v335
    %v1257 = vpop.permute.xlu0 %1256
    %1260 = vset.pattern.permute.xlu0 0
    %1261 = vperm.xlu0 %1260, %v336
    %v1262 = vpop.permute.xlu0 %1261
    %1265 = vset.pattern.permute.xlu0 0
    %1266 = vperm.xlu0 %1265, %v337
    %v1267 = vpop.permute.xlu0 %1266
    %1270 = vset.pattern.permute.xlu0 0
    %1271 = vperm.xlu0 %1270, %v338
    %v1272 = vpop.permute.xlu0 %1271
    %v1278 = vunpack.c.l.b16 %v319
    %v1279 = vunpack.c.l.b16 %v320
    %v1280 = vunpack.c.l.b16 %v321
    %v1281 = vunpack.c.l.b16 %v322
    %v1282 = vpack.c.b16 %v1279, %v1278
    %v1283 = vpack.c.b16 %v1281, %v1280
    %v1285 = vsel %vm675, %v1282, 0
    %v1288 = vsel %vm675, %v1283, 0
    %1290 = vmatprep.subr.bf16.mxu0 %v1251
    %1291 = vmatpush1.bf16.msra.mxu0 %v1250
    %1292 = vmatprep.subr.bf16.mxu0 %v1253
    %1293 = vmatpush1.bf16.msra.mxu0 %v1252
    %1294 = vmatprep.subr.bf16.mxu0 0
    %1295 = vmatpush1.bf16.msra.mxu0 0
    %1296 = vmatprep.subr.bf16.mxu0 0
    %1297 = vmatpush1.bf16.msra.mxu0 0
    %1298 = vmatprep.subr.bf16.mxu0 0
    %1299 = vmatpush1.bf16.msra.mxu0 0
    %1300 = vmatprep.subr.bf16.mxu0 0
    %1301 = vmatpush1.bf16.msra.mxu0 0
    %1302 = vmatprep.subr.bf16.mxu0 0
    %1303 = vmatpush1.bf16.msra.mxu0 0
    %1304 = vmatprep.subr.bf16.mxu0 0
    %1305 = vmatpush1.bf16.msra.mxu0 0
    %1306 = vmatprep.subr.bf16.mxu0 0
    %1307 = vmatpush1.bf16.msra.mxu0 0
    %1308 = vmatprep.subr.bf16.mxu0 0
    %1309 = vmatpush1.bf16.msra.mxu0 0
    %1310 = vmatprep.subr.bf16.mxu0 0
    %1311 = vmatpush1.bf16.msra.mxu0 0
    %1312 = vmatprep.subr.bf16.mxu0 0
    %1313 = vmatpush1.bf16.msra.mxu0 0
    %1314 = vmatprep.subr.bf16.mxu0 0
    %1315 = vmatpush1.bf16.msra.mxu0 0
    %1316 = vmatprep.subr.bf16.mxu0 0
    %1317 = vmatpush1.bf16.msra.mxu0 0
    %1318 = vmatprep.subr.bf16.mxu0 0
    %1319 = vmatpush1.bf16.msra.mxu0 0
    %1320 = vmatprep.subr.bf16.mxu0 0
    %1321 = vmatpush1.bf16.msra.mxu0 0
    %1322 = vmatprep.mubr.bf16.mxu0 0
    %1323 = vmatmul.mubr.bf16.gmra.mrb[0].mxu0 %v1285
    %v1324 = vpop.f32.mrb[0].mxu0
    %v1325 = vadd.f32 %v1257, %v1324
    %v1326 = vpop.f32.mrb[0].mxu0
    %v1327 = vadd.f32 %v1257, %v1326
    %v1328 = vpop.f32.mrb[0].mxu0
    %v1329 = vadd.f32 %v1262, %v1328
    %v1330 = vpop.f32.mrb[0].mxu0
    %v1331 = vadd.f32 %v1262, %v1330
    %1332 = vmatprep.mubr.bf16.mxu0 0
    %1333 = vmatmul.mubr.bf16.gmra.mrb[0].mxu0 %v1288
    %v1334 = vpop.f32.mrb[0].mxu0
    %v1335 = vadd.f32 %v1267, %v1334
    %v1336 = vpop.f32.mrb[0].mxu0
    %v1337 = vadd.f32 %v1267, %v1336
    %v1338 = vpop.f32.mrb[0].mxu0
    %v1339 = vadd.f32 %v1272, %v1338
    %v1340 = vpop.f32.mrb[0].mxu0
    %v1341 = vadd.f32 %v1272, %v1340
    %1342 = vdwg.mxu0
    %v1343 = vadd.f32 %v1039, %v1325
    %v1344 = vadd.f32 %v1040, %v1327
    %v1345 = vadd.f32 %v1041, %v1329
    %v1346 = vadd.f32 %v1042, %v1331
    %v1347 = vadd.f32 %v1043, %v1335
    %v1348 = vadd.f32 %v1044, %v1337
    %v1349 = vadd.f32 %v1045, %v1339
    %v1350 = vadd.f32 %v1046, %v1341
    %vm1351 = vcmp.ge.s32.totalorder %v265, 8
    %vm1352 = vcmp.ge.s32.totalorder %v266, 8
    %1353 = vrot.lane.b32.xlu0 %v1343, 8
    %v1354 = vpop.permute.xlu0 %1353
    %1355 = vrot.lane.b32.xlu0 %v1345, 8
    %v1356 = vpop.permute.xlu0 %1355
    %1357 = vrot.lane.b32.xlu0 %v1347, 8
    %v1358 = vpop.permute.xlu0 %1357
    %1359 = vrot.lane.b32.xlu0 %v1349, 8
    %v1360 = vpop.permute.xlu0 %1359
    %1361 = vrot.lane.b32.xlu0 %v1344, 8
    %v1362 = vpop.permute.xlu0 %1361
    %1363 = vrot.lane.b32.xlu0 %v1346, 8
    %v1364 = vpop.permute.xlu0 %1363
    %1365 = vrot.lane.b32.xlu0 %v1348, 8
    %v1366 = vpop.permute.xlu0 %1365
    %1367 = vrot.lane.b32.xlu0 %v1350, 8
    %v1368 = vpop.permute.xlu0 %1367
    %vm1369 = vcmp.lt.s32.totalorder %v241, 8
    %v1370 = vsel %vm1369, %v1354, %v1362
    %v1371 = vsel %vm1369, %v1356, %v1364
    %v1372 = vsel %vm1369, %v1358, %v1366
    %v1373 = vsel %vm1369, %v1360, %v1368
    %v1374 = vsel %vm1369, %v1362, %v1354
    %v1375 = vsel %vm1369, %v1364, %v1356
    %v1376 = vsel %vm1369, %v1366, %v1358
    %v1377 = vsel %vm1369, %v1368, %v1360
    %v1378 = vsel %vm1351, %v1374, 0.0
    %v1379 = vsel %vm1352, %v1370, 0.0
    %v1380 = vsel %vm1351, %v1375, 0.0
    %v1381 = vsel %vm1352, %v1371, 0.0
    %v1382 = vsel %vm1351, %v1376, 0.0
    %v1383 = vsel %vm1352, %v1372, 0.0
    %v1384 = vsel %vm1351, %v1377, 0.0
    %v1385 = vsel %vm1352, %v1373, 0.0
    %vm1386 = vcmp.lt.s32.totalorder %v265, 120
    %vm1387 = vcmp.lt.s32.totalorder %v266, 120
    %1388 = vrot.lane.b32.xlu0 %v1343, 120
    %v1389 = vpop.permute.xlu0 %1388
    %1390 = vrot.lane.b32.xlu0 %v1345, 120
    %v1391 = vpop.permute.xlu0 %1390
    %1392 = vrot.lane.b32.xlu0 %v1347, 120
    %v1393 = vpop.permute.xlu0 %1392
    %1394 = vrot.lane.b32.xlu0 %v1349, 120
    %v1395 = vpop.permute.xlu0 %1394
    %1396 = vrot.lane.b32.xlu0 %v1344, 120
    %v1397 = vpop.permute.xlu0 %1396
    %1398 = vrot.lane.b32.xlu0 %v1346, 120
    %v1399 = vpop.permute.xlu0 %1398
    %1400 = vrot.lane.b32.xlu0 %v1348, 120
    %v1401 = vpop.permute.xlu0 %1400
    %1402 = vrot.lane.b32.xlu0 %v1350, 120
    %v1403 = vpop.permute.xlu0 %1402
    %vm1404 = vcmp.lt.s32.totalorder %v241, 120
    %v1405 = vsel %vm1404, %v1389, %v1397
    %v1406 = vsel %vm1404, %v1391, %v1399
    %v1407 = vsel %vm1404, %v1393, %v1401
    %v1408 = vsel %vm1404, %v1395, %v1403
    %v1409 = vsel %vm1404, %v1397, %v1389
    %v1410 = vsel %vm1404, %v1399, %v1391
    %v1411 = vsel %vm1404, %v1401, %v1393
    %v1412 = vsel %vm1404, %v1403, %v1395
    %v1413 = vsel %vm1386, %v1405, 0.0
    %v1414 = vsel %vm1387, %v1409, 0.0
    %v1415 = vsel %vm1386, %v1406, 0.0
    %v1416 = vsel %vm1387, %v1410, 0.0
    %v1417 = vsel %vm1386, %v1407, 0.0
    %v1418 = vsel %vm1387, %v1411, 0.0
    %v1419 = vsel %vm1386, %v1408, 0.0
    %v1420 = vsel %vm1387, %v1412, 0.0
    %v1421 = vpack.c.bf16 %v1380, %v1378
    %v1422 = vpack.c.bf16 %v1381, %v1379
    %v1423 = vpack.c.bf16 %v1384, %v1382
    %v1424 = vpack.c.bf16 %v1385, %v1383
    %1425 = vst [vmem:[#allocation2] sm:$0xff] %v1421
    %1426 = vst [vmem:[#allocation2 + $0x8] sm:$0xff] %v1422
    %1427 = vst [vmem:[#allocation2 + $0x10] sm:$0xff] %v1423
    %1428 = vst [vmem:[#allocation2 + $0x18] sm:$0xff] %v1424
    %v1429 = vpack.c.bf16 %v1345, %v1343
    %v1430 = vpack.c.bf16 %v1346, %v1344
    %v1431 = vpack.c.bf16 %v1349, %v1347
    %v1432 = vpack.c.bf16 %v1350, %v1348
    %1433 = vst [vmem:[#allocation2 + $0x20] sm:$0xff] %v1429
    %1434 = vst [vmem:[#allocation2 + $0x28] sm:$0xff] %v1430
    %1435 = vst [vmem:[#allocation2 + $0x30] sm:$0xff] %v1431
    %1436 = vst [vmem:[#allocation2 + $0x38] sm:$0xff] %v1432
    %v1437 = vpack.c.bf16 %v1415, %v1413
    %v1438 = vpack.c.bf16 %v1416, %v1414
    %v1439 = vpack.c.bf16 %v1419, %v1417
    %v1440 = vpack.c.bf16 %v1420, %v1418
    %1441 = vst [vmem:[#allocation2 + $0x40] sm:$0xff] %v1437
    %1442 = vst [vmem:[#allocation2 + $0x48] sm:$0xff] %v1438
    %1443 = vst [vmem:[#allocation2 + $0x50] sm:$0xff] %v1439
    %1444 = vst [vmem:[#allocation2 + $0x58] sm:$0xff] %v1440
    %v1445 = vld [vmem:[#allocation2] sm:$0xff]
    %v1446 = vld [vmem:[#allocation2 + $0x8] sm:$0xff]
    %v1447 = vld [vmem:[#allocation2 + $0x10] sm:$0xff]
    %v1448 = vld [vmem:[#allocation2 + $0x18] sm:$0xff]
    %v1449 = vld [vmem:[#allocation2 + $0x20] sm:$0xff]
    %v1450 = vld [vmem:[#allocation2 + $0x28] sm:$0xff]
    %v1451 = vld [vmem:[#allocation2 + $0x30] sm:$0xff]
    %v1452 = vld [vmem:[#allocation2 + $0x38] sm:$0xff]
    %v1453 = vld [vmem:[#allocation2 + $0x40] sm:$0xff]
    %v1454 = vld [vmem:[#allocation2 + $0x48] sm:$0xff]
    %v1455 = vld [vmem:[#allocation2 + $0x50] sm:$0xff]
    %v1456 = vld [vmem:[#allocation2 + $0x58] sm:$0xff]
    %1458 = vset.pattern.permute.xlu0 0
    %1459 = vperm.xlu0 %1458, %v307
    %v1460 = vpop.permute.xlu0 %1459
    %1463 = vset.pattern.permute.xlu0 0
    %1464 = vperm.xlu0 %1463, %v308
    %v1465 = vpop.permute.xlu0 %1464
    %1468 = vset.pattern.permute.xlu0 0
    %1469 = vperm.xlu0 %1468, %v309
    %v1470 = vpop.permute.xlu0 %1469
    %1473 = vset.pattern.permute.xlu0 0
    %1474 = vperm.xlu0 %1473, %v310
    %v1475 = vpop.permute.xlu0 %1474
    %v1481 = vunpack.c.l.b16 %v291
    %v1482 = vunpack.c.l.b16 %v292
    %v1483 = vunpack.c.l.b16 %v293
    %v1484 = vunpack.c.l.b16 %v294
    %v1485 = vpack.c.b16 %v1482, %v1481
    %v1486 = vpack.c.b16 %v1484, %v1483
    %v1488 = vsel %vm573, %v1485, 0
    %v1491 = vsel %vm573, %v1486, 0
    %1493 = vmatprep.subr.bf16.mxu0 %v1446
    %1494 = vmatpush1.bf16.msra.mxu0 %v1445
    %1495 = vmatprep.subr.bf16.mxu0 %v1448
    %1496 = vmatpush1.bf16.msra.mxu0 %v1447
    %1497 = vmatprep.subr.bf16.mxu0 %v1450
    %1498 = vmatpush1.bf16.msra.mxu0 %v1449
    %1499 = vmatprep.subr.bf16.mxu0 %v1452
    %1500 = vmatpush1.bf16.msra.mxu0 %v1451
    %1501 = vmatprep.subr.bf16.mxu0 %v1454
    %1502 = vmatpush1.bf16.msra.mxu0 %v1453
    %1503 = vmatprep.subr.bf16.mxu0 %v1456
    %1504 = vmatpush1.bf16.msra.mxu0 %v1455
    %1505 = vmatprep.subr.bf16.mxu0 0
    %1506 = vmatpush1.bf16.msra.mxu0 0
    %1507 = vmatprep.subr.bf16.mxu0 0
    %1508 = vmatpush1.bf16.msra.mxu0 0
    %1509 = vmatprep.subr.bf16.mxu0 0
    %1510 = vmatpush1.bf16.msra.mxu0 0
    %1511 = vmatprep.subr.bf16.mxu0 0
    %1512 = vmatpush1.bf16.msra.mxu0 0
    %1513 = vmatprep.subr.bf16.mxu0 0
    %1514 = vmatpush1.bf16.msra.mxu0 0
    %1515 = vmatprep.subr.bf16.mxu0 0
    %1516 = vmatpush1.bf16.msra.mxu0 0
    %1517 = vmatprep.subr.bf16.mxu0 0
    %1518 = vmatpush1.bf16.msra.mxu0 0
    %1519 = vmatprep.subr.bf16.mxu0 0
    %1520 = vmatpush1.bf16.msra.mxu0 0
    %1521 = vmatprep.subr.bf16.mxu0 0
    %1522 = vmatpush1.bf16.msra.mxu0 0
    %1523 = vmatprep.subr.bf16.mxu0 0
    %1524 = vmatpush1.bf16.msra.mxu0 0
    %1525 = vmatprep.mubr.bf16.mxu0 0
    %1526 = vmatmul.mubr.bf16.gmra.mrb[0].mxu0 %v1488
    %v1527 = vpop.f32.mrb[0].mxu0
    %v1528 = vadd.f32 %v1460, %v1527
    %v1529 = vpop.f32.mrb[0].mxu0
    %v1530 = vadd.f32 %v1460, %v1529
    %v1531 = vpop.f32.mrb[0].mxu0
    %v1532 = vadd.f32 %v1465, %v1531
    %v1533 = vpop.f32.mrb[0].mxu0
    %v1534 = vadd.f32 %v1465, %v1533
    %1535 = vmatprep.mubr.bf16.mxu0 0
    %1536 = vmatmul.mubr.bf16.gmra.mrb[0].mxu0 %v1491
    %v1537 = vpop.f32.mrb[0].mxu0
    %v1538 = vadd.f32 %v1470, %v1537
    %v1539 = vpop.f32.mrb[0].mxu0
    %v1540 = vadd.f32 %v1470, %v1539
    %v1541 = vpop.f32.mrb[0].mxu0
    %v1542 = vadd.f32 %v1475, %v1541
    %v1543 = vpop.f32.mrb[0].mxu0
    %v1544 = vadd.f32 %v1475, %v1543
    %1545 = vdwg.mxu0
    %v1546 = vmax.f32 %v1528, 0.0
    %v1547 = vmax.f32 %v1530, 0.0
    %v1548 = vmax.f32 %v1532, 0.0
    %v1549 = vmax.f32 %v1534, 0.0
    %v1550 = vmax.f32 %v1538, 0.0
    %v1551 = vmax.f32 %v1540, 0.0
    %v1552 = vmax.f32 %v1542, 0.0
    %v1553 = vmax.f32 %v1544, 0.0
    %v1554 = vpack.c.bf16 %v1548, %v1546
    %v1555 = vpack.c.bf16 %v1549, %v1547
    %v1556 = vpack.c.bf16 %v1552, %v1550
    %v1557 = vpack.c.bf16 %v1553, %v1551
    %1559 = vset.pattern.permute.xlu0 0
    %1560 = vperm.xlu0 %1559, %v339
    %v1561 = vpop.permute.xlu0 %1560
    %1564 = vset.pattern.permute.xlu0 0
    %1565 = vperm.xlu0 %1564, %v340
    %v1566 = vpop.permute.xlu0 %1565
    %1569 = vset.pattern.permute.xlu0 0
    %1570 = vperm.xlu0 %1569, %v341
    %v1571 = vpop.permute.xlu0 %1570
    %1574 = vset.pattern.permute.xlu0 0
    %1575 = vperm.xlu0 %1574, %v342
    %v1576 = vpop.permute.xlu0 %1575
    %v1582 = vunpack.c.l.b16 %v323
    %v1583 = vunpack.c.l.b16 %v324
    %v1584 = vunpack.c.l.b16 %v325
    %v1585 = vunpack.c.l.b16 %v326
    %v1586 = vpack.c.b16 %v1583, %v1582
    %v1587 = vpack.c.b16 %v1585, %v1584
    %v1589 = vsel %vm675, %v1586, 0
    %v1592 = vsel %vm675, %v1587, 0
    %1594 = vmatprep.subr.bf16.mxu0 %v1555
    %1595 = vmatpush1.bf16.msra.mxu0 %v1554
    %1596 = vmatprep.subr.bf16.mxu0 %v1557
    %1597 = vmatpush1.bf16.msra.mxu0 %v1556
    %1598 = vmatprep.subr.bf16.mxu0 0
    %1599 = vmatpush1.bf16.msra.mxu0 0
    %1600 = vmatprep.subr.bf16.mxu0 0
    %1601 = vmatpush1.bf16.msra.mxu0 0
    %1602 = vmatprep.subr.bf16.mxu0 0
    %1603 = vmatpush1.bf16.msra.mxu0 0
    %1604 = vmatprep.subr.bf16.mxu0 0
    %1605 = vmatpush1.bf16.msra.mxu0 0
    %1606 = vmatprep.subr.bf16.mxu0 0
    %1607 = vmatpush1.bf16.msra.mxu0 0
    %1608 = vmatprep.subr.bf16.mxu0 0
    %1609 = vmatpush1.bf16.msra.mxu0 0
    %1610 = vmatprep.subr.bf16.mxu0 0
    %1611 = vmatpush1.bf16.msra.mxu0 0
    %1612 = vmatprep.subr.bf16.mxu0 0
    %1613 = vmatpush1.bf16.msra.mxu0 0
    %1614 = vmatprep.subr.bf16.mxu0 0
    %1615 = vmatpush1.bf16.msra.mxu0 0
    %1616 = vmatprep.subr.bf16.mxu0 0
    %1617 = vmatpush1.bf16.msra.mxu0 0
    %1618 = vmatprep.subr.bf16.mxu0 0
    %1619 = vmatpush1.bf16.msra.mxu0 0
    %1620 = vmatprep.subr.bf16.mxu0 0
    %1621 = vmatpush1.bf16.msra.mxu0 0
    %1622 = vmatprep.subr.bf16.mxu0 0
    %1623 = vmatpush1.bf16.msra.mxu0 0
    %1624 = vmatprep.subr.bf16.mxu0 0
    %1625 = vmatpush1.bf16.msra.mxu0 0
    %1626 = vmatprep.mubr.bf16.mxu0 0
    %1627 = vmatmul.mubr.bf16.gmra.mrb[0].mxu0 %v1589
    %v1628 = vpop.f32.mrb[0].mxu0
    %v1629 = vadd.f32 %v1561, %v1628
    %v1630 = vpop.f32.mrb[0].mxu0
    %v1631 = vadd.f32 %v1561, %v1630
    %v1632 = vpop.f32.mrb[0].mxu0
    %v1633 = vadd.f32 %v1566, %v1632
    %v1634 = vpop.f32.mrb[0].mxu0
    %v1635 = vadd.f32 %v1566, %v1634
    %1636 = vmatprep.mubr.bf16.mxu0 0
    %1637 = vmatmul.mubr.bf16.gmra.mrb[0].mxu0 %v1592
    %v1638 = vpop.f32.mrb[0].mxu0
    %v1639 = vadd.f32 %v1571, %v1638
    %v1640 = vpop.f32.mrb[0].mxu0
    %v1641 = vadd.f32 %v1571, %v1640
    %v1642 = vpop.f32.mrb[0].mxu0
    %v1643 = vadd.f32 %v1576, %v1642
    %v1644 = vpop.f32.mrb[0].mxu0
    %v1645 = vadd.f32 %v1576, %v1644
    %1646 = vdwg.mxu0
    %v1647 = vadd.f32 %v1343, %v1629
    %v1648 = vadd.f32 %v1344, %v1631
    %v1649 = vadd.f32 %v1345, %v1633
    %v1650 = vadd.f32 %v1346, %v1635
    %v1651 = vadd.f32 %v1347, %v1639
    %v1652 = vadd.f32 %v1348, %v1641
    %v1653 = vadd.f32 %v1349, %v1643
    %v1654 = vadd.f32 %v1350, %v1645
    %v1655 = vpack.c.bf16 %v1649, %v1647
    %v1656 = vpack.c.bf16 %v1650, %v1648
    %v1657 = vpack.c.bf16 %v1653, %v1651
    %v1658 = vpack.c.bf16 %v1654, %v1652
    %1660 = vset.pattern.permute.xlu0 0
    %1661 = vperm.xlu0 %1660, %v344
    %v1662 = vpop.permute.xlu0 %1661
    %v1665 = vsel %vm675, %v343, 0
    %1667 = vmatprep.subr.bf16.mxu0 %v1656
    %1668 = vmatpush1.bf16.msra.mxu0 %v1655
    %1669 = vmatprep.subr.bf16.mxu0 %v1658
    %1670 = vmatpush1.bf16.msra.mxu0 %v1657
    %1671 = vmatprep.subr.bf16.mxu0 0
    %1672 = vmatpush1.bf16.msra.mxu0 0
    %1673 = vmatprep.subr.bf16.mxu0 0
    %1674 = vmatpush1.bf16.msra.mxu0 0
    %1675 = vmatprep.subr.bf16.mxu0 0
    %1676 = vmatpush1.bf16.msra.mxu0 0
    %1677 = vmatprep.subr.bf16.mxu0 0
    %1678 = vmatpush1.bf16.msra.mxu0 0
    %1679 = vmatprep.subr.bf16.mxu0 0
    %1680 = vmatpush1.bf16.msra.mxu0 0
    %1681 = vmatprep.subr.bf16.mxu0 0
    %1682 = vmatpush1.bf16.msra.mxu0 0
    %1683 = vmatprep.subr.bf16.mxu0 0
    %1684 = vmatpush1.bf16.msra.mxu0 0
    %1685 = vmatprep.subr.bf16.mxu0 0
    %1686 = vmatpush1.bf16.msra.mxu0 0
    %1687 = vmatprep.subr.bf16.mxu0 0
    %1688 = vmatpush1.bf16.msra.mxu0 0
    %1689 = vmatprep.subr.bf16.mxu0 0
    %1690 = vmatpush1.bf16.msra.mxu0 0
    %1691 = vmatprep.subr.bf16.mxu0 0
    %1692 = vmatpush1.bf16.msra.mxu0 0
    %1693 = vmatprep.subr.bf16.mxu0 0
    %1694 = vmatpush1.bf16.msra.mxu0 0
    %1695 = vmatprep.subr.bf16.mxu0 0
    %1696 = vmatpush1.bf16.msra.mxu0 0
    %1697 = vmatprep.subr.bf16.mxu0 0
    %1698 = vmatpush1.bf16.msra.mxu0 0
    %1699 = vmatprep.mubr.bf16.mxu0 0
    %1700 = vmatmul.mubr.bf16.gmra.mrb[0].mxu0 %v1665
    %v1701 = vpop.f32.mrb[0].mxu0
    %v1702 = vadd.f32 %v1662, %v1701
    %v1703 = vpop.f32.mrb[0].mxu0
    %v1704 = vadd.f32 %v1662, %v1703
    %v1705 = vpop.f32.mrb[0].mxu0
    %v1706 = vpop.f32.mrb[0].mxu0
    %1707 = vdwg.mxu0
    %1708 = vst [vmem:[#allocation26] sm:$0xff] %v1702
    %1709 = vst [vmem:[#allocation26 + $0x8] sm:$0xff] %v1704
    %v1710 = vld [vmem:[#allocation17] sm:$0xf]
    %v1711 = vld [vmem:[#allocation17 + $0x4] sm:$0xf]
    %v1712 = vld [vmem:[#allocation17 + $0x8] sm:$0xf]
    %v1713 = vld [vmem:[#allocation17 + $0xc] sm:$0xf]
    %v1714 = vld [vmem:[#allocation18] sm:$0xff]
    %v1715 = vld [vmem:[#allocation18 + $0x8] sm:$0xff]
    %v1716 = vld [vmem:[#allocation18 + $0x10] sm:$0xff]
    %v1717 = vld [vmem:[#allocation18 + $0x18] sm:$0xff]
    %v1718 = vld [vmem:[%s11] sm:$0xf]
    %v1719 = vld [vmem:[%s11 + $0x4] sm:$0xf]
    %v1720 = vld [vmem:[%s11 + $0x8] sm:$0xf]
    %v1721 = vld [vmem:[%s11 + $0xc] sm:$0xf]
    %v1722 = vld [vmem:[%s11 + $0x10] sm:$0xf]
    %v1723 = vld [vmem:[%s11 + $0x14] sm:$0xf]
    %v1724 = vld [vmem:[%s11 + $0x18] sm:$0xf]
    %v1725 = vld [vmem:[%s11 + $0x1c] sm:$0xf]
    %v1726 = vld [vmem:[%s11 + $0x20] sm:$0xf]
    %v1727 = vld [vmem:[%s11 + $0x24] sm:$0xf]
    %v1728 = vld [vmem:[%s11 + $0x28] sm:$0xf]
    %v1729 = vld [vmem:[%s11 + $0x2c] sm:$0xf]
    %v1730 = vld [vmem:[%s11 + $0x30] sm:$0xf]
    %v1731 = vld [vmem:[%s11 + $0x34] sm:$0xf]
    %v1732 = vld [vmem:[%s11 + $0x38] sm:$0xf]
    %v1733 = vld [vmem:[%s11 + $0x3c] sm:$0xf]
    %v1734 = vld [vmem:[#allocation20] sm:$0xff]
    %v1735 = vld [vmem:[#allocation20 + $0x8] sm:$0xff]
    %v1736 = vld [vmem:[#allocation20 + $0x10] sm:$0xff]
    %v1737 = vld [vmem:[#allocation20 + $0x18] sm:$0xff]
    %v1738 = vld [vmem:[#allocation20 + $0x20] sm:$0xff]
    %v1739 = vld [vmem:[#allocation20 + $0x28] sm:$0xff]
    %v1740 = vld [vmem:[#allocation20 + $0x30] sm:$0xff]
    %v1741 = vld [vmem:[#allocation20 + $0x38] sm:$0xff]
    %v1742 = vld [vmem:[#allocation20 + $0x40] sm:$0xff]
    %v1743 = vld [vmem:[#allocation20 + $0x48] sm:$0xff]
    %v1744 = vld [vmem:[#allocation20 + $0x50] sm:$0xff]
    %v1745 = vld [vmem:[#allocation20 + $0x58] sm:$0xff]
    %v1746 = vld [vmem:[#allocation20 + $0x60] sm:$0xff]
    %v1747 = vld [vmem:[#allocation20 + $0x68] sm:$0xff]
    %v1748 = vld [vmem:[#allocation20 + $0x70] sm:$0xff]
    %v1749 = vld [vmem:[#allocation20 + $0x78] sm:$0xff]
    %v1750 = vld [vmem:[%s13] sm:$0xf]
    %v1751 = vld [vmem:[%s13 + $0x4] sm:$0xf]
    %v1752 = vld [vmem:[%s13 + $0x8] sm:$0xf]
    %v1753 = vld [vmem:[%s13 + $0xc] sm:$0xf]
    %v1754 = vld [vmem:[%s13 + $0x10] sm:$0xf]
    %v1755 = vld [vmem:[%s13 + $0x14] sm:$0xf]
    %v1756 = vld [vmem:[%s13 + $0x18] sm:$0xf]
    %v1757 = vld [vmem:[%s13 + $0x1c] sm:$0xf]
    %v1758 = vld [vmem:[%s13 + $0x20] sm:$0xf]
    %v1759 = vld [vmem:[%s13 + $0x24] sm:$0xf]
    %v1760 = vld [vmem:[%s13 + $0x28] sm:$0xf]
    %v1761 = vld [vmem:[%s13 + $0x2c] sm:$0xf]
    %v1762 = vld [vmem:[%s13 + $0x30] sm:$0xf]
    %v1763 = vld [vmem:[%s13 + $0x34] sm:$0xf]
    %v1764 = vld [vmem:[%s13 + $0x38] sm:$0xf]
    %v1765 = vld [vmem:[%s13 + $0x3c] sm:$0xf]
    %v1766 = vld [vmem:[#allocation21] sm:$0xff]
    %v1767 = vld [vmem:[#allocation21 + $0x8] sm:$0xff]
    %v1768 = vld [vmem:[#allocation21 + $0x10] sm:$0xff]
    %v1769 = vld [vmem:[#allocation21 + $0x18] sm:$0xff]
    %v1770 = vld [vmem:[#allocation21 + $0x20] sm:$0xff]
    %v1771 = vld [vmem:[#allocation21 + $0x28] sm:$0xff]
    %v1772 = vld [vmem:[#allocation21 + $0x30] sm:$0xff]
    %v1773 = vld [vmem:[#allocation21 + $0x38] sm:$0xff]
    %v1774 = vld [vmem:[#allocation21 + $0x40] sm:$0xff]
    %v1775 = vld [vmem:[#allocation21 + $0x48] sm:$0xff]
    %v1776 = vld [vmem:[#allocation21 + $0x50] sm:$0xff]
    %v1777 = vld [vmem:[#allocation21 + $0x58] sm:$0xff]
    %v1778 = vld [vmem:[#allocation21 + $0x60] sm:$0xff]
    %v1779 = vld [vmem:[#allocation21 + $0x68] sm:$0xff]
    %v1780 = vld [vmem:[#allocation21 + $0x70] sm:$0xff]
    %v1781 = vld [vmem:[#allocation21 + $0x78] sm:$0xff]
    %v1782 = vld [vmem:[#allocation23] sm:$0xf]
    %v1783 = vld [vmem:[#allocation24] sm:$0xff]
    %v1784 = vrot.slane %v1702, 4
    %v1785 = vmax.f32 %v1702, %v1784
    %v1786 = vrot.slane %v1785, 2
    %v1787 = vmax.f32 %v1785, %v1786
    %v1788 = vrot.slane %v1787, 1
    %v1789 = vmax.f32 %v1787, %v1788
    %v1790 = vrot.slane %v1704, 4
    %v1791 = vmax.f32 %v1704, %v1790
    %v1792 = vrot.slane %v1791, 2
    %v1793 = vmax.f32 %v1791, %v1792
    %v1794 = vrot.slane %v1793, 1
    %v1795 = vmax.f32 %v1793, %v1794
    %v1796 = vsub.f32 %v1702, %v1789
    %v1797 = vsub.f32 %v1704, %v1795
    %v1798 = vmul.f32 %v1796, 1.442695
    %v1799 = vpow.pop %v1798
    %v1800 = vmul.f32 %v1797, 1.442695
    %v1801 = vpow.pop %v1800
    %v1802 = vrot.slane %v1799, 4
    %v1803 = vadd.f32 %v1799, %v1802
    %v1804 = vrot.slane %v1803, 2
    %v1805 = vadd.f32 %v1803, %v1804
    %v1806 = vrot.slane %v1805, 1
    %v1807 = vadd.f32 %v1805, %v1806
    %v1808 = vrot.slane %v1801, 4
    %v1809 = vadd.f32 %v1801, %v1808
    %v1810 = vrot.slane %v1809, 2
    %v1811 = vadd.f32 %v1809, %v1810
    %v1812 = vrot.slane %v1811, 1
    %v1813 = vadd.f32 %v1811, %v1812
    %v1814 = vrcp.pop %v1807
    %v1815 = vrcp.pop %v1813
    %v1816 = vmul.f32 %v1799, %v1814
    %v1817 = vmul.f32 %v1801, %v1815
    %v1818 = vpack.c.bf16 %v1816, %v1816
    %v1819 = vpack.c.bf16 %v1817, %v1817
    %1821 = vset.pattern.permute.xlu0 0
    %1822 = vperm.xlu0 %1821, %v1714
    %v1823 = vpop.permute.xlu0 %1822
    %1826 = vset.pattern.permute.xlu0 0
    %1827 = vperm.xlu0 %1826, %v1715
    %v1828 = vpop.permute.xlu0 %1827
    %1831 = vset.pattern.permute.xlu0 0
    %1832 = vperm.xlu0 %1831, %v1716
    %v1833 = vpop.permute.xlu0 %1832
    %1836 = vset.pattern.permute.xlu0 0
    %1837 = vperm.xlu0 %1836, %v1717
    %v1838 = vpop.permute.xlu0 %1837
    %v1844 = vunpack.c.l.b16 %v1710
    %v1845 = vunpack.c.l.b16 %v1711
    %v1846 = vunpack.c.l.b16 %v1712
    %v1847 = vunpack.c.l.b16 %v1713
    %v1848 = vpack.c.b16 %v1845, %v1844
    %v1849 = vpack.c.b16 %v1847, %v1846
    %vm1850 = vcmask 64512
    %v1852 = vsel %vm1850, %v1848, 0
    %v1855 = vsel %vm1850, %v1849, 0
    %vm1857 = vcmask 1043456
    %v1859 = vsel %vm1857, %v1818, 0
    %v1862 = vsel %vm1857, %v1819, 0
    %1864 = vmatprep.subr.bf16.mxu0 %v1862
    %1865 = vmatpush1.bf16.msra.mxu0 %v1859
    %1866 = vmatprep.subr.bf16.mxu0 0
    %1867 = vmatpush1.bf16.msra.mxu0 0
    %1868 = vmatprep.subr.bf16.mxu0 0
    %1869 = vmatpush1.bf16.msra.mxu0 0
    %1870 = vmatprep.subr.bf16.mxu0 0
    %1871 = vmatpush1.bf16.msra.mxu0 0
    %1872 = vmatprep.subr.bf16.mxu0 0
    %1873 = vmatpush1.bf16.msra.mxu0 0
    %1874 = vmatprep.subr.bf16.mxu0 0
    %1875 = vmatpush1.bf16.msra.mxu0 0
    %1876 = vmatprep.subr.bf16.mxu0 0
    %1877 = vmatpush1.bf16.msra.mxu0 0
    %1878 = vmatprep.subr.bf16.mxu0 0
    %1879 = vmatpush1.bf16.msra.mxu0 0
    %1880 = vmatprep.subr.bf16.mxu0 0
    %1881 = vmatpush1.bf16.msra.mxu0 0
    %1882 = vmatprep.subr.bf16.mxu0 0
    %1883 = vmatpush1.bf16.msra.mxu0 0
    %1884 = vmatprep.subr.bf16.mxu0 0
    %1885 = vmatpush1.bf16.msra.mxu0 0
    %1886 = vmatprep.subr.bf16.mxu0 0
    %1887 = vmatpush1.bf16.msra.mxu0 0
    %1888 = vmatprep.subr.bf16.mxu0 0
    %1889 = vmatpush1.bf16.msra.mxu0 0
    %1890 = vmatprep.subr.bf16.mxu0 0
    %1891 = vmatpush1.bf16.msra.mxu0 0
    %1892 = vmatprep.subr.bf16.mxu0 0
    %1893 = vmatpush1.bf16.msra.mxu0 0
    %1894 = vmatprep.subr.bf16.mxu0 0
    %1895 = vmatpush1.bf16.msra.mxu0 0
    %1896 = vmatprep.mubr.bf16.mxu0 0
    %1897 = vmatmul.mubr.bf16.gmra.mrb[0].mxu0 %v1852
    %v1898 = vpop.f32.mrb[0].mxu0
    %v1899 = vadd.f32 %v1823, %v1898
    %v1900 = vpop.f32.mrb[0].mxu0
    %v1901 = vadd.f32 %v1823, %v1900
    %v1902 = vpop.f32.mrb[0].mxu0
    %v1903 = vadd.f32 %v1828, %v1902
    %v1904 = vpop.f32.mrb[0].mxu0
    %v1905 = vadd.f32 %v1828, %v1904
    %1906 = vmatprep.mubr.bf16.mxu0 0
    %1907 = vmatmul.mubr.bf16.gmra.mrb[0].mxu0 %v1855
    %v1908 = vpop.f32.mrb[0].mxu0
    %v1909 = vadd.f32 %v1833, %v1908
    %v1910 = vpop.f32.mrb[0].mxu0
    %v1911 = vadd.f32 %v1833, %v1910
    %v1912 = vpop.f32.mrb[0].mxu0
    %v1913 = vadd.f32 %v1838, %v1912
    %v1914 = vpop.f32.mrb[0].mxu0
    %v1915 = vadd.f32 %v1838, %v1914
    %1916 = vdwg.mxu0
    %1917 = vrot.lane.b32.xlu0 %v1899, 1
    %v1918 = vpop.permute.xlu0 %1917
    %1919 = vrot.lane.b32.xlu0 %v1903, 1
    %v1920 = vpop.permute.xlu0 %1919
    %1921 = vrot.lane.b32.xlu0 %v1909, 1
    %v1922 = vpop.permute.xlu0 %1921
    %1923 = vrot.lane.b32.xlu0 %v1913, 1
    %v1924 = vpop.permute.xlu0 %1923
    %1925 = vrot.lane.b32.xlu0 %v1901, 1
    %v1926 = vpop.permute.xlu0 %1925
    %1927 = vrot.lane.b32.xlu0 %v1905, 1
    %v1928 = vpop.permute.xlu0 %1927
    %1929 = vrot.lane.b32.xlu0 %v1911, 1
    %v1930 = vpop.permute.xlu0 %1929
    %1931 = vrot.lane.b32.xlu0 %v1915, 1
    %v1932 = vpop.permute.xlu0 %1931
    %v1933 = vsel %vm455, %v1918, %v1926
    %v1934 = vsel %vm455, %v1920, %v1928
    %v1935 = vsel %vm455, %v1922, %v1930
    %v1936 = vsel %vm455, %v1924, %v1932
    %v1937 = vsel %vm455, %v1926, %v1918
    %v1938 = vsel %vm455, %v1928, %v1920
    %v1939 = vsel %vm455, %v1930, %v1922
    %v1940 = vsel %vm455, %v1932, %v1924
    %v1941 = vsel %vm437, %v1937, 0.0
    %v1942 = vsel %vm438, %v1933, 0.0
    %v1943 = vsel %vm437, %v1938, 0.0
    %v1944 = vsel %vm438, %v1934, 0.0
    %v1945 = vsel %vm437, %v1939, 0.0
    %v1946 = vsel %vm438, %v1935, 0.0
    %v1947 = vsel %vm437, %v1940, 0.0
    %v1948 = vsel %vm438, %v1936, 0.0
    %1949 = vrot.lane.b32.xlu0 %v1899, 127
    %v1950 = vpop.permute.xlu0 %1949
    %1951 = vrot.lane.b32.xlu0 %v1903, 127
    %v1952 = vpop.permute.xlu0 %1951
    %1953 = vrot.lane.b32.xlu0 %v1909, 127
    %v1954 = vpop.permute.xlu0 %1953
    %1955 = vrot.lane.b32.xlu0 %v1913, 127
    %v1956 = vpop.permute.xlu0 %1955
    %1957 = vrot.lane.b32.xlu0 %v1901, 127
    %v1958 = vpop.permute.xlu0 %1957
    %1959 = vrot.lane.b32.xlu0 %v1905, 127
    %v1960 = vpop.permute.xlu0 %1959
    %1961 = vrot.lane.b32.xlu0 %v1911, 127
    %v1962 = vpop.permute.xlu0 %1961
    %1963 = vrot.lane.b32.xlu0 %v1915, 127
    %v1964 = vpop.permute.xlu0 %1963
    %v1965 = vsel %vm490, %v1950, %v1958
    %v1966 = vsel %vm490, %v1952, %v1960
    %v1967 = vsel %vm490, %v1954, %v1962
    %v1968 = vsel %vm490, %v1956, %v1964
    %v1969 = vsel %vm490, %v1958, %v1950
    %v1970 = vsel %vm490, %v1960, %v1952
    %v1971 = vsel %vm490, %v1962, %v1954
    %v1972 = vsel %vm490, %v1964, %v1956
    %v1973 = vsel %vm472, %v1965, 0.0
    %v1974 = vsel %vm473, %v1969, 0.0
    %v1975 = vsel %vm472, %v1966, 0.0
    %v1976 = vsel %vm473, %v1970, 0.0
    %v1977 = vsel %vm472, %v1967, 0.0
    %v1978 = vsel %vm473, %v1971, 0.0
    %v1979 = vsel %vm472, %v1968, 0.0
    %v1980 = vsel %vm473, %v1972, 0.0
    %v1981 = vpack.c.bf16 %v1943, %v1941
    %v1982 = vpack.c.bf16 %v1944, %v1942
    %v1983 = vpack.c.bf16 %v1947, %v1945
    %v1984 = vpack.c.bf16 %v1948, %v1946
    %1985 = vst [vmem:[#allocation2] sm:$0xff] %v1981
    %1986 = vst [vmem:[#allocation2 + $0x8] sm:$0xff] %v1982
    %1987 = vst [vmem:[#allocation2 + $0x10] sm:$0xff] %v1983
    %1988 = vst [vmem:[#allocation2 + $0x18] sm:$0xff] %v1984
    %v1989 = vpack.c.bf16 %v1903, %v1899
    %v1990 = vpack.c.bf16 %v1905, %v1901
    %v1991 = vpack.c.bf16 %v1913, %v1909
    %v1992 = vpack.c.bf16 %v1915, %v1911
    %1993 = vst [vmem:[#allocation2 + $0x20] sm:$0xff] %v1989
    %1994 = vst [vmem:[#allocation2 + $0x28] sm:$0xff] %v1990
    %1995 = vst [vmem:[#allocation2 + $0x30] sm:$0xff] %v1991
    %1996 = vst [vmem:[#allocation2 + $0x38] sm:$0xff] %v1992
    %v1997 = vpack.c.bf16 %v1975, %v1973
    %v1998 = vpack.c.bf16 %v1976, %v1974
    %v1999 = vpack.c.bf16 %v1979, %v1977
    %v2000 = vpack.c.bf16 %v1980, %v1978
    %2001 = vst [vmem:[#allocation2 + $0x40] sm:$0xff] %v1997
    %2002 = vst [vmem:[#allocation2 + $0x48] sm:$0xff] %v1998
    %2003 = vst [vmem:[#allocation2 + $0x50] sm:$0xff] %v1999
    %2004 = vst [vmem:[#allocation2 + $0x58] sm:$0xff] %v2000
    %v2005 = vld [vmem:[#allocation2] sm:$0xff]
    %v2006 = vld [vmem:[#allocation2 + $0x8] sm:$0xff]
    %v2007 = vld [vmem:[#allocation2 + $0x10] sm:$0xff]
    %v2008 = vld [vmem:[#allocation2 + $0x18] sm:$0xff]
    %v2009 = vld [vmem:[#allocation2 + $0x20] sm:$0xff]
    %v2010 = vld [vmem:[#allocation2 + $0x28] sm:$0xff]
    %v2011 = vld [vmem:[#allocation2 + $0x30] sm:$0xff]
    %v2012 = vld [vmem:[#allocation2 + $0x38] sm:$0xff]
    %v2013 = vld [vmem:[#allocation2 + $0x40] sm:$0xff]
    %v2014 = vld [vmem:[#allocation2 + $0x48] sm:$0xff]
    %v2015 = vld [vmem:[#allocation2 + $0x50] sm:$0xff]
    %v2016 = vld [vmem:[#allocation2 + $0x58] sm:$0xff]
    %2018 = vset.pattern.permute.xlu0 0
    %2019 = vperm.xlu0 %2018, %v1734
    %v2020 = vpop.permute.xlu0 %2019
    %2023 = vset.pattern.permute.xlu0 0
    %2024 = vperm.xlu0 %2023, %v1735
    %v2025 = vpop.permute.xlu0 %2024
    %2028 = vset.pattern.permute.xlu0 0
    %2029 = vperm.xlu0 %2028, %v1736
    %v2030 = vpop.permute.xlu0 %2029
    %2033 = vset.pattern.permute.xlu0 0
    %2034 = vperm.xlu0 %2033, %v1737
    %v2035 = vpop.permute.xlu0 %2034
    %v2041 = vunpack.c.l.b16 %v1718
    %v2042 = vunpack.c.l.b16 %v1719
    %v2043 = vunpack.c.l.b16 %v1720
    %v2044 = vunpack.c.l.b16 %v1721
    %v2045 = vpack.c.b16 %v2042, %v2041
    %v2046 = vpack.c.b16 %v2044, %v2043
    %v2048 = vsel %vm573, %v2045, 0
    %v2051 = vsel %vm573, %v2046, 0
    %2053 = vmatprep.subr.bf16.mxu0 %v2006
    %2054 = vmatpush1.bf16.msra.mxu0 %v2005
    %2055 = vmatprep.subr.bf16.mxu0 %v2008
    %2056 = vmatpush1.bf16.msra.mxu0 %v2007
    %2057 = vmatprep.subr.bf16.mxu0 %v2010
    %2058 = vmatpush1.bf16.msra.mxu0 %v2009
    %2059 = vmatprep.subr.bf16.mxu0 %v2012
    %2060 = vmatpush1.bf16.msra.mxu0 %v2011
    %2061 = vmatprep.subr.bf16.mxu0 %v2014
    %2062 = vmatpush1.bf16.msra.mxu0 %v2013
    %2063 = vmatprep.subr.bf16.mxu0 %v2016
    %2064 = vmatpush1.bf16.msra.mxu0 %v2015
    %2065 = vmatprep.subr.bf16.mxu0 0
    %2066 = vmatpush1.bf16.msra.mxu0 0
    %2067 = vmatprep.subr.bf16.mxu0 0
    %2068 = vmatpush1.bf16.msra.mxu0 0
    %2069 = vmatprep.subr.bf16.mxu0 0
    %2070 = vmatpush1.bf16.msra.mxu0 0
    %2071 = vmatprep.subr.bf16.mxu0 0
    %2072 = vmatpush1.bf16.msra.mxu0 0
    %2073 = vmatprep.subr.bf16.mxu0 0
    %2074 = vmatpush1.bf16.msra.mxu0 0
    %2075 = vmatprep.subr.bf16.mxu0 0
    %2076 = vmatpush1.bf16.msra.mxu0 0
    %2077 = vmatprep.subr.bf16.mxu0 0
    %2078 = vmatpush1.bf16.msra.mxu0 0
    %2079 = vmatprep.subr.bf16.mxu0 0
    %2080 = vmatpush1.bf16.msra.mxu0 0
    %2081 = vmatprep.subr.bf16.mxu0 0
    %2082 = vmatpush1.bf16.msra.mxu0 0
    %2083 = vmatprep.subr.bf16.mxu0 0
    %2084 = vmatpush1.bf16.msra.mxu0 0
    %2085 = vmatprep.mubr.bf16.mxu0 0
    %2086 = vmatmul.mubr.bf16.gmra.mrb[0].mxu0 %v2048
    %v2087 = vpop.f32.mrb[0].mxu0
    %v2088 = vadd.f32 %v2020, %v2087
    %v2089 = vpop.f32.mrb[0].mxu0
    %v2090 = vadd.f32 %v2020, %v2089
    %v2091 = vpop.f32.mrb[0].mxu0
    %v2092 = vadd.f32 %v2025, %v2091
    %v2093 = vpop.f32.mrb[0].mxu0
    %v2094 = vadd.f32 %v2025, %v2093
    %2095 = vmatprep.mubr.bf16.mxu0 0
    %2096 = vmatmul.mubr.bf16.gmra.mrb[0].mxu0 %v2051
    %v2097 = vpop.f32.mrb[0].mxu0
    %v2098 = vadd.f32 %v2030, %v2097
    %v2099 = vpop.f32.mrb[0].mxu0
    %v2100 = vadd.f32 %v2030, %v2099
    %v2101 = vpop.f32.mrb[0].mxu0
    %v2102 = vadd.f32 %v2035, %v2101
    %v2103 = vpop.f32.mrb[0].mxu0
    %v2104 = vadd.f32 %v2035, %v2103
    %2105 = vdwg.mxu0
    %v2106 = vmax.f32 %v2088, 0.0
    %v2107 = vmax.f32 %v2090, 0.0
    %v2108 = vmax.f32 %v2092, 0.0
    %v2109 = vmax.f32 %v2094, 0.0
    %v2110 = vmax.f32 %v2098, 0.0
    %v2111 = vmax.f32 %v2100, 0.0
    %v2112 = vmax.f32 %v2102, 0.0
    %v2113 = vmax.f32 %v2104, 0.0
    %v2114 = vpack.c.bf16 %v2108, %v2106
    %v2115 = vpack.c.bf16 %v2109, %v2107
    %v2116 = vpack.c.bf16 %v2112, %v2110
    %v2117 = vpack.c.bf16 %v2113, %v2111
    %2119 = vset.pattern.permute.xlu0 0
    %2120 = vperm.xlu0 %2119, %v1766
    %v2121 = vpop.permute.xlu0 %2120
    %2124 = vset.pattern.permute.xlu0 0
    %2125 = vperm.xlu0 %2124, %v1767
    %v2126 = vpop.permute.xlu0 %2125
    %2129 = vset.pattern.permute.xlu0 0
    %2130 = vperm.xlu0 %2129, %v1768
    %v2131 = vpop.permute.xlu0 %2130
    %2134 = vset.pattern.permute.xlu0 0
    %2135 = vperm.xlu0 %2134, %v1769
    %v2136 = vpop.permute.xlu0 %2135
    %v2142 = vunpack.c.l.b16 %v1750
    %v2143 = vunpack.c.l.b16 %v1751
    %v2144 = vunpack.c.l.b16 %v1752
    %v2145 = vunpack.c.l.b16 %v1753
    %v2146 = vpack.c.b16 %v2143, %v2142
    %v2147 = vpack.c.b16 %v2145, %v2144
    %v2149 = vsel %vm675, %v2146, 0
    %v2152 = vsel %vm675, %v2147, 0
    %2154 = vmatprep.subr.bf16.mxu0 %v2115
    %2155 = vmatpush1.bf16.msra.mxu0 %v2114
    %2156 = vmatprep.subr.bf16.mxu0 %v2117
    %2157 = vmatpush1.bf16.msra.mxu0 %v2116
    %2158 = vmatprep.subr.bf16.mxu0 0
    %2159 = vmatpush1.bf16.msra.mxu0 0
    %2160 = vmatprep.subr.bf16.mxu0 0
    %2161 = vmatpush1.bf16.msra.mxu0 0
    %2162 = vmatprep.subr.bf16.mxu0 0
    %2163 = vmatpush1.bf16.msra.mxu0 0
    %2164 = vmatprep.subr.bf16.mxu0 0
    %2165 = vmatpush1.bf16.msra.mxu0 0
    %2166 = vmatprep.subr.bf16.mxu0 0
    %2167 = vmatpush1.bf16.msra.mxu0 0
    %2168 = vmatprep.subr.bf16.mxu0 0
    %2169 = vmatpush1.bf16.msra.mxu0 0
    %2170 = vmatprep.subr.bf16.mxu0 0
    %2171 = vmatpush1.bf16.msra.mxu0 0
    %2172 = vmatprep.subr.bf16.mxu0 0
    %2173 = vmatpush1.bf16.msra.mxu0 0
    %2174 = vmatprep.subr.bf16.mxu0 0
    %2175 = vmatpush1.bf16.msra.mxu0 0
    %2176 = vmatprep.subr.bf16.mxu0 0
    %2177 = vmatpush1.bf16.msra.mxu0 0
    %2178 = vmatprep.subr.bf16.mxu0 0
    %2179 = vmatpush1.bf16.msra.mxu0 0
    %2180 = vmatprep.subr.bf16.mxu0 0
    %2181 = vmatpush1.bf16.msra.mxu0 0
    %2182 = vmatprep.subr.bf16.mxu0 0
    %2183 = vmatpush1.bf16.msra.mxu0 0
    %2184 = vmatprep.subr.bf16.mxu0 0
    %2185 = vmatpush1.bf16.msra.mxu0 0
    %2186 = vmatprep.mubr.bf16.mxu0 0
    %2187 = vmatmul.mubr.bf16.gmra.mrb[0].mxu0 %v2149
    %v2188 = vpop.f32.mrb[0].mxu0
    %v2189 = vadd.f32 %v2121, %v2188
    %v2190 = vpop.f32.mrb[0].mxu0
    %v2191 = vadd.f32 %v2121, %v2190
    %v2192 = vpop.f32.mrb[0].mxu0
    %v2193 = vadd.f32 %v2126, %v2192
    %v2194 = vpop.f32.mrb[0].mxu0
    %v2195 = vadd.f32 %v2126, %v2194
    %2196 = vmatprep.mubr.bf16.mxu0 0
    %2197 = vmatmul.mubr.bf16.gmra.mrb[0].mxu0 %v2152
    %v2198 = vpop.f32.mrb[0].mxu0
    %v2199 = vadd.f32 %v2131, %v2198
    %v2200 = vpop.f32.mrb[0].mxu0
    %v2201 = vadd.f32 %v2131, %v2200
    %v2202 = vpop.f32.mrb[0].mxu0
    %v2203 = vadd.f32 %v2136, %v2202
    %v2204 = vpop.f32.mrb[0].mxu0
    %v2205 = vadd.f32 %v2136, %v2204
    %2206 = vdwg.mxu0
    %v2207 = vadd.f32 %v1899, %v2189
    %v2208 = vadd.f32 %v1901, %v2191
    %v2209 = vadd.f32 %v1903, %v2193
    %v2210 = vadd.f32 %v1905, %v2195
    %v2211 = vadd.f32 %v1909, %v2199
    %v2212 = vadd.f32 %v1911, %v2201
    %v2213 = vadd.f32 %v1913, %v2203
    %v2214 = vadd.f32 %v1915, %v2205
    %2215 = vrot.lane.b32.xlu0 %v2207, 2
    %v2216 = vpop.permute.xlu0 %2215
    %2217 = vrot.lane.b32.xlu0 %v2209, 2
    %v2218 = vpop.permute.xlu0 %2217
    %2219 = vrot.lane.b32.xlu0 %v2211, 2
    %v2220 = vpop.permute.xlu0 %2219
    %2221 = vrot.lane.b32.xlu0 %v2213, 2
    %v2222 = vpop.permute.xlu0 %2221
    %2223 = vrot.lane.b32.xlu0 %v2208, 2
    %v2224 = vpop.permute.xlu0 %2223
    %2225 = vrot.lane.b32.xlu0 %v2210, 2
    %v2226 = vpop.permute.xlu0 %2225
    %2227 = vrot.lane.b32.xlu0 %v2212, 2
    %v2228 = vpop.permute.xlu0 %2227
    %2229 = vrot.lane.b32.xlu0 %v2214, 2
    %v2230 = vpop.permute.xlu0 %2229
    %v2231 = vsel %vm761, %v2216, %v2224
    %v2232 = vsel %vm761, %v2218, %v2226
    %v2233 = vsel %vm761, %v2220, %v2228
    %v2234 = vsel %vm761, %v2222, %v2230
    %v2235 = vsel %vm761, %v2224, %v2216
    %v2236 = vsel %vm761, %v2226, %v2218
    %v2237 = vsel %vm761, %v2228, %v2220
    %v2238 = vsel %vm761, %v2230, %v2222
    %v2239 = vsel %vm743, %v2235, 0.0
    %v2240 = vsel %vm744, %v2231, 0.0
    %v2241 = vsel %vm743, %v2236, 0.0
    %v2242 = vsel %vm744, %v2232, 0.0
    %v2243 = vsel %vm743, %v2237, 0.0
    %v2244 = vsel %vm744, %v2233, 0.0
    %v2245 = vsel %vm743, %v2238, 0.0
    %v2246 = vsel %vm744, %v2234, 0.0
    %2247 = vrot.lane.b32.xlu0 %v2207, 126
    %v2248 = vpop.permute.xlu0 %2247
    %2249 = vrot.lane.b32.xlu0 %v2209, 126
    %v2250 = vpop.permute.xlu0 %2249
    %2251 = vrot.lane.b32.xlu0 %v2211, 126
    %v2252 = vpop.permute.xlu0 %2251
    %2253 = vrot.lane.b32.xlu0 %v2213, 126
    %v2254 = vpop.permute.xlu0 %2253
    %2255 = vrot.lane.b32.xlu0 %v2208, 126
    %v2256 = vpop.permute.xlu0 %2255
    %2257 = vrot.lane.b32.xlu0 %v2210, 126
    %v2258 = vpop.permute.xlu0 %2257
    %2259 = vrot.lane.b32.xlu0 %v2212, 126
    %v2260 = vpop.permute.xlu0 %2259
    %2261 = vrot.lane.b32.xlu0 %v2214, 126
    %v2262 = vpop.permute.xlu0 %2261
    %v2263 = vsel %vm796, %v2248, %v2256
    %v2264 = vsel %vm796, %v2250, %v2258
    %v2265 = vsel %vm796, %v2252, %v2260
    %v2266 = vsel %vm796, %v2254, %v2262
    %v2267 = vsel %vm796, %v2256, %v2248
    %v2268 = vsel %vm796, %v2258, %v2250
    %v2269 = vsel %vm796, %v2260, %v2252
    %v2270 = vsel %vm796, %v2262, %v2254
    %v2271 = vsel %vm778, %v2263, 0.0
    %v2272 = vsel %vm779, %v2267, 0.0
    %v2273 = vsel %vm778, %v2264, 0.0
    %v2274 = vsel %vm779, %v2268, 0.0
    %v2275 = vsel %vm778, %v2265, 0.0
    %v2276 = vsel %vm779, %v2269, 0.0
    %v2277 = vsel %vm778, %v2266, 0.0
    %v2278 = vsel %vm779, %v2270, 0.0
    %v2279 = vpack.c.bf16 %v2241, %v2239
    %v2280 = vpack.c.bf16 %v2242, %v2240
    %v2281 = vpack.c.bf16 %v2245, %v2243
    %v2282 = vpack.c.bf16 %v2246, %v2244
    %2283 = vst [vmem:[#allocation2] sm:$0xff] %v2279
    %2284 = vst [vmem:[#allocation2 + $0x8] sm:$0xff] %v2280
    %2285 = vst [vmem:[#allocation2 + $0x10] sm:$0xff] %v2281
    %2286 = vst [vmem:[#allocation2 + $0x18] sm:$0xff] %v2282
    %v2287 = vpack.c.bf16 %v2209, %v2207
    %v2288 = vpack.c.bf16 %v2210, %v2208
    %v2289 = vpack.c.bf16 %v2213, %v2211
    %v2290 = vpack.c.bf16 %v2214, %v2212
    %2291 = vst [vmem:[#allocation2 + $0x20] sm:$0xff] %v2287
    %2292 = vst [vmem:[#allocation2 + $0x28] sm:$0xff] %v2288
    %2293 = vst [vmem:[#allocation2 + $0x30] sm:$0xff] %v2289
    %2294 = vst [vmem:[#allocation2 + $0x38] sm:$0xff] %v2290
    %v2295 = vpack.c.bf16 %v2273, %v2271
    %v2296 = vpack.c.bf16 %v2274, %v2272
    %v2297 = vpack.c.bf16 %v2277, %v2275
    %v2298 = vpack.c.bf16 %v2278, %v2276
    %2299 = vst [vmem:[#allocation2 + $0x40] sm:$0xff] %v2295
    %2300 = vst [vmem:[#allocation2 + $0x48] sm:$0xff] %v2296
    %2301 = vst [vmem:[#allocation2 + $0x50] sm:$0xff] %v2297
    %2302 = vst [vmem:[#allocation2 + $0x58] sm:$0xff] %v2298
    %v2303 = vld [vmem:[#allocation2] sm:$0xff]
    %v2304 = vld [vmem:[#allocation2 + $0x8] sm:$0xff]
    %v2305 = vld [vmem:[#allocation2 + $0x10] sm:$0xff]
    %v2306 = vld [vmem:[#allocation2 + $0x18] sm:$0xff]
    %v2307 = vld [vmem:[#allocation2 + $0x20] sm:$0xff]
    %v2308 = vld [vmem:[#allocation2 + $0x28] sm:$0xff]
    %v2309 = vld [vmem:[#allocation2 + $0x30] sm:$0xff]
    %v2310 = vld [vmem:[#allocation2 + $0x38] sm:$0xff]
    %v2311 = vld [vmem:[#allocation2 + $0x40] sm:$0xff]
    %v2312 = vld [vmem:[#allocation2 + $0x48] sm:$0xff]
    %v2313 = vld [vmem:[#allocation2 + $0x50] sm:$0xff]
    %v2314 = vld [vmem:[#allocation2 + $0x58] sm:$0xff]
    %2316 = vset.pattern.permute.xlu0 0
    %2317 = vperm.xlu0 %2316, %v1738
    %v2318 = vpop.permute.xlu0 %2317
    %2321 = vset.pattern.permute.xlu0 0
    %2322 = vperm.xlu0 %2321, %v1739
    %v2323 = vpop.permute.xlu0 %2322
    %2326 = vset.pattern.permute.xlu0 0
    %2327 = vperm.xlu0 %2326, %v1740
    %v2328 = vpop.permute.xlu0 %2327
    %2331 = vset.pattern.permute.xlu0 0
    %2332 = vperm.xlu0 %2331, %v1741
    %v2333 = vpop.permute.xlu0 %2332
    %v2339 = vunpack.c.l.b16 %v1722
    %v2340 = vunpack.c.l.b16 %v1723
    %v2341 = vunpack.c.l.b16 %v1724
    %v2342 = vunpack.c.l.b16 %v1725
    %v2343 = vpack.c.b16 %v2340, %v2339
    %v2344 = vpack.c.b16 %v2342, %v2341
    %v2346 = vsel %vm573, %v2343, 0
    %v2349 = vsel %vm573, %v2344, 0
    %2351 = vmatprep.subr.bf16.mxu0 %v2304
    %2352 = vmatpush1.bf16.msra.mxu0 %v2303
    %2353 = vmatprep.subr.bf16.mxu0 %v2306
    %2354 = vmatpush1.bf16.msra.mxu0 %v2305
    %2355 = vmatprep.subr.bf16.mxu0 %v2308
    %2356 = vmatpush1.bf16.msra.mxu0 %v2307
    %2357 = vmatprep.subr.bf16.mxu0 %v2310
    %2358 = vmatpush1.bf16.msra.mxu0 %v2309
    %2359 = vmatprep.subr.bf16.mxu0 %v2312
    %2360 = vmatpush1.bf16.msra.mxu0 %v2311
    %2361 = vmatprep.subr.bf16.mxu0 %v2314
    %2362 = vmatpush1.bf16.msra.mxu0 %v2313
    %2363 = vmatprep.subr.bf16.mxu0 0
    %2364 = vmatpush1.bf16.msra.mxu0 0
    %2365 = vmatprep.subr.bf16.mxu0 0
    %2366 = vmatpush1.bf16.msra.mxu0 0
    %2367 = vmatprep.subr.bf16.mxu0 0
    %2368 = vmatpush1.bf16.msra.mxu0 0
    %2369 = vmatprep.subr.bf16.mxu0 0
    %2370 = vmatpush1.bf16.msra.mxu0 0
    %2371 = vmatprep.subr.bf16.mxu0 0
    %2372 = vmatpush1.bf16.msra.mxu0 0
    %2373 = vmatprep.subr.bf16.mxu0 0
    %2374 = vmatpush1.bf16.msra.mxu0 0
    %2375 = vmatprep.subr.bf16.mxu0 0
    %2376 = vmatpush1.bf16.msra.mxu0 0
    %2377 = vmatprep.subr.bf16.mxu0 0
    %2378 = vmatpush1.bf16.msra.mxu0 0
    %2379 = vmatprep.subr.bf16.mxu0 0
    %2380 = vmatpush1.bf16.msra.mxu0 0
    %2381 = vmatprep.subr.bf16.mxu0 0
    %2382 = vmatpush1.bf16.msra.mxu0 0
    %2383 = vmatprep.mubr.bf16.mxu0 0
    %2384 = vmatmul.mubr.bf16.gmra.mrb[0].mxu0 %v2346
    %v2385 = vpop.f32.mrb[0].mxu0
    %v2386 = vadd.f32 %v2318, %v2385
    %v2387 = vpop.f32.mrb[0].mxu0
    %v2388 = vadd.f32 %v2318, %v2387
    %v2389 = vpop.f32.mrb[0].mxu0
    %v2390 = vadd.f32 %v2323, %v2389
    %v2391 = vpop.f32.mrb[0].mxu0
    %v2392 = vadd.f32 %v2323, %v2391
    %2393 = vmatprep.mubr.bf16.mxu0 0
    %2394 = vmatmul.mubr.bf16.gmra.mrb[0].mxu0 %v2349
    %v2395 = vpop.f32.mrb[0].mxu0
    %v2396 = vadd.f32 %v2328, %v2395
    %v2397 = vpop.f32.mrb[0].mxu0
    %v2398 = vadd.f32 %v2328, %v2397
    %v2399 = vpop.f32.mrb[0].mxu0
    %v2400 = vadd.f32 %v2333, %v2399
    %v2401 = vpop.f32.mrb[0].mxu0
    %v2402 = vadd.f32 %v2333, %v2401
    %2403 = vdwg.mxu0
    %v2404 = vmax.f32 %v2386, 0.0
    %v2405 = vmax.f32 %v2388, 0.0
    %v2406 = vmax.f32 %v2390, 0.0
    %v2407 = vmax.f32 %v2392, 0.0
    %v2408 = vmax.f32 %v2396, 0.0
    %v2409 = vmax.f32 %v2398, 0.0
    %v2410 = vmax.f32 %v2400, 0.0
    %v2411 = vmax.f32 %v2402, 0.0
    %v2412 = vpack.c.bf16 %v2406, %v2404
    %v2413 = vpack.c.bf16 %v2407, %v2405
    %v2414 = vpack.c.bf16 %v2410, %v2408
    %v2415 = vpack.c.bf16 %v2411, %v2409
    %2417 = vset.pattern.permute.xlu0 0
    %2418 = vperm.xlu0 %2417, %v1770
    %v2419 = vpop.permute.xlu0 %2418
    %2422 = vset.pattern.permute.xlu0 0
    %2423 = vperm.xlu0 %2422, %v1771
    %v2424 = vpop.permute.xlu0 %2423
    %2427 = vset.pattern.permute.xlu0 0
    %2428 = vperm.xlu0 %2427, %v1772
    %v2429 = vpop.permute.xlu0 %2428
    %2432 = vset.pattern.permute.xlu0 0
    %2433 = vperm.xlu0 %2432, %v1773
    %v2434 = vpop.permute.xlu0 %2433
    %v2440 = vunpack.c.l.b16 %v1754
    %v2441 = vunpack.c.l.b16 %v1755
    %v2442 = vunpack.c.l.b16 %v1756
    %v2443 = vunpack.c.l.b16 %v1757
    %v2444 = vpack.c.b16 %v2441, %v2440
    %v2445 = vpack.c.b16 %v2443, %v2442
    %v2447 = vsel %vm675, %v2444, 0
    %v2450 = vsel %vm675, %v2445, 0
    %2452 = vmatprep.subr.bf16.mxu0 %v2413
    %2453 = vmatpush1.bf16.msra.mxu0 %v2412
    %2454 = vmatprep.subr.bf16.mxu0 %v2415
    %2455 = vmatpush1.bf16.msra.mxu0 %v2414
    %2456 = vmatprep.subr.bf16.mxu0 0
    %2457 = vmatpush1.bf16.msra.mxu0 0
    %2458 = vmatprep.subr.bf16.mxu0 0
    %2459 = vmatpush1.bf16.msra.mxu0 0
    %2460 = vmatprep.subr.bf16.mxu0 0
    %2461 = vmatpush1.bf16.msra.mxu0 0
    %2462 = vmatprep.subr.bf16.mxu0 0
    %2463 = vmatpush1.bf16.msra.mxu0 0
    %2464 = vmatprep.subr.bf16.mxu0 0
    %2465 = vmatpush1.bf16.msra.mxu0 0
    %2466 = vmatprep.subr.bf16.mxu0 0
    %2467 = vmatpush1.bf16.msra.mxu0 0
    %2468 = vmatprep.subr.bf16.mxu0 0
    %2469 = vmatpush1.bf16.msra.mxu0 0
    %2470 = vmatprep.subr.bf16.mxu0 0
    %2471 = vmatpush1.bf16.msra.mxu0 0
    %2472 = vmatprep.subr.bf16.mxu0 0
    %2473 = vmatpush1.bf16.msra.mxu0 0
    %2474 = vmatprep.subr.bf16.mxu0 0
    %2475 = vmatpush1.bf16.msra.mxu0 0
    %2476 = vmatprep.subr.bf16.mxu0 0
    %2477 = vmatpush1.bf16.msra.mxu0 0
    %2478 = vmatprep.subr.bf16.mxu0 0
    %2479 = vmatpush1.bf16.msra.mxu0 0
    %2480 = vmatprep.subr.bf16.mxu0 0
    %2481 = vmatpush1.bf16.msra.mxu0 0
    %2482 = vmatprep.subr.bf16.mxu0 0
    %2483 = vmatpush1.bf16.msra.mxu0 0
    %2484 = vmatprep.mubr.bf16.mxu0 0
    %2485 = vmatmul.mubr.bf16.gmra.mrb[0].mxu0 %v2447
    %v2486 = vpop.f32.mrb[0].mxu0
    %v2487 = vadd.f32 %v2419, %v2486
    %v2488 = vpop.f32.mrb[0].mxu0
    %v2489 = vadd.f32 %v2419, %v2488
    %v2490 = vpop.f32.mrb[0].mxu0
    %v2491 = vadd.f32 %v2424, %v2490
    %v2492 = vpop.f32.mrb[0].mxu0
    %v2493 = vadd.f32 %v2424, %v2492
    %2494 = vmatprep.mubr.bf16.mxu0 0
    %2495 = vmatmul.mubr.bf16.gmra.mrb[0].mxu0 %v2450
    %v2496 = vpop.f32.mrb[0].mxu0
    %v2497 = vadd.f32 %v2429, %v2496
    %v2498 = vpop.f32.mrb[0].mxu0
    %v2499 = vadd.f32 %v2429, %v2498
    %v2500 = vpop.f32.mrb[0].mxu0
    %v2501 = vadd.f32 %v2434, %v2500
    %v2502 = vpop.f32.mrb[0].mxu0
    %v2503 = vadd.f32 %v2434, %v2502
    %2504 = vdwg.mxu0
    %v2505 = vadd.f32 %v2207, %v2487
    %v2506 = vadd.f32 %v2208, %v2489
    %v2507 = vadd.f32 %v2209, %v2491
    %v2508 = vadd.f32 %v2210, %v2493
    %v2509 = vadd.f32 %v2211, %v2497
    %v2510 = vadd.f32 %v2212, %v2499
    %v2511 = vadd.f32 %v2213, %v2501
    %v2512 = vadd.f32 %v2214, %v2503
    %2513 = vrot.lane.b32.xlu0 %v2505, 4
    %v2514 = vpop.permute.xlu0 %2513
    %2515 = vrot.lane.b32.xlu0 %v2507, 4
    %v2516 = vpop.permute.xlu0 %2515
    %2517 = vrot.lane.b32.xlu0 %v2509, 4
    %v2518 = vpop.permute.xlu0 %2517
    %2519 = vrot.lane.b32.xlu0 %v2511, 4
    %v2520 = vpop.permute.xlu0 %2519
    %2521 = vrot.lane.b32.xlu0 %v2506, 4
    %v2522 = vpop.permute.xlu0 %2521
    %2523 = vrot.lane.b32.xlu0 %v2508, 4
    %v2524 = vpop.permute.xlu0 %2523
    %2525 = vrot.lane.b32.xlu0 %v2510, 4
    %v2526 = vpop.permute.xlu0 %2525
    %2527 = vrot.lane.b32.xlu0 %v2512, 4
    %v2528 = vpop.permute.xlu0 %2527
    %v2529 = vsel %vm1065, %v2514, %v2522
    %v2530 = vsel %vm1065, %v2516, %v2524
    %v2531 = vsel %vm1065, %v2518, %v2526
    %v2532 = vsel %vm1065, %v2520, %v2528
    %v2533 = vsel %vm1065, %v2522, %v2514
    %v2534 = vsel %vm1065, %v2524, %v2516
    %v2535 = vsel %vm1065, %v2526, %v2518
    %v2536 = vsel %vm1065, %v2528, %v2520
    %v2537 = vsel %vm1047, %v2533, 0.0
    %v2538 = vsel %vm1048, %v2529, 0.0
    %v2539 = vsel %vm1047, %v2534, 0.0
    %v2540 = vsel %vm1048, %v2530, 0.0
    %v2541 = vsel %vm1047, %v2535, 0.0
    %v2542 = vsel %vm1048, %v2531, 0.0
    %v2543 = vsel %vm1047, %v2536, 0.0
    %v2544 = vsel %vm1048, %v2532, 0.0
    %2545 = vrot.lane.b32.xlu0 %v2505, 124
    %v2546 = vpop.permute.xlu0 %2545
    %2547 = vrot.lane.b32.xlu0 %v2507, 124
    %v2548 = vpop.permute.xlu0 %2547
    %2549 = vrot.lane.b32.xlu0 %v2509, 124
    %v2550 = vpop.permute.xlu0 %2549
    %2551 = vrot.lane.b32.xlu0 %v2511, 124
    %v2552 = vpop.permute.xlu0 %2551
    %2553 = vrot.lane.b32.xlu0 %v2506, 124
    %v2554 = vpop.permute.xlu0 %2553
    %2555 = vrot.lane.b32.xlu0 %v2508, 124
    %v2556 = vpop.permute.xlu0 %2555
    %2557 = vrot.lane.b32.xlu0 %v2510, 124
    %v2558 = vpop.permute.xlu0 %2557
    %2559 = vrot.lane.b32.xlu0 %v2512, 124
    %v2560 = vpop.permute.xlu0 %2559
    %v2561 = vsel %vm1100, %v2546, %v2554
    %v2562 = vsel %vm1100, %v2548, %v2556
    %v2563 = vsel %vm1100, %v2550, %v2558
    %v2564 = vsel %vm1100, %v2552, %v2560
    %v2565 = vsel %vm1100, %v2554, %v2546
    %v2566 = vsel %vm1100, %v2556, %v2548
    %v2567 = vsel %vm1100, %v2558, %v2550
    %v2568 = vsel %vm1100, %v2560, %v2552
    %v2569 = vsel %vm1082, %v2561, 0.0
    %v2570 = vsel %vm1083, %v2565, 0.0
    %v2571 = vsel %vm1082, %v2562, 0.0
    %v2572 = vsel %vm1083, %v2566, 0.0
    %v2573 = vsel %vm1082, %v2563, 0.0
    %v2574 = vsel %vm1083, %v2567, 0.0
    %v2575 = vsel %vm1082, %v2564, 0.0
    %v2576 = vsel %vm1083, %v2568, 0.0
    %v2577 = vpack.c.bf16 %v2539, %v2537
    %v2578 = vpack.c.bf16 %v2540, %v2538
    %v2579 = vpack.c.bf16 %v2543, %v2541
    %v2580 = vpack.c.bf16 %v2544, %v2542
    %2581 = vst [vmem:[#allocation2] sm:$0xff] %v2577
    %2582 = vst [vmem:[#allocation2 + $0x8] sm:$0xff] %v2578
    %2583 = vst [vmem:[#allocation2 + $0x10] sm:$0xff] %v2579
    %2584 = vst [vmem:[#allocation2 + $0x18] sm:$0xff] %v2580
    %v2585 = vpack.c.bf16 %v2507, %v2505
    %v2586 = vpack.c.bf16 %v2508, %v2506
    %v2587 = vpack.c.bf16 %v2511, %v2509
    %v2588 = vpack.c.bf16 %v2512, %v2510
    %2589 = vst [vmem:[#allocation2 + $0x20] sm:$0xff] %v2585
    %2590 = vst [vmem:[#allocation2 + $0x28] sm:$0xff] %v2586
    %2591 = vst [vmem:[#allocation2 + $0x30] sm:$0xff] %v2587
    %2592 = vst [vmem:[#allocation2 + $0x38] sm:$0xff] %v2588
    %v2593 = vpack.c.bf16 %v2571, %v2569
    %v2594 = vpack.c.bf16 %v2572, %v2570
    %v2595 = vpack.c.bf16 %v2575, %v2573
    %v2596 = vpack.c.bf16 %v2576, %v2574
    %2597 = vst [vmem:[#allocation2 + $0x40] sm:$0xff] %v2593
    %2598 = vst [vmem:[#allocation2 + $0x48] sm:$0xff] %v2594
    %2599 = vst [vmem:[#allocation2 + $0x50] sm:$0xff] %v2595
    %2600 = vst [vmem:[#allocation2 + $0x58] sm:$0xff] %v2596
    %v2601 = vld [vmem:[#allocation2] sm:$0xff]
    %v2602 = vld [vmem:[#allocation2 + $0x8] sm:$0xff]
    %v2603 = vld [vmem:[#allocation2 + $0x10] sm:$0xff]
    %v2604 = vld [vmem:[#allocation2 + $0x18] sm:$0xff]
    %v2605 = vld [vmem:[#allocation2 + $0x20] sm:$0xff]
    %v2606 = vld [vmem:[#allocation2 + $0x28] sm:$0xff]
    %v2607 = vld [vmem:[#allocation2 + $0x30] sm:$0xff]
    %v2608 = vld [vmem:[#allocation2 + $0x38] sm:$0xff]
    %v2609 = vld [vmem:[#allocation2 + $0x40] sm:$0xff]
    %v2610 = vld [vmem:[#allocation2 + $0x48] sm:$0xff]
    %v2611 = vld [vmem:[#allocation2 + $0x50] sm:$0xff]
    %v2612 = vld [vmem:[#allocation2 + $0x58] sm:$0xff]
    %2614 = vset.pattern.permute.xlu0 0
    %2615 = vperm.xlu0 %2614, %v1742
    %v2616 = vpop.permute.xlu0 %2615
    %2619 = vset.pattern.permute.xlu0 0
    %2620 = vperm.xlu0 %2619, %v1743
    %v2621 = vpop.permute.xlu0 %2620
    %2624 = vset.pattern.permute.xlu0 0
    %2625 = vperm.xlu0 %2624, %v1744
    %v2626 = vpop.permute.xlu0 %2625
    %2629 = vset.pattern.permute.xlu0 0
    %2630 = vperm.xlu0 %2629, %v1745
    %v2631 = vpop.permute.xlu0 %2630
    %v2637 = vunpack.c.l.b16 %v1726
    %v2638 = vunpack.c.l.b16 %v1727
    %v2639 = vunpack.c.l.b16 %v1728
    %v2640 = vunpack.c.l.b16 %v1729
    %v2641 = vpack.c.b16 %v2638, %v2637
    %v2642 = vpack.c.b16 %v2640, %v2639
    %v2644 = vsel %vm573, %v2641, 0
    %v2647 = vsel %vm573, %v2642, 0
    %2649 = vmatprep.subr.bf16.mxu0 %v2602
    %2650 = vmatpush1.bf16.msra.mxu0 %v2601
    %2651 = vmatprep.subr.bf16.mxu0 %v2604
    %2652 = vmatpush1.bf16.msra.mxu0 %v2603
    %2653 = vmatprep.subr.bf16.mxu0 %v2606
    %2654 = vmatpush1.bf16.msra.mxu0 %v2605
    %2655 = vmatprep.subr.bf16.mxu0 %v2608
    %2656 = vmatpush1.bf16.msra.mxu0 %v2607
    %2657 = vmatprep.subr.bf16.mxu0 %v2610
    %2658 = vmatpush1.bf16.msra.mxu0 %v2609
    %2659 = vmatprep.subr.bf16.mxu0 %v2612
    %2660 = vmatpush1.bf16.msra.mxu0 %v2611
    %2661 = vmatprep.subr.bf16.mxu0 0
    %2662 = vmatpush1.bf16.msra.mxu0 0
    %2663 = vmatprep.subr.bf16.mxu0 0
    %2664 = vmatpush1.bf16.msra.mxu0 0
    %2665 = vmatprep.subr.bf16.mxu0 0
    %2666 = vmatpush1.bf16.msra.mxu0 0
    %2667 = vmatprep.subr.bf16.mxu0 0
    %2668 = vmatpush1.bf16.msra.mxu0 0
    %2669 = vmatprep.subr.bf16.mxu0 0
    %2670 = vmatpush1.bf16.msra.mxu0 0
    %2671 = vmatprep.subr.bf16.mxu0 0
    %2672 = vmatpush1.bf16.msra.mxu0 0
    %2673 = vmatprep.subr.bf16.mxu0 0
    %2674 = vmatpush1.bf16.msra.mxu0 0
    %2675 = vmatprep.subr.bf16.mxu0 0
    %2676 = vmatpush1.bf16.msra.mxu0 0
    %2677 = vmatprep.subr.bf16.mxu0 0
    %2678 = vmatpush1.bf16.msra.mxu0 0
    %2679 = vmatprep.subr.bf16.mxu0 0
    %2680 = vmatpush1.bf16.msra.mxu0 0
    %2681 = vmatprep.mubr.bf16.mxu0 0
    %2682 = vmatmul.mubr.bf16.gmra.mrb[0].mxu0 %v2644
    %v2683 = vpop.f32.mrb[0].mxu0
    %v2684 = vadd.f32 %v2616, %v2683
    %v2685 = vpop.f32.mrb[0].mxu0
    %v2686 = vadd.f32 %v2616, %v2685
    %v2687 = vpop.f32.mrb[0].mxu0
    %v2688 = vadd.f32 %v2621, %v2687
    %v2689 = vpop.f32.mrb[0].mxu0
    %v2690 = vadd.f32 %v2621, %v2689
    %2691 = vmatprep.mubr.bf16.mxu0 0
    %2692 = vmatmul.mubr.bf16.gmra.mrb[0].mxu0 %v2647
    %v2693 = vpop.f32.mrb[0].mxu0
    %v2694 = vadd.f32 %v2626, %v2693
    %v2695 = vpop.f32.mrb[0].mxu0
    %v2696 = vadd.f32 %v2626, %v2695
    %v2697 = vpop.f32.mrb[0].mxu0
    %v2698 = vadd.f32 %v2631, %v2697
    %v2699 = vpop.f32.mrb[0].mxu0
    %v2700 = vadd.f32 %v2631, %v2699
    %2701 = vdwg.mxu0
    %v2702 = vmax.f32 %v2684, 0.0
    %v2703 = vmax.f32 %v2686, 0.0
    %v2704 = vmax.f32 %v2688, 0.0
    %v2705 = vmax.f32 %v2690, 0.0
    %v2706 = vmax.f32 %v2694, 0.0
    %v2707 = vmax.f32 %v2696, 0.0
    %v2708 = vmax.f32 %v2698, 0.0
    %v2709 = vmax.f32 %v2700, 0.0
    %v2710 = vpack.c.bf16 %v2704, %v2702
    %v2711 = vpack.c.bf16 %v2705, %v2703
    %v2712 = vpack.c.bf16 %v2708, %v2706
    %v2713 = vpack.c.bf16 %v2709, %v2707
    %2715 = vset.pattern.permute.xlu0 0
    %2716 = vperm.xlu0 %2715, %v1774
    %v2717 = vpop.permute.xlu0 %2716
    %2720 = vset.pattern.permute.xlu0 0
    %2721 = vperm.xlu0 %2720, %v1775
    %v2722 = vpop.permute.xlu0 %2721
    %2725 = vset.pattern.permute.xlu0 0
    %2726 = vperm.xlu0 %2725, %v1776
    %v2727 = vpop.permute.xlu0 %2726
    %2730 = vset.pattern.permute.xlu0 0
    %2731 = vperm.xlu0 %2730, %v1777
    %v2732 = vpop.permute.xlu0 %2731
    %v2738 = vunpack.c.l.b16 %v1758
    %v2739 = vunpack.c.l.b16 %v1759
    %v2740 = vunpack.c.l.b16 %v1760
    %v2741 = vunpack.c.l.b16 %v1761
    %v2742 = vpack.c.b16 %v2739, %v2738
    %v2743 = vpack.c.b16 %v2741, %v2740
    %v2745 = vsel %vm675, %v2742, 0
    %v2748 = vsel %vm675, %v2743, 0
    %2750 = vmatprep.subr.bf16.mxu0 %v2711
    %2751 = vmatpush1.bf16.msra.mxu0 %v2710
    %2752 = vmatprep.subr.bf16.mxu0 %v2713
    %2753 = vmatpush1.bf16.msra.mxu0 %v2712
    %2754 = vmatprep.subr.bf16.mxu0 0
    %2755 = vmatpush1.bf16.msra.mxu0 0
    %2756 = vmatprep.subr.bf16.mxu0 0
    %2757 = vmatpush1.bf16.msra.mxu0 0
    %2758 = vmatprep.subr.bf16.mxu0 0
    %2759 = vmatpush1.bf16.msra.mxu0 0
    %2760 = vmatprep.subr.bf16.mxu0 0
    %2761 = vmatpush1.bf16.msra.mxu0 0
    %2762 = vmatprep.subr.bf16.mxu0 0
    %2763 = vmatpush1.bf16.msra.mxu0 0
    %2764 = vmatprep.subr.bf16.mxu0 0
    %2765 = vmatpush1.bf16.msra.mxu0 0
    %2766 = vmatprep.subr.bf16.mxu0 0
    %2767 = vmatpush1.bf16.msra.mxu0 0
    %2768 = vmatprep.subr.bf16.mxu0 0
    %2769 = vmatpush1.bf16.msra.mxu0 0
    %2770 = vmatprep.subr.bf16.mxu0 0
    %2771 = vmatpush1.bf16.msra.mxu0 0
    %2772 = vmatprep.subr.bf16.mxu0 0
    %2773 = vmatpush1.bf16.msra.mxu0 0
    %2774 = vmatprep.subr.bf16.mxu0 0
    %2775 = vmatpush1.bf16.msra.mxu0 0
    %2776 = vmatprep.subr.bf16.mxu0 0
    %2777 = vmatpush1.bf16.msra.mxu0 0
    %2778 = vmatprep.subr.bf16.mxu0 0
    %2779 = vmatpush1.bf16.msra.mxu0 0
    %2780 = vmatprep.subr.bf16.mxu0 0
    %2781 = vmatpush1.bf16.msra.mxu0 0
    %2782 = vmatprep.mubr.bf16.mxu0 0
    %2783 = vmatmul.mubr.bf16.gmra.mrb[0].mxu0 %v2745
    %v2784 = vpop.f32.mrb[0].mxu0
    %v2785 = vadd.f32 %v2717, %v2784
    %v2786 = vpop.f32.mrb[0].mxu0
    %v2787 = vadd.f32 %v2717, %v2786
    %v2788 = vpop.f32.mrb[0].mxu0
    %v2789 = vadd.f32 %v2722, %v2788
    %v2790 = vpop.f32.mrb[0].mxu0
    %v2791 = vadd.f32 %v2722, %v2790
    %2792 = vmatprep.mubr.bf16.mxu0 0
    %2793 = vmatmul.mubr.bf16.gmra.mrb[0].mxu0 %v2748
    %v2794 = vpop.f32.mrb[0].mxu0
    %v2795 = vadd.f32 %v2727, %v2794
    %v2796 = vpop.f32.mrb[0].mxu0
    %v2797 = vadd.f32 %v2727, %v2796
    %v2798 = vpop.f32.mrb[0].mxu0
    %v2799 = vadd.f32 %v2732, %v2798
    %v2800 = vpop.f32.mrb[0].mxu0
    %v2801 = vadd.f32 %v2732, %v2800
    %2802 = vdwg.mxu0
    %v2803 = vadd.f32 %v2505, %v2785
    %v2804 = vadd.f32 %v2506, %v2787
    %v2805 = vadd.f32 %v2507, %v2789
    %v2806 = vadd.f32 %v2508, %v2791
    %v2807 = vadd.f32 %v2509, %v2795
    %v2808 = vadd.f32 %v2510, %v2797
    %v2809 = vadd.f32 %v2511, %v2799
    %v2810 = vadd.f32 %v2512, %v2801
    %2811 = vrot.lane.b32.xlu0 %v2803, 8
    %v2812 = vpop.permute.xlu0 %2811
    %2813 = vrot.lane.b32.xlu0 %v2805, 8
    %v2814 = vpop.permute.xlu0 %2813
    %2815 = vrot.lane.b32.xlu0 %v2807, 8
    %v2816 = vpop.permute.xlu0 %2815
    %2817 = vrot.lane.b32.xlu0 %v2809, 8
    %v2818 = vpop.permute.xlu0 %2817
    %2819 = vrot.lane.b32.xlu0 %v2804, 8
    %v2820 = vpop.permute.xlu0 %2819
    %2821 = vrot.lane.b32.xlu0 %v2806, 8
    %v2822 = vpop.permute.xlu0 %2821
    %2823 = vrot.lane.b32.xlu0 %v2808, 8
    %v2824 = vpop.permute.xlu0 %2823
    %2825 = vrot.lane.b32.xlu0 %v2810, 8
    %v2826 = vpop.permute.xlu0 %2825
    %v2827 = vsel %vm1369, %v2812, %v2820
    %v2828 = vsel %vm1369, %v2814, %v2822
    %v2829 = vsel %vm1369, %v2816, %v2824
    %v2830 = vsel %vm1369, %v2818, %v2826
    %v2831 = vsel %vm1369, %v2820, %v2812
    %v2832 = vsel %vm1369, %v2822, %v2814
    %v2833 = vsel %vm1369, %v2824, %v2816
    %v2834 = vsel %vm1369, %v2826, %v2818
    %v2835 = vsel %vm1351, %v2831, 0.0
    %v2836 = vsel %vm1352, %v2827, 0.0
    %v2837 = vsel %vm1351, %v2832, 0.0
    %v2838 = vsel %vm1352, %v2828, 0.0
    %v2839 = vsel %vm1351, %v2833, 0.0
    %v2840 = vsel %vm1352, %v2829, 0.0
    %v2841 = vsel %vm1351, %v2834, 0.0
    %v2842 = vsel %vm1352, %v2830, 0.0
    %2843 = vrot.lane.b32.xlu0 %v2803, 120
    %v2844 = vpop.permute.xlu0 %2843
    %2845 = vrot.lane.b32.xlu0 %v2805, 120
    %v2846 = vpop.permute.xlu0 %2845
    %2847 = vrot.lane.b32.xlu0 %v2807, 120
    %v2848 = vpop.permute.xlu0 %2847
    %2849 = vrot.lane.b32.xlu0 %v2809, 120
    %v2850 = vpop.permute.xlu0 %2849
    %2851 = vrot.lane.b32.xlu0 %v2804, 120
    %v2852 = vpop.permute.xlu0 %2851
    %2853 = vrot.lane.b32.xlu0 %v2806, 120
    %v2854 = vpop.permute.xlu0 %2853
    %2855 = vrot.lane.b32.xlu0 %v2808, 120
    %v2856 = vpop.permute.xlu0 %2855
    %2857 = vrot.lane.b32.xlu0 %v2810, 120
    %v2858 = vpop.permute.xlu0 %2857
    %v2859 = vsel %vm1404, %v2844, %v2852
    %v2860 = vsel %vm1404, %v2846, %v2854
    %v2861 = vsel %vm1404, %v2848, %v2856
    %v2862 = vsel %vm1404, %v2850, %v2858
    %v2863 = vsel %vm1404, %v2852, %v2844
    %v2864 = vsel %vm1404, %v2854, %v2846
    %v2865 = vsel %vm1404, %v2856, %v2848
    %v2866 = vsel %vm1404, %v2858, %v2850
    %v2867 = vsel %vm1386, %v2859, 0.0
    %v2868 = vsel %vm1387, %v2863, 0.0
    %v2869 = vsel %vm1386, %v2860, 0.0
    %v2870 = vsel %vm1387, %v2864, 0.0
    %v2871 = vsel %vm1386, %v2861, 0.0
    %v2872 = vsel %vm1387, %v2865, 0.0
    %v2873 = vsel %vm1386, %v2862, 0.0
    %v2874 = vsel %vm1387, %v2866, 0.0
    %v2875 = vpack.c.bf16 %v2837, %v2835
    %v2876 = vpack.c.bf16 %v2838, %v2836
    %v2877 = vpack.c.bf16 %v2841, %v2839
    %v2878 = vpack.c.bf16 %v2842, %v2840
    %2879 = vst [vmem:[#allocation2] sm:$0xff] %v2875
    %2880 = vst [vmem:[#allocation2 + $0x8] sm:$0xff] %v2876
    %2881 = vst [vmem:[#allocation2 + $0x10] sm:$0xff] %v2877
    %2882 = vst [vmem:[#allocation2 + $0x18] sm:$0xff] %v2878
    %v2883 = vpack.c.bf16 %v2805, %v2803
    %v2884 = vpack.c.bf16 %v2806, %v2804
    %v2885 = vpack.c.bf16 %v2809, %v2807
    %v2886 = vpack.c.bf16 %v2810, %v2808
    %2887 = vst [vmem:[#allocation2 + $0x20] sm:$0xff] %v2883
    %2888 = vst [vmem:[#allocation2 + $0x28] sm:$0xff] %v2884
    %2889 = vst [vmem:[#allocation2 + $0x30] sm:$0xff] %v2885
    %2890 = vst [vmem:[#allocation2 + $0x38] sm:$0xff] %v2886
    %v2891 = vpack.c.bf16 %v2869, %v2867
    %v2892 = vpack.c.bf16 %v2870, %v2868
    %v2893 = vpack.c.bf16 %v2873, %v2871
    %v2894 = vpack.c.bf16 %v2874, %v2872
    %2895 = vst [vmem:[#allocation2 + $0x40] sm:$0xff] %v2891
    %2896 = vst [vmem:[#allocation2 + $0x48] sm:$0xff] %v2892
    %2897 = vst [vmem:[#allocation2 + $0x50] sm:$0xff] %v2893
    %2898 = vst [vmem:[#allocation2 + $0x58] sm:$0xff] %v2894
    %v2899 = vld [vmem:[#allocation2] sm:$0xff]
    %v2900 = vld [vmem:[#allocation2 + $0x8] sm:$0xff]
    %v2901 = vld [vmem:[#allocation2 + $0x10] sm:$0xff]
    %v2902 = vld [vmem:[#allocation2 + $0x18] sm:$0xff]
    %v2903 = vld [vmem:[#allocation2 + $0x20] sm:$0xff]
    %v2904 = vld [vmem:[#allocation2 + $0x28] sm:$0xff]
    %v2905 = vld [vmem:[#allocation2 + $0x30] sm:$0xff]
    %v2906 = vld [vmem:[#allocation2 + $0x38] sm:$0xff]
    %v2907 = vld [vmem:[#allocation2 + $0x40] sm:$0xff]
    %v2908 = vld [vmem:[#allocation2 + $0x48] sm:$0xff]
    %v2909 = vld [vmem:[#allocation2 + $0x50] sm:$0xff]
    %v2910 = vld [vmem:[#allocation2 + $0x58] sm:$0xff]
    %2912 = vset.pattern.permute.xlu0 0
    %2913 = vperm.xlu0 %2912, %v1746
    %v2914 = vpop.permute.xlu0 %2913
    %2917 = vset.pattern.permute.xlu0 0
    %2918 = vperm.xlu0 %2917, %v1747
    %v2919 = vpop.permute.xlu0 %2918
    %2922 = vset.pattern.permute.xlu0 0
    %2923 = vperm.xlu0 %2922, %v1748
    %v2924 = vpop.permute.xlu0 %2923
    %2927 = vset.pattern.permute.xlu0 0
    %2928 = vperm.xlu0 %2927, %v1749
    %v2929 = vpop.permute.xlu0 %2928
    %v2935 = vunpack.c.l.b16 %v1730
    %v2936 = vunpack.c.l.b16 %v1731
    %v2937 = vunpack.c.l.b16 %v1732
    %v2938 = vunpack.c.l.b16 %v1733
    %v2939 = vpack.c.b16 %v2936, %v2935
    %v2940 = vpack.c.b16 %v2938, %v2937
    %v2942 = vsel %vm573, %v2939, 0
    %v2945 = vsel %vm573, %v2940, 0
    %2947 = vmatprep.subr.bf16.mxu0 %v2900
    %2948 = vmatpush1.bf16.msra.mxu0 %v2899
    %2949 = vmatprep.subr.bf16.mxu0 %v2902
    %2950 = vmatpush1.bf16.msra.mxu0 %v2901
    %2951 = vmatprep.subr.bf16.mxu0 %v2904
    %2952 = vmatpush1.bf16.msra.mxu0 %v2903
    %2953 = vmatprep.subr.bf16.mxu0 %v2906
    %2954 = vmatpush1.bf16.msra.mxu0 %v2905
    %2955 = vmatprep.subr.bf16.mxu0 %v2908
    %2956 = vmatpush1.bf16.msra.mxu0 %v2907
    %2957 = vmatprep.subr.bf16.mxu0 %v2910
    %2958 = vmatpush1.bf16.msra.mxu0 %v2909
    %2959 = vmatprep.subr.bf16.mxu0 0
    %2960 = vmatpush1.bf16.msra.mxu0 0
    %2961 = vmatprep.subr.bf16.mxu0 0
    %2962 = vmatpush1.bf16.msra.mxu0 0
    %2963 = vmatprep.subr.bf16.mxu0 0
    %2964 = vmatpush1.bf16.msra.mxu0 0
    %2965 = vmatprep.subr.bf16.mxu0 0
    %2966 = vmatpush1.bf16.msra.mxu0 0
    %2967 = vmatprep.subr.bf16.mxu0 0
    %2968 = vmatpush1.bf16.msra.mxu0 0
    %2969 = vmatprep.subr.bf16.mxu0 0
    %2970 = vmatpush1.bf16.msra.mxu0 0
    %2971 = vmatprep.subr.bf16.mxu0 0
    %2972 = vmatpush1.bf16.msra.mxu0 0
    %2973 = vmatprep.subr.bf16.mxu0 0
    %2974 = vmatpush1.bf16.msra.mxu0 0
    %2975 = vmatprep.subr.bf16.mxu0 0
    %2976 = vmatpush1.bf16.msra.mxu0 0
    %2977 = vmatprep.subr.bf16.mxu0 0
    %2978 = vmatpush1.bf16.msra.mxu0 0
    %2979 = vmatprep.mubr.bf16.mxu0 0
    %2980 = vmatmul.mubr.bf16.gmra.mrb[0].mxu0 %v2942
    %v2981 = vpop.f32.mrb[0].mxu0
    %v2982 = vadd.f32 %v2914, %v2981
    %v2983 = vpop.f32.mrb[0].mxu0
    %v2984 = vadd.f32 %v2914, %v2983
    %v2985 = vpop.f32.mrb[0].mxu0
    %v2986 = vadd.f32 %v2919, %v2985
    %v2987 = vpop.f32.mrb[0].mxu0
    %v2988 = vadd.f32 %v2919, %v2987
    %2989 = vmatprep.mubr.bf16.mxu0 0
    %2990 = vmatmul.mubr.bf16.gmra.mrb[0].mxu0 %v2945
    %v2991 = vpop.f32.mrb[0].mxu0
    %v2992 = vadd.f32 %v2924, %v2991
    %v2993 = vpop.f32.mrb[0].mxu0
    %v2994 = vadd.f32 %v2924, %v2993
    %v2995 = vpop.f32.mrb[0].mxu0
    %v2996 = vadd.f32 %v2929, %v2995
    %v2997 = vpop.f32.mrb[0].mxu0
    %v2998 = vadd.f32 %v2929, %v2997
    %2999 = vdwg.mxu0
    %v3000 = vmax.f32 %v2982, 0.0
    %v3001 = vmax.f32 %v2984, 0.0
    %v3002 = vmax.f32 %v2986, 0.0
    %v3003 = vmax.f32 %v2988, 0.0
    %v3004 = vmax.f32 %v2992, 0.0
    %v3005 = vmax.f32 %v2994, 0.0
    %v3006 = vmax.f32 %v2996, 0.0
    %v3007 = vmax.f32 %v2998, 0.0
    %v3008 = vpack.c.bf16 %v3002, %v3000
    %v3009 = vpack.c.bf16 %v3003, %v3001
    %v3010 = vpack.c.bf16 %v3006, %v3004
    %v3011 = vpack.c.bf16 %v3007, %v3005
    %3013 = vset.pattern.permute.xlu0 0
    %3014 = vperm.xlu0 %3013, %v1778
    %v3015 = vpop.permute.xlu0 %3014
    %3018 = vset.pattern.permute.xlu0 0
    %3019 = vperm.xlu0 %3018, %v1779
    %v3020 = vpop.permute.xlu0 %3019
    %3023 = vset.pattern.permute.xlu0 0
    %3024 = vperm.xlu0 %3023, %v1780
    %v3025 = vpop.permute.xlu0 %3024
    %3028 = vset.pattern.permute.xlu0 0
    %3029 = vperm.xlu0 %3028, %v1781
    %v3030 = vpop.permute.xlu0 %3029
    %v3036 = vunpack.c.l.b16 %v1762
    %v3037 = vunpack.c.l.b16 %v1763
    %v3038 = vunpack.c.l.b16 %v1764
    %v3039 = vunpack.c.l.b16 %v1765
    %v3040 = vpack.c.b16 %v3037, %v3036
    %v3041 = vpack.c.b16 %v3039, %v3038
    %v3043 = vsel %vm675, %v3040, 0
    %v3046 = vsel %vm675, %v3041, 0
    %3048 = vmatprep.subr.bf16.mxu0 %v3009
    %3049 = vmatpush1.bf16.msra.mxu0 %v3008
    %3050 = vmatprep.subr.bf16.mxu0 %v3011
    %3051 = vmatpush1.bf16.msra.mxu0 %v3010
    %3052 = vmatprep.subr.bf16.mxu0 0
    %3053 = vmatpush1.bf16.msra.mxu0 0
    %3054 = vmatprep.subr.bf16.mxu0 0
    %3055 = vmatpush1.bf16.msra.mxu0 0
    %3056 = vmatprep.subr.bf16.mxu0 0
    %3057 = vmatpush1.bf16.msra.mxu0 0
    %3058 = vmatprep.subr.bf16.mxu0 0
    %3059 = vmatpush1.bf16.msra.mxu0 0
    %3060 = vmatprep.subr.bf16.mxu0 0
    %3061 = vmatpush1.bf16.msra.mxu0 0
    %3062 = vmatprep.subr.bf16.mxu0 0
    %3063 = vmatpush1.bf16.msra.mxu0 0
    %3064 = vmatprep.subr.bf16.mxu0 0
    %3065 = vmatpush1.bf16.msra.mxu0 0
    %3066 = vmatprep.subr.bf16.mxu0 0
    %3067 = vmatpush1.bf16.msra.mxu0 0
    %3068 = vmatprep.subr.bf16.mxu0 0
    %3069 = vmatpush1.bf16.msra.mxu0 0
    %3070 = vmatprep.subr.bf16.mxu0 0
    %3071 = vmatpush1.bf16.msra.mxu0 0
    %3072 = vmatprep.subr.bf16.mxu0 0
    %3073 = vmatpush1.bf16.msra.mxu0 0
    %3074 = vmatprep.subr.bf16.mxu0 0
    %3075 = vmatpush1.bf16.msra.mxu0 0
    %3076 = vmatprep.subr.bf16.mxu0 0
    %3077 = vmatpush1.bf16.msra.mxu0 0
    %3078 = vmatprep.subr.bf16.mxu0 0
    %3079 = vmatpush1.bf16.msra.mxu0 0
    %3080 = vmatprep.mubr.bf16.mxu0 0
    %3081 = vmatmul.mubr.bf16.gmra.mrb[0].mxu0 %v3043
    %v3082 = vpop.f32.mrb[0].mxu0
    %v3083 = vadd.f32 %v3015, %v3082
    %v3084 = vpop.f32.mrb[0].mxu0
    %v3085 = vadd.f32 %v3015, %v3084
    %v3086 = vpop.f32.mrb[0].mxu0
    %v3087 = vadd.f32 %v3020, %v3086
    %v3088 = vpop.f32.mrb[0].mxu0
    %v3089 = vadd.f32 %v3020, %v3088
    %3090 = vmatprep.mubr.bf16.mxu0 0
    %3091 = vmatmul.mubr.bf16.gmra.mrb[0].mxu0 %v3046
    %v3092 = vpop.f32.mrb[0].mxu0
    %v3093 = vadd.f32 %v3025, %v3092
    %v3094 = vpop.f32.mrb[0].mxu0
    %v3095 = vadd.f32 %v3025, %v3094
    %v3096 = vpop.f32.mrb[0].mxu0
    %v3097 = vadd.f32 %v3030, %v3096
    %v3098 = vpop.f32.mrb[0].mxu0
    %v3099 = vadd.f32 %v3030, %v3098
    %3100 = vdwg.mxu0
    %v3101 = vadd.f32 %v2803, %v3083
    %v3102 = vadd.f32 %v2804, %v3085
    %v3103 = vadd.f32 %v2805, %v3087
    %v3104 = vadd.f32 %v2806, %v3089
    %v3105 = vadd.f32 %v2807, %v3093
    %v3106 = vadd.f32 %v2808, %v3095
    %v3107 = vadd.f32 %v2809, %v3097
    %v3108 = vadd.f32 %v2810, %v3099
    %v3109 = vpack.c.bf16 %v3103, %v3101
    %v3110 = vpack.c.bf16 %v3104, %v3102
    %v3111 = vpack.c.bf16 %v3107, %v3105
    %v3112 = vpack.c.bf16 %v3108, %v3106
    %3114 = vset.pattern.permute.xlu0 0
    %3115 = vperm.xlu0 %3114, %v1783
    %v3116 = vpop.permute.xlu0 %3115
    %v3119 = vsel %vm675, %v1782, 0
    %3121 = vmatprep.subr.bf16.mxu0 %v3110
    %3122 = vmatpush1.bf16.msra.mxu0 %v3109
    %3123 = vmatprep.subr.bf16.mxu0 %v3112
    %3124 = vmatpush1.bf16.msra.mxu0 %v3111
    %3125 = vmatprep.subr.bf16.mxu0 0
    %3126 = vmatpush1.bf16.msra.mxu0 0
    %3127 = vmatprep.subr.bf16.mxu0 0
    %3128 = vmatpush1.bf16.msra.mxu0 0
    %3129 = vmatprep.subr.bf16.mxu0 0
    %3130 = vmatpush1.bf16.msra.mxu0 0
    %3131 = vmatprep.subr.bf16.mxu0 0
    %3132 = vmatpush1.bf16.msra.mxu0 0
    %3133 = vmatprep.subr.bf16.mxu0 0
    %3134 = vmatpush1.bf16.msra.mxu0 0
    %3135 = vmatprep.subr.bf16.mxu0 0
    %3136 = vmatpush1.bf16.msra.mxu0 0
    %3137 = vmatprep.subr.bf16.mxu0 0
    %3138 = vmatpush1.bf16.msra.mxu0 0
    %3139 = vmatprep.subr.bf16.mxu0 0
    %3140 = vmatpush1.bf16.msra.mxu0 0
    %3141 = vmatprep.subr.bf16.mxu0 0
    %3142 = vmatpush1.bf16.msra.mxu0 0
    %3143 = vmatprep.subr.bf16.mxu0 0
    %3144 = vmatpush1.bf16.msra.mxu0 0
    %3145 = vmatprep.subr.bf16.mxu0 0
    %3146 = vmatpush1.bf16.msra.mxu0 0
    %3147 = vmatprep.subr.bf16.mxu0 0
    %3148 = vmatpush1.bf16.msra.mxu0 0
    %3149 = vmatprep.subr.bf16.mxu0 0
    %3150 = vmatpush1.bf16.msra.mxu0 0
    %3151 = vmatprep.subr.bf16.mxu0 0
    %3152 = vmatpush1.bf16.msra.mxu0 0
    %3153 = vmatprep.mubr.bf16.mxu0 0
    %3154 = vmatmul.mubr.bf16.gmra.mrb[0].mxu0 %v3119
    %v3155 = vpop.f32.mrb[0].mxu0
    %v3156 = vadd.f32 %v3116, %v3155
    %v3157 = vpop.f32.mrb[0].mxu0
    %v3158 = vadd.f32 %v3116, %v3157
    %v3159 = vpop.f32.mrb[0].mxu0
    %v3160 = vpop.f32.mrb[0].mxu0
    %3161 = vdwg.mxu0
    %s3162 = scalar_lea.vmem [#allocation26], 16
    %3163 = vst [vmem:[%s3162] sm:$0xff] %v3156
    %3164 = vst [vmem:[%s3162 + $0x8] sm:$0xff] %v3158
    // Predicated region
    $region126: #{_lambda_.1} parent=1 // pred_check
      _
    $region127: #{_lambda_.1} parent=1 // pred_check_branch
      %3166 = sbr.rel (0) target = $region129
    $region128: #{_lambda_.1} parent=1 // pred_region
      %s3168 = ssub.s32 512, 512
      %3169 = vsyncadd [#allocation5], %s3168
      %s3170 = sshll.u32 [#allocation26], 4
      %s3171 = int_to_ptr.vmem [resolvable:$true] %s3170
      %3176 = dma.vmem_to_hbm [thread:$0]  %s3171, 512, %s17, [#allocation5], 256, 256, 16
    $region129: #{_lambda_.1} parent=1 // pred_fallthru
      _
    // Predicated region
    $region130: #{_lambda_.1} parent=1 // pred_check
      _
    $region131: #{_lambda_.1} parent=1 // pred_check_branch
      %3178 = sbr.rel (0) target = $region133
    $region132: #{_lambda_.1} parent=1 // pred_region
      %3179 = dma.done [#allocation5], 512
    $region133: #{_lambda_.1} parent=1 // pred_fallthru
      _
    %3180 = vsyncpa [#allocation4], 1
    %3181 = vsyncpa [#allocation7], 1
    %3182 = vsyncpa [#allocation10], 1
    %3183 = vsyncpa [#allocation13], 1
    %3184 = vsyncpa [#allocation16], 1
    %3185 = vsyncpa [#allocation19], 1
    %3186 = vsyncpa [#allocation22], 1
    %3187 = vsyncpa [#allocation25], 1
    %3188 = vsyncpa [#allocation5], 1

</llo_original>
